<compile_context>
chip_gen: v6e
topology: v6e:2x2x1
jax: 0.10.0
libtpu: 0.0.40
codegen_flags: <defaults>
</compile_context>

<pallas_src>
import math
import functools

import jax
import jax.numpy as jnp
from jax.experimental import pallas as pl
from jax.experimental.pallas import tpu as pltpu


# ----------------------------------------------------------------------------
# helpers: tile picking / VMEM budgeting
# ----------------------------------------------------------------------------
def _pick_square_tile(n):
    """Largest 'nice' tile that divides n (for the (N, N) adjacency)."""
    for t in (512, 256, 128):
        if n % t == 0 and n // t >= 2:
            return t
    return n            # block == full array dim is always legal


def _pick_row_tile(m):
    for t in (1024, 512, 256, 128, 64, 32, 16, 8):
        if m % t == 0:
            return t
    return m            # fall back to the full (untiled) dim


def _pad_up(x, m):
    return ((x + m - 1) // m) * m


def _gcn_vmem_limit(tm, tk, c_in, c_out, mm_bytes):
    """Rough VMEM need of one GCN-layer grid step (double-buffered inputs) + headroom."""
    lane = lambda v: _pad_up(max(v, 1), 128)
    sub = lambda v: _pad_up(max(v, 1), 8)
    est = 0
    est += 2 * sub(tm) * lane(tk) * mm_bytes       # A tile, double buffered
    est += 2 * sub(tk) * lane(c_in) * mm_bytes     # X tile, double buffered
    est += 2 * sub(c_in) * lane(c_out) * 4         # W
    est += 2 * sub(1) * lane(c_out) * 4            # b
    est += 2 * sub(tm) * lane(c_out) * 4           # out tile
    est += sub(tm) * lane(c_in) * 4                # f32 accumulator scratch
    # generous headroom, but stay below every chip's physical VMEM (v7x: 64 MiB)
    return int(min(max(4 * est, 16 * 1024 * 1024), 48 * 1024 * 1024))


# ----------------------------------------------------------------------------
# Kernel 1: one GraphConv layer  out = tanh(A_hat @ X @ W + b)
#           grid = (row tiles, K tiles); f32 accumulator in VMEM scratch
# ----------------------------------------------------------------------------
def _gcn_layer_kernel(a_ref, x_ref, w_ref, b_ref, out_ref, acc_ref):
    kk = pl.program_id(1)

    @pl.when(kk == 0)
    def _init():
        acc_ref[...] = jnp.zeros_like(acc_ref)

    # A-propagation partial product on the MXU (bf16 in, f32 accumulate).
    acc_ref[...] += jnp.dot(a_ref[...], x_ref[...],
                            preferred_element_type=jnp.float32)

    @pl.when(kk == pl.num_programs(1) - 1)
    def _finalize():
        # dense weight + bias + tanh kept in f32 (v5e has no bf16 VPU/EUP)
        out_ref[...] = jnp.tanh(
            jnp.dot(acc_ref[...], w_ref[...],
                    preferred_element_type=jnp.float32) + b_ref[...])


def gcn_layer(a_mm, x_mm, w, b):
    """tanh(A_hat @ X @ W + b) with a row/K-tiled grid.

    a_mm : (N, N) normalized adjacency in the matmul dtype (bf16)
    x_mm : (N, C_in) node features in the matmul dtype
    w, b : (C_in, C_out), (1, C_out) float32
    """
    n = a_mm.shape[0]
    c_in = x_mm.shape[1]
    c_out = w.shape[1]
    tm = tk = _pick_square_tile(n)
    grid = (n // tm, n // tk)
    vmem_limit = _gcn_vmem_limit(tm, tk, c_in, c_out, a_mm.dtype.itemsize)

    return pl.pallas_call(
        _gcn_layer_kernel,
        out_shape=jax.ShapeDtypeStruct((n, c_out), jnp.float32),
        grid_spec=pltpu.PrefetchScalarGridSpec(
            num_scalar_prefetch=0,
            grid=grid,
            in_specs=[
                pl.BlockSpec((tm, tk), lambda i, kk: (i, kk)),       # A tile
                pl.BlockSpec((tk, c_in), lambda i, kk: (kk, 0)),     # X rows
                pl.BlockSpec((c_in, c_out), lambda i, kk: (0, 0)),   # W
                pl.BlockSpec((1, c_out), lambda i, kk: (0, 0)),      # b
            ],
            out_specs=pl.BlockSpec((tm, c_out), lambda i, kk: (i, 0)),
            scratch_shapes=[pltpu.VMEM((tm, c_in), jnp.float32)],
        ),
        compiler_params=pltpu.CompilerParams(
            dimension_semantics=("parallel", "arbitrary"),
            vmem_limit_bytes=vmem_limit,
        ),
    )(a_mm, x_mm, w, b)


# ----------------------------------------------------------------------------
# Kernel 2: batched dense + ReLU  (used for conv1 and for the pool-folded conv2)
# ----------------------------------------------------------------------------
def _dense_relu_kernel(x_ref, w_ref, b_ref, o_ref):
    o_ref[...] = jnp.maximum(
        jnp.dot(x_ref[...], w_ref[...], preferred_element_type=jnp.float32)
        + b_ref[...], 0.0)


def dense_relu(x, w, b):
    m, kdim = x.shape
    n_out = w.shape[1]
    tm = _pick_row_tile(m)
    return pl.pallas_call(
        _dense_relu_kernel,
        out_shape=jax.ShapeDtypeStruct((m, n_out), jnp.float32),
        grid=(m // tm,),
        in_specs=[
            pl.BlockSpec((tm, kdim), lambda i: (i, 0)),
            pl.BlockSpec((kdim, n_out), lambda i: (0, 0)),
            pl.BlockSpec((1, n_out), lambda i: (0, 0)),
        ],
        out_specs=pl.BlockSpec((tm, n_out), lambda i: (i, 0)),
        compiler_params=pltpu.CompilerParams(
            dimension_semantics=("parallel",),
        ),
    )(x, w, b)


# ----------------------------------------------------------------------------
# Full forward pass
# ----------------------------------------------------------------------------
def dgcnn_partial_forward(a_hat, x, params, *, num_graphs, nodes_per_graph, k,
                          matmul_dtype=jnp.bfloat16):
    # --- 4-layer GraphConv tower: one tiled Pallas kernel per layer ---
    a_mm = a_hat.astype(matmul_dtype)
    feats = []
    h = x
    for wname, bname in (("w1", "b1"), ("w2", "b2"), ("w3", "b3"), ("w4", "b4")):
        h = gcn_layer(a_mm, h.astype(matmul_dtype), params[wname], params[bname])
        feats.append(h)
    g_out = jnp.concatenate(feats, axis=-1)                       # (N, 3H+1) f32

    # --- DGL SortPooling (plain JAX glue; sort/top-k has no clean Pallas path) ---
    d_lat = g_out.shape[-1]
    feat = jnp.sort(g_out, axis=-1)                               # per-node ascending sort
    feat = feat.reshape(num_graphs, nodes_per_graph, d_lat)
    order = jnp.argsort(-feat[..., -1], axis=1)[:, :k]            # top-k by last channel
    xs = jnp.take_along_axis(feat, order[..., None], axis=1)      # (B, k, D)
    # TODO(synk): graphs with fewer than k nodes are not zero-padded (all demo graphs
    #             have nodes_per_graph >= k, matching the test setup).

    # --- conv1 (kernel=stride=D) + ReLU: one batched matmul over all B*k rows ---
    xs_flat = xs.reshape(num_graphs * k, d_lat)
    y = dense_relu(xs_flat, params["wc1"], params["bc1"])         # (B*k, 16)

    # --- avgpool1d(2,2) folded into conv2's weight, then conv2 + ReLU as one matmul.
    # W2_eff[2j+r, c, o] = 0.5 * wc2[j, c, o]; for odd k the pad row is dropped,
    # which equals F.pad(x,(0,1)) + AvgPool1d(count_include_pad=True) semantics.
    w2_eff = (0.5 * jnp.repeat(params["wc2"], 2, axis=0))[:k]     # (k, 16, 32)
    w2_eff = w2_eff.reshape(k * 16, 32)
    y2 = y.reshape(num_graphs, k * 16)   # free XLA relayout between the two pallas calls
    out = dense_relu(y2, w2_eff, params["bc2"])                   # (B, 32)
    return out


# ----------------------------------------------------------------------------
if __name__ == "__main__":
    key = jax.random.PRNGKey(0)

    # module hyper-params (small, but large enough to exercise the tiled grids)
    B = 4                 # graphs in the batched graph
    npg = 64              # nodes per graph
    N = B * npg           # 256 total nodes  -> GCN grid (2, 2) with 128x128 A tiles
    F_in = 4              # input_features
    H = 8                 # hidden_channels
    num_layers = 3
    D = H * num_layers + 1        # total_latent_dim = 25

    # k exactly as computed in DGCNN_partial.__init__ (k=0.6)
    num_unique_nodes = [npg] * B
    nn_sorted = sorted(num_unique_nodes)
    k = nn_sorted[int(math.ceil(0.6 * len(nn_sorted))) - 1]
    k = max(10, int(k))           # -> 64
    kc2 = math.ceil(k / 2)        # conv2 kernel size -> 32

    keys = jax.random.split(key, 16)
    X = jax.random.normal(keys[0], (N, F_in), jnp.float32)

    # block-diagonal symmetric adjacency (batched graph), add self loops, sym-normalize
    rand = jax.random.uniform(keys[1], (N, N))
    adj = (rand + rand.T) > 1.2
    blk = (jnp.arange(N)[:, None] // npg) == (jnp.arange(N)[None, :] // npg)
    adj = jnp.where(blk, adj, False)
    adj = jnp.where(jnp.eye(N, dtype=bool), False, adj).astype(jnp.float32)
    a_tilde = adj + jnp.eye(N, dtype=jnp.float32)               # dgl.add_self_loop
    dinv = 1.0 / jnp.sqrt(a_tilde.sum(-1))
    a_hat = a_tilde * dinv[:, None] * dinv[None, :]             # D^-1/2 (A+I) D^-1/2

    def init_w(k_, shape):
        return jax.random.normal(k_, shape, jnp.float32) * 0.2

    params = dict(
        # GraphConv layers: feat @ W + b
        w1=init_w(keys[2], (F_in, H)), b1=init_w(keys[3], (1, H)),
        w2=init_w(keys[4], (H, H)),    b2=init_w(keys[5], (1, H)),
        w3=init_w(keys[6], (H, H)),    b3=init_w(keys[7], (1, H)),
        w4=init_w(keys[8], (H, 1)),    b4=init_w(keys[9], (1, 1)),
        # conv1: torch weight (16, 1, D) stored as (D, 16)
        wc1=init_w(keys[10], (D, 16)), bc1=init_w(keys[11], (1, 16)),
        # conv2: torch weight (32, 16, kc2) stored as (kc2, 16, 32)
        wc2=init_w(keys[12], (kc2, 16, 32)), bc2=init_w(keys[13], (1, 32)),
    )

    fwd = jax.jit(functools.partial(
        dgcnn_partial_forward, num_graphs=B, nodes_per_graph=npg, k=k))
    out = jax.block_until_ready(fwd(a_hat, X, params))

    assert out.shape == (B, 32) and out.dtype == jnp.float32
    assert bool(jnp.all(jnp.isfinite(out)))
    print("KERNEL_OK")
</pallas_src>

<mosaic_0001>
module attributes {stable_mosaic.version = 11 : i64} {
  func.func @_gcn_layer_kernel(%arg0: i32, %arg1: i32, %arg2: memref<128x128xbf16, #tpu.memory_space<vmem>>, %arg3: memref<128x8xbf16, #tpu.memory_space<vmem>>, %arg4: memref<8x8xf32, #tpu.memory_space<vmem>>, %arg5: memref<1x8xf32, #tpu.memory_space<vmem>>, %arg6: memref<128x8xf32, #tpu.memory_space<vmem>>, %arg7: memref<128x8xf32, #tpu.memory_space<vmem>>) attributes {dimension_semantics = [#tpu.dimension_semantics<parallel>, #tpu.dimension_semantics<arbitrary>], iteration_bounds = array<i64: 2, 2>, scalar_prefetch = 0 : i64, scratch_operands = 1 : i64, tpu.core_type = #tpu.core_type<tc>, window_params = [{transform_indices = @transform_0, window_bounds = array<i64: 128, 128>}, {transform_indices = @transform_1, window_bounds = array<i64: 128, 8>}, {pipeline_mode = #tpu.pipeline_mode<synchronous>, transform_indices = @transform_2, window_bounds = array<i64: 8, 8>}, {pipeline_mode = #tpu.pipeline_mode<synchronous>, transform_indices = @transform_3, window_bounds = array<i64: 1, 8>}, {transform_indices = @transform_4, window_bounds = array<i64: 128, 8>}]} {
    %c0_i32 = arith.constant 0 : i32
    %0 = arith.cmpi eq, %arg1, %c0_i32 : i32
    %1 = arith.extui %0 : i1 to i32
    %c0_i32_0 = arith.constant 0 : i32
    %2 = arith.cmpi ne, %1, %c0_i32_0 : i32
    scf.if %2 {
      %cst_9 = arith.constant 0.000000e+00 : f32
      %12 = vector.broadcast %cst_9 : f32 to vector<128x8xf32>
      %c0_10 = arith.constant 0 : index
      %c0_11 = arith.constant 0 : index
      %13 = vector.load %arg7[%c0_10, %c0_11] : memref<128x8xf32, #tpu.memory_space<vmem>>, vector<128x8xf32>
      tpu.vector_store %arg7[%c0_10, %c0_11], %12 {strides = array<i32>} : memref<128x8xf32, #tpu.memory_space<vmem>>, vector<128x8xf32>,
    } else {
    }
    %c0 = arith.constant 0 : index
    %c0_1 = arith.constant 0 : index
    %3 = vector.load %arg7[%c0, %c0_1] : memref<128x8xf32, #tpu.memory_space<vmem>>, vector<128x8xf32>
    %c0_2 = arith.constant 0 : index
    %c0_3 = arith.constant 0 : index
    %4 = vector.load %arg2[%c0_2, %c0_3] : memref<128x128xbf16, #tpu.memory_space<vmem>>, vector<128x128xbf16>
    %c0_4 = arith.constant 0 : index
    %c0_5 = arith.constant 0 : index
    %5 = vector.load %arg3[%c0_4, %c0_5] : memref<128x8xbf16, #tpu.memory_space<vmem>>, vector<128x8xbf16>
    %cst = arith.constant dense<0.000000e+00> : vector<128x8xf32>
    %6 = tpu.matmul %4, %5, %cst {dimension_numbers = #tpu.dot_dimension_numbers<[1], [0], [0], [1], [0, 0, 1, 1], [], []>} : vector<128x128xbf16>, vector<128x8xbf16>, vector<128x8xf32> -> vector<128x8xf32>
    %7 = arith.addf %3, %6 : vector<128x8xf32>
    %c0_6 = arith.constant 0 : index
    %c0_7 = arith.constant 0 : index
    %8 = vector.load %arg7[%c0_6, %c0_7] : memref<128x8xf32, #tpu.memory_space<vmem>>, vector<128x8xf32>
    tpu.vector_store %arg7[%c0_6, %c0_7], %7 {strides = array<i32>} : memref<128x8xf32, #tpu.memory_space<vmem>>, vector<128x8xf32>,
    %c1_i32 = arith.constant 1 : i32
    %9 = arith.cmpi eq, %arg1, %c1_i32 : i32
    %10 = arith.extui %9 : i1 to i32
    %c0_i32_8 = arith.constant 0 : i32
    %11 = arith.cmpi ne, %10, %c0_i32_8 : i32
    scf.if %11 {
      %c0_9 = arith.constant 0 : index
      %c0_10 = arith.constant 0 : index
      %12 = vector.load %arg7[%c0_9, %c0_10] : memref<128x8xf32, #tpu.memory_space<vmem>>, vector<128x8xf32>
      %c0_11 = arith.constant 0 : index
      %c0_12 = arith.constant 0 : index
      %13 = vector.load %arg4[%c0_11, %c0_12] : memref<8x8xf32, #tpu.memory_space<vmem>>, vector<8x8xf32>
      %cst_13 = arith.constant dense<0.000000e+00> : vector<128x8xf32>
      %14 = tpu.matmul %12, %13, %cst_13 {dimension_numbers = #tpu.dot_dimension_numbers<[1], [0], [0], [1], [0, 0, 1, 1], [], []>} : vector<128x8xf32>, vector<8x8xf32>, vector<128x8xf32> -> vector<128x8xf32>
      %c0_14 = arith.constant 0 : index
      %c0_15 = arith.constant 0 : index
      %15 = vector.load %arg5[%c0_14, %c0_15] : memref<1x8xf32, #tpu.memory_space<vmem>>, vector<1x8xf32>
      %16 = vector.broadcast %15 : vector<1x8xf32> to vector<128x8xf32>
      %17 = arith.addf %14, %16 : vector<128x8xf32>
      %18 = math.tanh %17 : vector<128x8xf32>
      %c0_16 = arith.constant 0 : index
      %c0_17 = arith.constant 0 : index
      %19 = vector.load %arg6[%c0_16, %c0_17] : memref<128x8xf32, #tpu.memory_space<vmem>>, vector<128x8xf32>
      tpu.vector_store %arg6[%c0_16, %c0_17], %18 {strides = array<i32>} : memref<128x8xf32, #tpu.memory_space<vmem>>, vector<128x8xf32>,
    } else {
    }
    return
  }
  func.func @transform_0(%arg0: i32, %arg1: i32) -> (i32, i32) {
    %c0_i32 = arith.constant 0 : i32
    return %arg0, %arg1 : i32, i32
  }
  func.func @transform_1(%arg0: i32, %arg1: i32) -> (i32, i32) {
    %c0_i32 = arith.constant 0 : i32
    %c0_i32_0 = arith.constant 0 : i32
    return %arg1, %c0_i32 : i32, i32
  }
  func.func @transform_2(%arg0: i32, %arg1: i32) -> (i32, i32) {
    %c0_i32 = arith.constant 0 : i32
    %c0_i32_0 = arith.constant 0 : i32
    %c0_i32_1 = arith.constant 0 : i32
    return %c0_i32, %c0_i32_0 : i32, i32
  }
  func.func @transform_3(%arg0: i32, %arg1: i32) -> (i32, i32) {
    %c0_i32 = arith.constant 0 : i32
    %c0_i32_0 = arith.constant 0 : i32
    %c0_i32_1 = arith.constant 0 : i32
    return %c0_i32, %c0_i32_0 : i32, i32
  }
  func.func @transform_4(%arg0: i32, %arg1: i32) -> (i32, i32) {
    %c0_i32 = arith.constant 0 : i32
    %c0_i32_0 = arith.constant 0 : i32
    return %arg0, %c0_i32 : i32, i32
  }
}

module attributes {stable_mosaic.version = 11 : i64} {
  func.func @_gcn_layer_kernel(%arg0: i32, %arg1: i32, %arg2: memref<128x128xbf16, #tpu.memory_space<vmem>>, %arg3: memref<128x4xbf16, #tpu.memory_space<vmem>>, %arg4: memref<4x8xf32, #tpu.memory_space<vmem>>, %arg5: memref<1x8xf32, #tpu.memory_space<vmem>>, %arg6: memref<128x8xf32, #tpu.memory_space<vmem>>, %arg7: memref<128x4xf32, #tpu.memory_space<vmem>>) attributes {dimension_semantics = [#tpu.dimension_semantics<parallel>, #tpu.dimension_semantics<arbitrary>], iteration_bounds = array<i64: 2, 2>, scalar_prefetch = 0 : i64, scratch_operands = 1 : i64, tpu.core_type = #tpu.core_type<tc>, window_params = [{transform_indices = @transform_0, window_bounds = array<i64: 128, 128>}, {transform_indices = @transform_1, window_bounds = array<i64: 128, 4>}, {pipeline_mode = #tpu.pipeline_mode<synchronous>, transform_indices = @transform_2, window_bounds = array<i64: 4, 8>}, {pipeline_mode = #tpu.pipeline_mode<synchronous>, transform_indices = @transform_3, window_bounds = array<i64: 1, 8>}, {transform_indices = @transform_4, window_bounds = array<i64: 128, 8>}]} {
    %c0_i32 = arith.constant 0 : i32
    %0 = arith.cmpi eq, %arg1, %c0_i32 : i32
    %1 = arith.extui %0 : i1 to i32
    %c0_i32_0 = arith.constant 0 : i32
    %2 = arith.cmpi ne, %1, %c0_i32_0 : i32
    scf.if %2 {
      %cst_9 = arith.constant 0.000000e+00 : f32
      %12 = vector.broadcast %cst_9 : f32 to vector<128x4xf32>
      %c0_10 = arith.constant 0 : index
      %c0_11 = arith.constant 0 : index
      %13 = vector.load %arg7[%c0_10, %c0_11] : memref<128x4xf32, #tpu.memory_space<vmem>>, vector<128x4xf32>
      tpu.vector_store %arg7[%c0_10, %c0_11], %12 {strides = array<i32>} : memref<128x4xf32, #tpu.memory_space<vmem>>, vector<128x4xf32>,
    } else {
    }
    %c0 = arith.constant 0 : index
    %c0_1 = arith.constant 0 : index
    %3 = vector.load %arg7[%c0, %c0_1] : memref<128x4xf32, #tpu.memory_space<vmem>>, vector<128x4xf32>
    %c0_2 = arith.constant 0 : index
    %c0_3 = arith.constant 0 : index
    %4 = vector.load %arg2[%c0_2, %c0_3] : memref<128x128xbf16, #tpu.memory_space<vmem>>, vector<128x128xbf16>
    %c0_4 = arith.constant 0 : index
    %c0_5 = arith.constant 0 : index
    %5 = vector.load %arg3[%c0_4, %c0_5] : memref<128x4xbf16, #tpu.memory_space<vmem>>, vector<128x4xbf16>
    %cst = arith.constant dense<0.000000e+00> : vector<128x4xf32>
    %6 = tpu.matmul %4, %5, %cst {dimension_numbers = #tpu.dot_dimension_numbers<[1], [0], [0], [1], [0, 0, 1, 1], [], []>} : vector<128x128xbf16>, vector<128x4xbf16>, vector<128x4xf32> -> vector<128x4xf32>
    %7 = arith.addf %3, %6 : vector<128x4xf32>
    %c0_6 = arith.constant 0 : index
    %c0_7 = arith.constant 0 : index
    %8 = vector.load %arg7[%c0_6, %c0_7] : memref<128x4xf32, #tpu.memory_space<vmem>>, vector<128x4xf32>
    tpu.vector_store %arg7[%c0_6, %c0_7], %7 {strides = array<i32>} : memref<128x4xf32, #tpu.memory_space<vmem>>, vector<128x4xf32>,
    %c1_i32 = arith.constant 1 : i32
    %9 = arith.cmpi eq, %arg1, %c1_i32 : i32
    %10 = arith.extui %9 : i1 to i32
    %c0_i32_8 = arith.constant 0 : i32
    %11 = arith.cmpi ne, %10, %c0_i32_8 : i32
    scf.if %11 {
      %c0_9 = arith.constant 0 : index
      %c0_10 = arith.constant 0 : index
      %12 = vector.load %arg7[%c0_9, %c0_10] : memref<128x4xf32, #tpu.memory_space<vmem>>, vector<128x4xf32>
      %c0_11 = arith.constant 0 : index
      %c0_12 = arith.constant 0 : index
      %13 = vector.load %arg4[%c0_11, %c0_12] : memref<4x8xf32, #tpu.memory_space<vmem>>, vector<4x8xf32>
      %cst_13 = arith.constant dense<0.000000e+00> : vector<128x8xf32>
      %14 = tpu.matmul %12, %13, %cst_13 {dimension_numbers = #tpu.dot_dimension_numbers<[1], [0], [0], [1], [0, 0, 1, 1], [], []>} : vector<128x4xf32>, vector<4x8xf32>, vector<128x8xf32> -> vector<128x8xf32>
      %c0_14 = arith.constant 0 : index
      %c0_15 = arith.constant 0 : index
      %15 = vector.load %arg5[%c0_14, %c0_15] : memref<1x8xf32, #tpu.memory_space<vmem>>, vector<1x8xf32>
      %16 = vector.broadcast %15 : vector<1x8xf32> to vector<128x8xf32>
      %17 = arith.addf %14, %16 : vector<128x8xf32>
      %18 = math.tanh %17 : vector<128x8xf32>
      %c0_16 = arith.constant 0 : index
      %c0_17 = arith.constant 0 : index
      %19 = vector.load %arg6[%c0_16, %c0_17] : memref<128x8xf32, #tpu.memory_space<vmem>>, vector<128x8xf32>
      tpu.vector_store %arg6[%c0_16, %c0_17], %18 {strides = array<i32>} : memref<128x8xf32, #tpu.memory_space<vmem>>, vector<128x8xf32>,
    } else {
    }
    return
  }
  func.func @transform_0(%arg0: i32, %arg1: i32) -> (i32, i32) {
    %c0_i32 = arith.constant 0 : i32
    return %arg0, %arg1 : i32, i32
  }
  func.func @transform_1(%arg0: i32, %arg1: i32) -> (i32, i32) {
    %c0_i32 = arith.constant 0 : i32
    %c0_i32_0 = arith.constant 0 : i32
    return %arg1, %c0_i32 : i32, i32
  }
  func.func @transform_2(%arg0: i32, %arg1: i32) -> (i32, i32) {
    %c0_i32 = arith.constant 0 : i32
    %c0_i32_0 = arith.constant 0 : i32
    %c0_i32_1 = arith.constant 0 : i32
    return %c0_i32, %c0_i32_0 : i32, i32
  }
  func.func @transform_3(%arg0: i32, %arg1: i32) -> (i32, i32) {
    %c0_i32 = arith.constant 0 : i32
    %c0_i32_0 = arith.constant 0 : i32
    %c0_i32_1 = arith.constant 0 : i32
    return %c0_i32, %c0_i32_0 : i32, i32
  }
  func.func @transform_4(%arg0: i32, %arg1: i32) -> (i32, i32) {
    %c0_i32 = arith.constant 0 : i32
    %c0_i32_0 = arith.constant 0 : i32
    return %arg0, %c0_i32 : i32, i32
  }
}

module attributes {stable_mosaic.version = 11 : i64} {
  func.func @_gcn_layer_kernel(%arg0: i32, %arg1: i32, %arg2: memref<128x128xbf16, #tpu.memory_space<vmem>>, %arg3: memref<128x8xbf16, #tpu.memory_space<vmem>>, %arg4: memref<8x1xf32, #tpu.memory_space<vmem>>, %arg5: memref<1x1xf32, #tpu.memory_space<vmem>>, %arg6: memref<128x1xf32, #tpu.memory_space<vmem>>, %arg7: memref<128x8xf32, #tpu.memory_space<vmem>>) attributes {dimension_semantics = [#tpu.dimension_semantics<parallel>, #tpu.dimension_semantics<arbitrary>], iteration_bounds = array<i64: 2, 2>, scalar_prefetch = 0 : i64, scratch_operands = 1 : i64, tpu.core_type = #tpu.core_type<tc>, window_params = [{transform_indices = @transform_0, window_bounds = array<i64: 128, 128>}, {transform_indices = @transform_1, window_bounds = array<i64: 128, 8>}, {pipeline_mode = #tpu.pipeline_mode<synchronous>, transform_indices = @transform_2, window_bounds = array<i64: 8, 1>}, {pipeline_mode = #tpu.pipeline_mode<synchronous>, transform_indices = @transform_3, window_bounds = array<i64: 1, 1>}, {transform_indices = @transform_4, window_bounds = array<i64: 128, 1>}]} {
    %c0_i32 = arith.constant 0 : i32
    %0 = arith.cmpi eq, %arg1, %c0_i32 : i32
    %1 = arith.extui %0 : i1 to i32
    %c0_i32_0 = arith.constant 0 : i32
    %2 = arith.cmpi ne, %1, %c0_i32_0 : i32
    scf.if %2 {
      %cst_9 = arith.constant 0.000000e+00 : f32
      %12 = vector.broadcast %cst_9 : f32 to vector<128x8xf32>
      %c0_10 = arith.constant 0 : index
      %c0_11 = arith.constant 0 : index
      %13 = vector.load %arg7[%c0_10, %c0_11] : memref<128x8xf32, #tpu.memory_space<vmem>>, vector<128x8xf32>
      tpu.vector_store %arg7[%c0_10, %c0_11], %12 {strides = array<i32>} : memref<128x8xf32, #tpu.memory_space<vmem>>, vector<128x8xf32>,
    } else {
    }
    %c0 = arith.constant 0 : index
    %c0_1 = arith.constant 0 : index
    %3 = vector.load %arg7[%c0, %c0_1] : memref<128x8xf32, #tpu.memory_space<vmem>>, vector<128x8xf32>
    %c0_2 = arith.constant 0 : index
    %c0_3 = arith.constant 0 : index
    %4 = vector.load %arg2[%c0_2, %c0_3] : memref<128x128xbf16, #tpu.memory_space<vmem>>, vector<128x128xbf16>
    %c0_4 = arith.constant 0 : index
    %c0_5 = arith.constant 0 : index
    %5 = vector.load %arg3[%c0_4, %c0_5] : memref<128x8xbf16, #tpu.memory_space<vmem>>, vector<128x8xbf16>
    %cst = arith.constant dense<0.000000e+00> : vector<128x8xf32>
    %6 = tpu.matmul %4, %5, %cst {dimension_numbers = #tpu.dot_dimension_numbers<[1], [0], [0], [1], [0, 0, 1, 1], [], []>} : vector<128x128xbf16>, vector<128x8xbf16>, vector<128x8xf32> -> vector<128x8xf32>
    %7 = arith.addf %3, %6 : vector<128x8xf32>
    %c0_6 = arith.constant 0 : index
    %c0_7 = arith.constant 0 : index
    %8 = vector.load %arg7[%c0_6, %c0_7] : memref<128x8xf32, #tpu.memory_space<vmem>>, vector<128x8xf32>
    tpu.vector_store %arg7[%c0_6, %c0_7], %7 {strides = array<i32>} : memref<128x8xf32, #tpu.memory_space<vmem>>, vector<128x8xf32>,
    %c1_i32 = arith.constant 1 : i32
    %9 = arith.cmpi eq, %arg1, %c1_i32 : i32
    %10 = arith.extui %9 : i1 to i32
    %c0_i32_8 = arith.constant 0 : i32
    %11 = arith.cmpi ne, %10, %c0_i32_8 : i32
    scf.if %11 {
      %c0_9 = arith.constant 0 : index
      %c0_10 = arith.constant 0 : index
      %12 = vector.load %arg7[%c0_9, %c0_10] : memref<128x8xf32, #tpu.memory_space<vmem>>, vector<128x8xf32>
      %c0_11 = arith.constant 0 : index
      %c0_12 = arith.constant 0 : index
      %13 = vector.load %arg4[%c0_11, %c0_12] : memref<8x1xf32, #tpu.memory_space<vmem>>, vector<8x1xf32>
      %cst_13 = arith.constant dense<0.000000e+00> : vector<128x1xf32>
      %14 = tpu.matmul %12, %13, %cst_13 {dimension_numbers = #tpu.dot_dimension_numbers<[1], [0], [0], [1], [0, 0, 1, 1], [], []>} : vector<128x8xf32>, vector<8x1xf32>, vector<128x1xf32> -> vector<128x1xf32>
      %c0_14 = arith.constant 0 : index
      %c0_15 = arith.constant 0 : index
      %15 = vector.load %arg5[%c0_14, %c0_15] : memref<1x1xf32, #tpu.memory_space<vmem>>, vector<1x1xf32>
      %16 = vector.broadcast %15 : vector<1x1xf32> to vector<128x1xf32>
      %17 = arith.addf %14, %16 : vector<128x1xf32>
      %18 = math.tanh %17 : vector<128x1xf32>
      %c0_16 = arith.constant 0 : index
      %c0_17 = arith.constant 0 : index
      %19 = vector.load %arg6[%c0_16, %c0_17] : memref<128x1xf32, #tpu.memory_space<vmem>>, vector<128x1xf32>
      tpu.vector_store %arg6[%c0_16, %c0_17], %18 {strides = array<i32>} : memref<128x1xf32, #tpu.memory_space<vmem>>, vector<128x1xf32>,
    } else {
    }
    return
  }
  func.func @transform_0(%arg0: i32, %arg1: i32) -> (i32, i32) {
    %c0_i32 = arith.constant 0 : i32
    return %arg0, %arg1 : i32, i32
  }
  func.func @transform_1(%arg0: i32, %arg1: i32) -> (i32, i32) {
    %c0_i32 = arith.constant 0 : i32
    %c0_i32_0 = arith.constant 0 : i32
    return %arg1, %c0_i32 : i32, i32
  }
  func.func @transform_2(%arg0: i32, %arg1: i32) -> (i32, i32) {
    %c0_i32 = arith.constant 0 : i32
    %c0_i32_0 = arith.constant 0 : i32
    %c0_i32_1 = arith.constant 0 : i32
    return %c0_i32, %c0_i32_0 : i32, i32
  }
  func.func @transform_3(%arg0: i32, %arg1: i32) -> (i32, i32) {
    %c0_i32 = arith.constant 0 : i32
    %c0_i32_0 = arith.constant 0 : i32
    %c0_i32_1 = arith.constant 0 : i32
    return %c0_i32, %c0_i32_0 : i32, i32
  }
  func.func @transform_4(%arg0: i32, %arg1: i32) -> (i32, i32) {
    %c0_i32 = arith.constant 0 : i32
    %c0_i32_0 = arith.constant 0 : i32
    return %arg0, %c0_i32 : i32, i32
  }
}

module attributes {stable_mosaic.version = 11 : i64} {
  func.func @_dense_relu_kernel(%arg0: i32, %arg1: memref<256x25xf32, #tpu.memory_space<vmem>>, %arg2: memref<25x16xf32, #tpu.memory_space<vmem>>, %arg3: memref<1x16xf32, #tpu.memory_space<vmem>>, %arg4: memref<256x16xf32, #tpu.memory_space<vmem>>) attributes {dimension_semantics = [#tpu.dimension_semantics<parallel>], iteration_bounds = array<i64: 1>, scalar_prefetch = 0 : i64, scratch_operands = 0 : i64, tpu.core_type = #tpu.core_type<tc>, window_params = [{transform_indices = @transform_0, window_bounds = array<i64: 256, 25>}, {pipeline_mode = #tpu.pipeline_mode<synchronous>, transform_indices = @transform_1, window_bounds = array<i64: 25, 16>}, {pipeline_mode = #tpu.pipeline_mode<synchronous>, transform_indices = @transform_2, window_bounds = array<i64: 1, 16>}, {transform_indices = @transform_3, window_bounds = array<i64: 256, 16>}]} {
    %c0 = arith.constant 0 : index
    %c0_0 = arith.constant 0 : index
    %0 = vector.load %arg1[%c0, %c0_0] : memref<256x25xf32, #tpu.memory_space<vmem>>, vector<256x25xf32>
    %c0_1 = arith.constant 0 : index
    %c0_2 = arith.constant 0 : index
    %1 = vector.load %arg2[%c0_1, %c0_2] : memref<25x16xf32, #tpu.memory_space<vmem>>, vector<25x16xf32>
    %cst = arith.constant dense<0.000000e+00> : vector<256x16xf32>
    %2 = tpu.matmul %0, %1, %cst {dimension_numbers = #tpu.dot_dimension_numbers<[1], [0], [0], [1], [0, 0, 1, 1], [], []>} : vector<256x25xf32>, vector<25x16xf32>, vector<256x16xf32> -> vector<256x16xf32>
    %c0_3 = arith.constant 0 : index
    %c0_4 = arith.constant 0 : index
    %3 = vector.load %arg3[%c0_3, %c0_4] : memref<1x16xf32, #tpu.memory_space<vmem>>, vector<1x16xf32>
    %4 = vector.broadcast %3 : vector<1x16xf32> to vector<256x16xf32>
    %5 = arith.addf %2, %4 : vector<256x16xf32>
    %cst_5 = arith.constant 0.000000e+00 : f32
    %6 = vector.broadcast %cst_5 : f32 to vector<256x16xf32>
    %7 = arith.maximumf %5, %6 : vector<256x16xf32>
    %c0_6 = arith.constant 0 : index
    %c0_7 = arith.constant 0 : index
    %8 = vector.load %arg4[%c0_6, %c0_7] : memref<256x16xf32, #tpu.memory_space<vmem>>, vector<256x16xf32>
    tpu.vector_store %arg4[%c0_6, %c0_7], %7 {strides = array<i32>} : memref<256x16xf32, #tpu.memory_space<vmem>>, vector<256x16xf32>,
    return
  }
  func.func @transform_0(%arg0: i32) -> (i32, i32) {
    %c0_i32 = arith.constant 0 : i32
    %c0_i32_0 = arith.constant 0 : i32
    return %arg0, %c0_i32 : i32, i32
  }
  func.func @transform_1(%arg0: i32) -> (i32, i32) {
    %c0_i32 = arith.constant 0 : i32
    %c0_i32_0 = arith.constant 0 : i32
    %c0_i32_1 = arith.constant 0 : i32
    return %c0_i32, %c0_i32_0 : i32, i32
  }
  func.func @transform_2(%arg0: i32) -> (i32, i32) {
    %c0_i32 = arith.constant 0 : i32
    %c0_i32_0 = arith.constant 0 : i32
    %c0_i32_1 = arith.constant 0 : i32
    return %c0_i32, %c0_i32_0 : i32, i32
  }
  func.func @transform_3(%arg0: i32) -> (i32, i32) {
    %c0_i32 = arith.constant 0 : i32
    %c0_i32_0 = arith.constant 0 : i32
    return %arg0, %c0_i32 : i32, i32
  }
}

module attributes {stable_mosaic.version = 11 : i64} {
  func.func @_dense_relu_kernel(%arg0: i32, %arg1: memref<4x1024xf32, #tpu.memory_space<vmem>>, %arg2: memref<1024x32xf32, #tpu.memory_space<vmem>>, %arg3: memref<1x32xf32, #tpu.memory_space<vmem>>, %arg4: memref<4x32xf32, #tpu.memory_space<vmem>>) attributes {dimension_semantics = [#tpu.dimension_semantics<parallel>], iteration_bounds = array<i64: 1>, scalar_prefetch = 0 : i64, scratch_operands = 0 : i64, tpu.core_type = #tpu.core_type<tc>, window_params = [{transform_indices = @transform_0, window_bounds = array<i64: 4, 1024>}, {pipeline_mode = #tpu.pipeline_mode<synchronous>, transform_indices = @transform_1, window_bounds = array<i64: 1024, 32>}, {pipeline_mode = #tpu.pipeline_mode<synchronous>, transform_indices = @transform_2, window_bounds = array<i64: 1, 32>}, {transform_indices = @transform_3, window_bounds = array<i64: 4, 32>}]} {
    %c0 = arith.constant 0 : index
    %c0_0 = arith.constant 0 : index
    %0 = vector.load %arg1[%c0, %c0_0] : memref<4x1024xf32, #tpu.memory_space<vmem>>, vector<4x1024xf32>
    %c0_1 = arith.constant 0 : index
    %c0_2 = arith.constant 0 : index
    %1 = vector.load %arg2[%c0_1, %c0_2] : memref<1024x32xf32, #tpu.memory_space<vmem>>, vector<1024x32xf32>
    %cst = arith.constant dense<0.000000e+00> : vector<4x32xf32>
    %2 = tpu.matmul %0, %1, %cst {dimension_numbers = #tpu.dot_dimension_numbers<[1], [0], [0], [1], [0, 0, 1, 1], [], []>} : vector<4x1024xf32>, vector<1024x32xf32>, vector<4x32xf32> -> vector<4x32xf32>
    %c0_3 = arith.constant 0 : index
    %c0_4 = arith.constant 0 : index
    %3 = vector.load %arg3[%c0_3, %c0_4] : memref<1x32xf32, #tpu.memory_space<vmem>>, vector<1x32xf32>
    %4 = vector.broadcast %3 : vector<1x32xf32> to vector<4x32xf32>
    %5 = arith.addf %2, %4 : vector<4x32xf32>
    %cst_5 = arith.constant 0.000000e+00 : f32
    %6 = vector.broadcast %cst_5 : f32 to vector<4x32xf32>
    %7 = arith.maximumf %5, %6 : vector<4x32xf32>
    %c0_6 = arith.constant 0 : index
    %c0_7 = arith.constant 0 : index
    %8 = vector.load %arg4[%c0_6, %c0_7] : memref<4x32xf32, #tpu.memory_space<vmem>>, vector<4x32xf32>
    tpu.vector_store %arg4[%c0_6, %c0_7], %7 {strides = array<i32>} : memref<4x32xf32, #tpu.memory_space<vmem>>, vector<4x32xf32>,
    return
  }
  func.func @transform_0(%arg0: i32) -> (i32, i32) {
    %c0_i32 = arith.constant 0 : i32
    %c0_i32_0 = arith.constant 0 : i32
    return %arg0, %c0_i32 : i32, i32
  }
  func.func @transform_1(%arg0: i32) -> (i32, i32) {
    %c0_i32 = arith.constant 0 : i32
    %c0_i32_0 = arith.constant 0 : i32
    %c0_i32_1 = arith.constant 0 : i32
    return %c0_i32, %c0_i32_0 : i32, i32
  }
  func.func @transform_2(%arg0: i32) -> (i32, i32) {
    %c0_i32 = arith.constant 0 : i32
    %c0_i32_0 = arith.constant 0 : i32
    %c0_i32_1 = arith.constant 0 : i32
    return %c0_i32, %c0_i32_0 : i32, i32
  }
  func.func @transform_3(%arg0: i32) -> (i32, i32) {
    %c0_i32 = arith.constant 0 : i32
    %c0_i32_0 = arith.constant 0 : i32
    return %arg0, %c0_i32 : i32, i32
  }
}

</mosaic_0001>

<llo_original>
// kernel: dgcnn_partial_forward.6
$region0: #{dgcnn_partial_forward.6}
  #allocation0 [shape = 'u32[]', space=smem, size = 0x4, offset = 0x4, fixed_abs, tag = 'smem constant byte address 0x4 - core index']
  #allocation1 [shape = 'u32[144,128]{1,0:T(1,128)}', space=vmem, size = 0x12000, scoped, tag = 'internal scratch']
  #allocation2 [shape = 'f32[128,4]{1,0:T(8,128)}', space=vmem, size = 0x10000, scoped, tag = 'scratch operand']
  %s0 = inlined_call_operand.vmem [shape: bf16[256,256], index: 0, kind: input, shape index: {}]
  %s1 = inlined_call_operand.vmem [shape: bf16[256,4], index: 1, kind: input, shape index: {}]
  %s2 = inlined_call_operand.vmem [shape: f32[4,8], index: 2, kind: input, shape index: {}]
  %s3 = inlined_call_operand.vmem [shape: f32[1,8], index: 3, kind: input, shape index: {}]
  %s4 = inlined_call_operand.vmem [shape: f32[256,8], index: 4, kind: output, shape index: {}]
  %s5 = sld [smem:[#allocation0]]
  $region98: #{dgcnn_partial_forward.6} parent=0
    _
  %s7 = ssub.s32 1, %s5
  %s8 = scalar_select 0, %s7, %s5
  $region1: #{dgcnn_partial_forward.6} parent=0
    #allocation3 [shape = 'u8[65536]{0}', space=vmem, size = 0x10000, scoped, tag = 'input window, operand 0']
    loop: start=0, step=1, limit=6
    $region2: #{dgcnn_partial_forward.6} parent=1 // loop_pre_header
      _
    $region3: #{dgcnn_partial_forward.6} parent=1 // loop_header
      %s10 = sphi 0, %s14
      %p11 = scmp.ge.s32.totalorder %s10, 6
      %s17 = sphi 0, %s29
      %s18 = sphi 0, %s25
      %s19 = sphi 0, %s17
      %s20 = sphi 0, %s18
      %s21 = sphi 0, %s19
      %s22 = sphi 0, %s20
      %s34 = sphi 0, %s36
      %s37 = sphi 0, %s34
      %s38 = sphi 0, %s37
      %s54 = sphi 0, %s38
      %s60 = sphi 0, %s62
      %s63 = sphi 0, %s60
      %s64 = sphi 0, %s63
      %s80 = sphi 0, %s64
      %s84 = sphi 0, %s84
      %s86 = sphi 0, %s84
      %s87 = sphi 0, %s86
      %s101 = sphi 0, %s87
      %s105 = sphi 0, %s105
      %s107 = sphi 0, %s105
      %s108 = sphi 0, %s107
      %s122 = sphi 0, %s108
      %s128 = sphi 0, %s130
      %s131 = sphi 0, %s128
      %s132 = sphi 0, %s131
      %s148 = sphi 0, %s132
    $region4: #{dgcnn_partial_forward.6} parent=1 // loop_header_branch
      %13 = sbr.rel (%p11) target = $region8
    $region5: #{dgcnn_partial_forward.6} parent=1 // loop_body
      %s15 = ssub.s32 %s10, 1
      %s16 = ssub.s32 %s10, 2
      %s23 = sadd.s32 1, %s18
      %p24 = scmp.ge.s32.totalorder %s23, 2
      %s25 = scalar_select %p24, 0, %s23
      %s26 = sadd.s32 1, %s17
      %s27 = scalar_select %p24, %s26, %s17
      %p28 = scmp.ge.s32.totalorder %s27, 2
      %s29 = scalar_select %p28, 0, %s27
      %s30 = ssub.s32 %s17, %s29
      %s31 = ssub.s32 %s18, %s25
      %s32 = sor.u32 %s30, %s31
      %p33 = scmp.eq.s32.totalorder %s32, 0
      %s35 = sadd.s32 %s34, 1
      %s36 = scalar_select %p33, %s34, %s35
      %p39 = pneg %p33
      %p40 = scmp.eq.s32.totalorder %s10, 3
      %p41 = por %p39, %p40
      %p42 = scmp.ne.s32.totalorder %s34, %s37
      %p43 = scmp.eq.s32.totalorder %s10, 0
      %p44 = por %p42, %p43
      %p45 = scmp.ne.s32.totalorder %s34, %s37
      %p46 = scmp.eq.s32.totalorder %s15, 3
      %p47 = por %p45, %p46
      %p48 = scmp.ne.s32.totalorder %s37, %s38
      %p49 = scmp.eq.s32.totalorder %s15, 0
      %p50 = por %p48, %p49
      %p51 = scmp.ne.s32.totalorder %s37, %s38
      %p52 = scmp.eq.s32.totalorder %s16, 3
      %p53 = por %p51, %p52
      %p55 = scmp.ne.s32.totalorder %s38, %s54
      %p56 = scmp.eq.s32.totalorder %s16, 0
      %p57 = por %p55, %p56
      %s58 = ssub.s32 %s18, %s25
      %p59 = scmp.eq.s32.totalorder %s58, 0
      %s61 = sadd.s32 %s60, 1
      %s62 = scalar_select %p59, %s60, %s61
      %p65 = pneg %p59
      %p66 = scmp.eq.s32.totalorder %s10, 3
      %p67 = por %p65, %p66
      %p68 = scmp.ne.s32.totalorder %s60, %s63
      %p69 = scmp.eq.s32.totalorder %s10, 0
      %p70 = por %p68, %p69
      %p71 = scmp.ne.s32.totalorder %s60, %s63
      %p72 = scmp.eq.s32.totalorder %s15, 3
      %p73 = por %p71, %p72
      %p74 = scmp.ne.s32.totalorder %s63, %s64
      %p75 = scmp.eq.s32.totalorder %s15, 0
      %p76 = por %p74, %p75
      %p77 = scmp.ne.s32.totalorder %s63, %s64
      %p78 = scmp.eq.s32.totalorder %s16, 3
      %p79 = por %p77, %p78
      %p81 = scmp.ne.s32.totalorder %s64, %s80
      %p82 = scmp.eq.s32.totalorder %s16, 0
      %p83 = por %p81, %p82
      %s85 = sadd.s32 %s84, 1
      %p88 = scmp.eq.s32.totalorder %s10, 3
      %p89 = scmp.ne.s32.totalorder %s84, %s86
      %p90 = scmp.eq.s32.totalorder %s10, 0
      %p91 = por %p89, %p90
      %p92 = scmp.ne.s32.totalorder %s84, %s86
      %p93 = scmp.eq.s32.totalorder %s15, 3
      %p94 = por %p92, %p93
      %p95 = scmp.ne.s32.totalorder %s86, %s87
      %p96 = scmp.eq.s32.totalorder %s15, 0
      %p97 = por %p95, %p96
      %p98 = scmp.ne.s32.totalorder %s86, %s87
      %p99 = scmp.eq.s32.totalorder %s16, 3
      %p100 = por %p98, %p99
      %p102 = scmp.ne.s32.totalorder %s87, %s101
      %p103 = scmp.eq.s32.totalorder %s16, 0
      %p104 = por %p102, %p103
      %s106 = sadd.s32 %s105, 1
      %p109 = scmp.eq.s32.totalorder %s10, 3
      %p110 = scmp.ne.s32.totalorder %s105, %s107
      %p111 = scmp.eq.s32.totalorder %s10, 0
      %p112 = por %p110, %p111
      %p113 = scmp.ne.s32.totalorder %s105, %s107
      %p114 = scmp.eq.s32.totalorder %s15, 3
      %p115 = por %p113, %p114
      %p116 = scmp.ne.s32.totalorder %s107, %s108
      %p117 = scmp.eq.s32.totalorder %s15, 0
      %p118 = por %p116, %p117
      %p119 = scmp.ne.s32.totalorder %s107, %s108
      %p120 = scmp.eq.s32.totalorder %s16, 3
      %p121 = por %p119, %p120
      %p123 = scmp.ne.s32.totalorder %s108, %s122
      %p124 = scmp.eq.s32.totalorder %s16, 0
      %p125 = por %p123, %p124
      %s126 = ssub.s32 %s17, %s29
      %p127 = scmp.eq.s32.totalorder %s126, 0
      %s129 = sadd.s32 %s128, 1
      %s130 = scalar_select %p127, %s128, %s129
      %p133 = pneg %p127
      %p134 = scmp.eq.s32.totalorder %s10, 3
      %p135 = por %p133, %p134
      %p136 = scmp.ne.s32.totalorder %s128, %s131
      %p137 = scmp.eq.s32.totalorder %s10, 0
      %p138 = por %p136, %p137
      %p139 = scmp.ne.s32.totalorder %s128, %s131
      %p140 = scmp.eq.s32.totalorder %s15, 3
      %p141 = por %p139, %p140
      %p142 = scmp.ne.s32.totalorder %s131, %s132
      %p143 = scmp.eq.s32.totalorder %s15, 0
      %p144 = por %p142, %p143
      %p145 = scmp.ne.s32.totalorder %s131, %s132
      %p146 = scmp.eq.s32.totalorder %s16, 3
      %p147 = por %p145, %p146
      %p149 = scmp.ne.s32.totalorder %s132, %s148
      %p150 = scmp.eq.s32.totalorder %s16, 0
      %p151 = por %p149, %p150
      %p152 = scmp.le.s32.totalorder 1, %s10
      %p153 = scmp.lt.s32.totalorder %s10, 5
      %p154 = pnand %p152, %p153
      %p155 = pneg %p154
      // Predicated region
      $region9: #{dgcnn_partial_forward.6} parent=5 // pred_check
        _
      $region10: #{dgcnn_partial_forward.6} parent=5 // pred_check_branch
        %157 = sbr.rel (%p154) target = $region12
      $region11: #{dgcnn_partial_forward.6} parent=5 // pred_region
        %s158 = ssub.s32 %s10, 1
        // Predicated region
        $region13: #{dgcnn_partial_forward.6} parent=11 // pred_check
          %p159 = pneg %p97
        $region14: #{dgcnn_partial_forward.6} parent=11 // pred_check_branch
          %161 = sbr.rel (%p159) target = $region16
        $region15: #{dgcnn_partial_forward.6} parent=11 // pred_region
          _
        $region16: #{dgcnn_partial_forward.6} parent=11 // pred_fallthru
          _
        // Predicated region
        $region17: #{dgcnn_partial_forward.6} parent=11 // pred_check
          %p162 = pneg %p118
        $region18: #{dgcnn_partial_forward.6} parent=11 // pred_check_branch
          %164 = sbr.rel (%p162) target = $region20
        $region19: #{dgcnn_partial_forward.6} parent=11 // pred_region
          _
        $region20: #{dgcnn_partial_forward.6} parent=11 // pred_fallthru
          _
      $region12: #{dgcnn_partial_forward.6} parent=5 // pred_fallthru
        _
      %p165 = scmp.lt.s32.totalorder %s10, 4
      // Predicated region
      $region21: #{dgcnn_partial_forward.6} parent=5 // pred_check
        %p166 = pneg %p165
      $region22: #{dgcnn_partial_forward.6} parent=5 // pred_check_branch
        %168 = sbr.rel (%p166) target = $region24
      $region23: #{dgcnn_partial_forward.6} parent=5 // pred_region
        // Predicated region
        $region25: #{dgcnn_partial_forward.6} parent=23 // pred_check
          %p169 = pneg %p44
        $region26: #{dgcnn_partial_forward.6} parent=23 // pred_check_branch
          %171 = sbr.rel (%p169) target = $region28
        $region27: #{dgcnn_partial_forward.6} parent=23 // pred_region
          %s172 = sand.u32 %s34, 1
          %s173 = sand.u32 %s34, 1
          %s174 = smul.addr %s173, 64
          %s175 = scalar_lea.vmem [#allocation3], %s174
          %s176 = smul.u32 16, %s17
          %s177 = smul.addr %s176, 2
          %s178 = sadd.s32 %s18, %s177
          %s179 = smul.addr %s178, 4
          %s180 = scalar_lea.vmem %s0, %s179
          // Predicated region
          $region29: #{dgcnn_partial_forward.6} parent=27 // pred_check
            _
          $region30: #{dgcnn_partial_forward.6} parent=27 // pred_check_branch
            %182 = sbr.rel (0) target = $region32
          $region31: #{dgcnn_partial_forward.6} parent=27 // pred_region
            // Predicated region
            $region33: #{dgcnn_partial_forward.6} parent=31 // pred_check
              _
            $region34: #{dgcnn_partial_forward.6} parent=31 // pred_check_branch
              %184 = sbr.rel target = $region36
            $region35: #{dgcnn_partial_forward.6} parent=31 // pred_region
              // Predicated region
              $region48: #{dgcnn_partial_forward.6} parent=35 // pred_check
                _
              $region49: #{dgcnn_partial_forward.6} parent=35 // pred_check_branch
                %230 = sbr.rel (0) target = $region51
              $region50: #{dgcnn_partial_forward.6} parent=35 // pred_region
                loop: start=0, step=1, limit=1
                $region52: #{dgcnn_partial_forward.6} parent=50 // loop_pre_header
                  _
                $region53: #{dgcnn_partial_forward.6} parent=50 // loop_header
                  %s232 = sphi 0, %s236
                  %p233 = scmp.ge.s32.totalorder %s232, 1
                  %s237 = sphi %s180, %s180
                  %s238 = sphi %s175, %s175
                $region54: #{dgcnn_partial_forward.6} parent=50 // loop_header_branch
                  %235 = sbr.rel (%p233) target = $region58
                $region55: #{dgcnn_partial_forward.6} parent=50 // loop_body
                  _
                $region56: #{dgcnn_partial_forward.6} parent=50 // loop_footer
                  %s236 = sadd.s32 1, %s232
                $region57: #{dgcnn_partial_forward.6} parent=50 // loop_footer_branch
                  %231 = sbr.rel target = $region53
                $region58: #{dgcnn_partial_forward.6} parent=50 // loop_exit
                  _
                %s240 = ssub.s32 16, 1
                loop: start=0, step=1, limit=1
                $region59: #{dgcnn_partial_forward.6} parent=50 // loop_pre_header
                  _
                $region60: #{dgcnn_partial_forward.6} parent=50 // loop_header
                  %s242 = sphi 0, %s246
                  %p243 = scmp.ge.s32.totalorder %s242, 1
                  %s247 = sphi %s180, %s180
                  %s248 = sphi %s175, %s175
                $region61: #{dgcnn_partial_forward.6} parent=50 // loop_header_branch
                  %245 = sbr.rel (%p243) target = $region65
                $region62: #{dgcnn_partial_forward.6} parent=50 // loop_body
                  %v249 = vld [vmem:[%s247] sm:%s240]
                  %250 = vst [vmem:[%s248] sm:%s240] %v249
                  %v251 = vld [vmem:[%s247 + $0x8] sm:%s240]
                  %252 = vst [vmem:[%s248 + $0x4] sm:%s240] %v251
                  %v253 = vld [vmem:[%s247 + $0x10] sm:%s240]
                  %254 = vst [vmem:[%s248 + $0x8] sm:%s240] %v253
                  %v255 = vld [vmem:[%s247 + $0x18] sm:%s240]
                  %256 = vst [vmem:[%s248 + $0xc] sm:%s240] %v255
                  %v257 = vld [vmem:[%s247 + $0x20] sm:%s240]
                  %258 = vst [vmem:[%s248 + $0x10] sm:%s240] %v257
                  %v259 = vld [vmem:[%s247 + $0x28] sm:%s240]
                  %260 = vst [vmem:[%s248 + $0x14] sm:%s240] %v259
                  %v261 = vld [vmem:[%s247 + $0x30] sm:%s240]
                  %262 = vst [vmem:[%s248 + $0x18] sm:%s240] %v261
                  %v263 = vld [vmem:[%s247 + $0x38] sm:%s240]
                  %264 = vst [vmem:[%s248 + $0x1c] sm:%s240] %v263
                  %v265 = vld [vmem:[%s247 + $0x40] sm:%s240]
                  %266 = vst [vmem:[%s248 + $0x20] sm:%s240] %v265
                  %v267 = vld [vmem:[%s247 + $0x48] sm:%s240]
                  %268 = vst [vmem:[%s248 + $0x24] sm:%s240] %v267
                  %v269 = vld [vmem:[%s247 + $0x50] sm:%s240]
                  %270 = vst [vmem:[%s248 + $0x28] sm:%s240] %v269
                  %v271 = vld [vmem:[%s247 + $0x58] sm:%s240]
                  %272 = vst [vmem:[%s248 + $0x2c] sm:%s240] %v271
                  %v273 = vld [vmem:[%s247 + $0x60] sm:%s240]
                  %274 = vst [vmem:[%s248 + $0x30] sm:%s240] %v273
                  %v275 = vld [vmem:[%s247 + $0x68] sm:%s240]
                  %276 = vst [vmem:[%s248 + $0x34] sm:%s240] %v275
                  %v277 = vld [vmem:[%s247 + $0x70] sm:%s240]
                  %278 = vst [vmem:[%s248 + $0x38] sm:%s240] %v277
                  %v279 = vld [vmem:[%s247 + $0x78] sm:%s240]
                  %280 = vst [vmem:[%s248 + $0x3c] sm:%s240] %v279
                $region63: #{dgcnn_partial_forward.6} parent=50 // loop_footer
                  %s246 = sadd.s32 1, %s242
                $region64: #{dgcnn_partial_forward.6} parent=50 // loop_footer_branch
                  %241 = sbr.rel target = $region60
                $region65: #{dgcnn_partial_forward.6} parent=50 // loop_exit
                  _
              $region51: #{dgcnn_partial_forward.6} parent=35 // pred_fallthru
                _
            $region36: #{dgcnn_partial_forward.6} parent=31 // pred_fallthru
              _
            // Predicated region
            $region37: #{dgcnn_partial_forward.6} parent=31 // pred_check
              _
            $region38: #{dgcnn_partial_forward.6} parent=31 // pred_check_branch
              %186 = sbr.rel (0) target = $region40
            $region39: #{dgcnn_partial_forward.6} parent=31 // pred_region
              %s188 = ssub.s32 16, 1
              loop: start=0, step=1, limit=1
              $region41: #{dgcnn_partial_forward.6} parent=39 // loop_pre_header
                _
              $region42: #{dgcnn_partial_forward.6} parent=39 // loop_header
                %s190 = sphi 0, %s194
                %p191 = scmp.ge.s32.totalorder %s190, 1
                %s195 = sphi %s180, %s180
                %s196 = sphi %s175, %s175
              $region43: #{dgcnn_partial_forward.6} parent=39 // loop_header_branch
                %193 = sbr.rel (%p191) target = $region47
              $region44: #{dgcnn_partial_forward.6} parent=39 // loop_body
                %v197 = vld [vmem:[%s195] sm:%s188]
                %198 = vst [vmem:[%s196] sm:%s188] %v197
                %v199 = vld [vmem:[%s195 + $0x8] sm:%s188]
                %200 = vst [vmem:[%s196 + $0x4] sm:%s188] %v199
                %v201 = vld [vmem:[%s195 + $0x10] sm:%s188]
                %202 = vst [vmem:[%s196 + $0x8] sm:%s188] %v201
                %v203 = vld [vmem:[%s195 + $0x18] sm:%s188]
                %204 = vst [vmem:[%s196 + $0xc] sm:%s188] %v203
                %v205 = vld [vmem:[%s195 + $0x20] sm:%s188]
                %206 = vst [vmem:[%s196 + $0x10] sm:%s188] %v205
                %v207 = vld [vmem:[%s195 + $0x28] sm:%s188]
                %208 = vst [vmem:[%s196 + $0x14] sm:%s188] %v207
                %v209 = vld [vmem:[%s195 + $0x30] sm:%s188]
                %210 = vst [vmem:[%s196 + $0x18] sm:%s188] %v209
                %v211 = vld [vmem:[%s195 + $0x38] sm:%s188]
                %212 = vst [vmem:[%s196 + $0x1c] sm:%s188] %v211
                %v213 = vld [vmem:[%s195 + $0x40] sm:%s188]
                %214 = vst [vmem:[%s196 + $0x20] sm:%s188] %v213
                %v215 = vld [vmem:[%s195 + $0x48] sm:%s188]
                %216 = vst [vmem:[%s196 + $0x24] sm:%s188] %v215
                %v217 = vld [vmem:[%s195 + $0x50] sm:%s188]
                %218 = vst [vmem:[%s196 + $0x28] sm:%s188] %v217
                %v219 = vld [vmem:[%s195 + $0x58] sm:%s188]
                %220 = vst [vmem:[%s196 + $0x2c] sm:%s188] %v219
                %v221 = vld [vmem:[%s195 + $0x60] sm:%s188]
                %222 = vst [vmem:[%s196 + $0x30] sm:%s188] %v221
                %v223 = vld [vmem:[%s195 + $0x68] sm:%s188]
                %224 = vst [vmem:[%s196 + $0x34] sm:%s188] %v223
                %v225 = vld [vmem:[%s195 + $0x70] sm:%s188]
                %226 = vst [vmem:[%s196 + $0x38] sm:%s188] %v225
                %v227 = vld [vmem:[%s195 + $0x78] sm:%s188]
                %228 = vst [vmem:[%s196 + $0x3c] sm:%s188] %v227
              $region45: #{dgcnn_partial_forward.6} parent=39 // loop_footer
                %s194 = sadd.s32 1, %s190
              $region46: #{dgcnn_partial_forward.6} parent=39 // loop_footer_branch
                %189 = sbr.rel target = $region42
              $region47: #{dgcnn_partial_forward.6} parent=39 // loop_exit
                _
            $region40: #{dgcnn_partial_forward.6} parent=31 // pred_fallthru
              _
          $region32: #{dgcnn_partial_forward.6} parent=27 // pred_fallthru
            _
          %281 = vnop
        $region28: #{dgcnn_partial_forward.6} parent=23 // pred_fallthru
          _
        // Predicated region
        $region66: #{dgcnn_partial_forward.6} parent=23 // pred_check
          %p282 = pneg %p70
        $region67: #{dgcnn_partial_forward.6} parent=23 // pred_check_branch
          %284 = sbr.rel (%p282) target = $region69
        $region68: #{dgcnn_partial_forward.6} parent=23 // pred_region
          %s285 = smul.u32 16, %s18
          %p286 = scmp.lt.s32.totalorder %s285, 31
          %s287 = scalar_select %p286, %s285, 31
          %s288 = smul.addr %s287, 4
          %s289 = scalar_lea.vmem %s1, %s288
          %s290 = smul.u32 16, %s18
        $region69: #{dgcnn_partial_forward.6} parent=23 // pred_fallthru
          _
      $region24: #{dgcnn_partial_forward.6} parent=5 // pred_fallthru
        _
      %p291 = scmp.le.s32.totalorder 1, %s10
      %p292 = scmp.lt.s32.totalorder %s10, 5
      %p293 = pnand %p291, %p292
      %p294 = pneg %p293
      // Predicated region
      $region70: #{dgcnn_partial_forward.6} parent=5 // pred_check
        _
      $region71: #{dgcnn_partial_forward.6} parent=5 // pred_check_branch
        %296 = sbr.rel (%p293) target = $region73
      $region72: #{dgcnn_partial_forward.6} parent=5 // pred_region
        %s297 = ssub.s32 %s10, 1
        %s298 = sand.u32 %s37, 1
        %s299 = sand.u32 %s37, 1
        %s300 = smul.addr %s299, 64
        %s301 = scalar_lea.vmem [#allocation3], %s300
        // Predicated region
        $region74: #{dgcnn_partial_forward.6} parent=72 // pred_check
          %p302 = pneg %p50
        $region75: #{dgcnn_partial_forward.6} parent=72 // pred_check_branch
          %304 = sbr.rel (%p302) target = $region77
        $region76: #{dgcnn_partial_forward.6} parent=72 // pred_region
          _
        $region77: #{dgcnn_partial_forward.6} parent=72 // pred_fallthru
          _
        %s305 = sand.u32 %s37, 1
        %s306 = sand.u32 %s37, 1
        %s307 = smul.addr %s306, 64
        %s308 = scalar_lea.vmem [#allocation3], %s307
        %p309 = pneg %p50
        %p310 = pneg %p47
        %s311 = smul.u32 16, %s20
        %p312 = scmp.lt.s32.totalorder %s311, 31
        %s313 = scalar_select %p312, %s311, 31
        %s314 = smul.addr %s313, 4
        %s315 = scalar_lea.vmem %s1, %s314
        %p316 = pneg %p76
        %p317 = pneg %p73
        %p318 = pneg %p97
        %p319 = pneg %p94
        %p320 = pneg %p118
        %p321 = pneg %p115
        %p322 = pneg %p144
        %p323 = pneg %p141
        %s324 = smul.u32 16, %s19
        %p325 = scmp.lt.s32.totalorder %s324, 31
        %s326 = scalar_select %p325, %s324, 31
        %s327 = smul.addr %s326, 8
        %s328 = scalar_lea.vmem %s4, %s327
        %s329 = smul.u32 16, %s19
        %s330 = smul.u32 16, %s20
        %p331 = scmp.lt.s32.totalorder %s330, 31
        %s332 = scalar_select %p331, %s330, 31
        %s333 = smul.addr %s332, 4
        %s334 = scalar_lea.vmem %s1, %s333
        %s335 = smul.u32 16, %s20
        %s336 = smul.u32 16, %s19
        %p337 = scmp.lt.s32.totalorder %s336, 31
        %s338 = scalar_select %p337, %s336, 31
        %s339 = smul.addr %s338, 8
        %s340 = scalar_lea.vmem %s4, %s339
        %s341 = smul.u32 16, %s19
        %p343 = scmp.eq.s32.totalorder %s20, 0
        // Predicated region
        $region78: #{dgcnn_partial_forward.6} parent=72 // pred_check
          %p344 = pneg %p343
        $region79: #{dgcnn_partial_forward.6} parent=72 // pred_check_branch
          %346 = sbr.rel (%p344) target = $region81
        $region80: #{dgcnn_partial_forward.6} parent=72 // pred_region
          %vm347 = vcmask 31744
          %348 = vst.msk [vmem:[#allocation2] sm:$0xff] %vm347, 0.0
          %349 = vst.msk [vmem:[#allocation2 + $0x8] sm:$0xff] %vm347, 0.0
          %350 = vst.msk [vmem:[#allocation2 + $0x10] sm:$0xff] %vm347, 0.0
          %351 = vst.msk [vmem:[#allocation2 + $0x18] sm:$0xff] %vm347, 0.0
          %352 = vst.msk [vmem:[#allocation2 + $0x20] sm:$0xff] %vm347, 0.0
          %353 = vst.msk [vmem:[#allocation2 + $0x28] sm:$0xff] %vm347, 0.0
          %354 = vst.msk [vmem:[#allocation2 + $0x30] sm:$0xff] %vm347, 0.0
          %355 = vst.msk [vmem:[#allocation2 + $0x38] sm:$0xff] %vm347, 0.0
          %356 = vst.msk [vmem:[#allocation2 + $0x40] sm:$0xff] %vm347, 0.0
          %357 = vst.msk [vmem:[#allocation2 + $0x48] sm:$0xff] %vm347, 0.0
          %358 = vst.msk [vmem:[#allocation2 + $0x50] sm:$0xff] %vm347, 0.0
          %359 = vst.msk [vmem:[#allocation2 + $0x58] sm:$0xff] %vm347, 0.0
          %360 = vst.msk [vmem:[#allocation2 + $0x60] sm:$0xff] %vm347, 0.0
          %361 = vst.msk [vmem:[#allocation2 + $0x68] sm:$0xff] %vm347, 0.0
          %362 = vst.msk [vmem:[#allocation2 + $0x70] sm:$0xff] %vm347, 0.0
          %363 = vst.msk [vmem:[#allocation2 + $0x78] sm:$0xff] %vm347, 0.0
        $region81: #{dgcnn_partial_forward.6} parent=72 // pred_fallthru
          _
        %v364 = vld [vmem:[#allocation2] sm:$0xff]
        %v365 = vld [vmem:[#allocation2 + $0x8] sm:$0xff]
        %v366 = vld [vmem:[#allocation2 + $0x10] sm:$0xff]
        %v367 = vld [vmem:[#allocation2 + $0x18] sm:$0xff]
        %v368 = vld [vmem:[#allocation2 + $0x20] sm:$0xff]
        %v369 = vld [vmem:[#allocation2 + $0x28] sm:$0xff]
        %v370 = vld [vmem:[#allocation2 + $0x30] sm:$0xff]
        %v371 = vld [vmem:[#allocation2 + $0x38] sm:$0xff]
        %v372 = vld [vmem:[#allocation2 + $0x40] sm:$0xff]
        %v373 = vld [vmem:[#allocation2 + $0x48] sm:$0xff]
        %v374 = vld [vmem:[#allocation2 + $0x50] sm:$0xff]
        %v375 = vld [vmem:[#allocation2 + $0x58] sm:$0xff]
        %v376 = vld [vmem:[#allocation2 + $0x60] sm:$0xff]
        %v377 = vld [vmem:[#allocation2 + $0x68] sm:$0xff]
        %v378 = vld [vmem:[#allocation2 + $0x70] sm:$0xff]
        %v379 = vld [vmem:[#allocation2 + $0x78] sm:$0xff]
        %v380 = vld [vmem:[%s301] sm:$0xf]
        %v381 = vld [vmem:[%s301 + $0x4] sm:$0xf]
        %v382 = vld [vmem:[%s301 + $0x8] sm:$0xf]
        %v383 = vld [vmem:[%s301 + $0xc] sm:$0xf]
        %v384 = vld [vmem:[%s301 + $0x10] sm:$0xf]
        %v385 = vld [vmem:[%s301 + $0x14] sm:$0xf]
        %v386 = vld [vmem:[%s301 + $0x18] sm:$0xf]
        %v387 = vld [vmem:[%s301 + $0x1c] sm:$0xf]
        %v388 = vld [vmem:[%s301 + $0x20] sm:$0xf]
        %v389 = vld [vmem:[%s301 + $0x24] sm:$0xf]
        %v390 = vld [vmem:[%s301 + $0x28] sm:$0xf]
        %v391 = vld [vmem:[%s301 + $0x2c] sm:$0xf]
        %v392 = vld [vmem:[%s301 + $0x30] sm:$0xf]
        %v393 = vld [vmem:[%s301 + $0x34] sm:$0xf]
        %v394 = vld [vmem:[%s301 + $0x38] sm:$0xf]
        %v395 = vld [vmem:[%s301 + $0x3c] sm:$0xf]
        %v396 = vld [vmem:[%s334] sm:$0xf]
        %v397 = vld [vmem:[%s334 + $0x4] sm:$0xf]
        %v398 = vld [vmem:[%s334 + $0x8] sm:$0xf]
        %v399 = vld [vmem:[%s334 + $0xc] sm:$0xf]
        %v400 = vld [vmem:[%s334 + $0x10] sm:$0xf]
        %v401 = vld [vmem:[%s334 + $0x14] sm:$0xf]
        %v402 = vld [vmem:[%s334 + $0x18] sm:$0xf]
        %v403 = vld [vmem:[%s334 + $0x1c] sm:$0xf]
        %v404 = vld [vmem:[%s334 + $0x20] sm:$0xf]
        %v405 = vld [vmem:[%s334 + $0x24] sm:$0xf]
        %v406 = vld [vmem:[%s334 + $0x28] sm:$0xf]
        %v407 = vld [vmem:[%s334 + $0x2c] sm:$0xf]
        %v408 = vld [vmem:[%s334 + $0x30] sm:$0xf]
        %v409 = vld [vmem:[%s334 + $0x34] sm:$0xf]
        %v410 = vld [vmem:[%s334 + $0x38] sm:$0xf]
        %v411 = vld [vmem:[%s334 + $0x3c] sm:$0xf]
        %v428 = vunpack.c.l.b16 %v380
        %v429 = vunpack.c.l.b16 %v381
        %v430 = vunpack.c.l.b16 %v382
        %v431 = vunpack.c.l.b16 %v383
        %v432 = vunpack.c.l.b16 %v384
        %v433 = vunpack.c.l.b16 %v385
        %v434 = vunpack.c.l.b16 %v386
        %v435 = vunpack.c.l.b16 %v387
        %v436 = vunpack.c.l.b16 %v388
        %v437 = vunpack.c.l.b16 %v389
        %v438 = vunpack.c.l.b16 %v390
        %v439 = vunpack.c.l.b16 %v391
        %v440 = vunpack.c.l.b16 %v392
        %v441 = vunpack.c.l.b16 %v393
        %v442 = vunpack.c.l.b16 %v394
        %v443 = vunpack.c.l.b16 %v395
        %v444 = vpack.c.b16 %v429, %v428
        %v445 = vpack.c.b16 %v431, %v430
        %v446 = vpack.c.b16 %v433, %v432
        %v447 = vpack.c.b16 %v435, %v434
        %v448 = vpack.c.b16 %v437, %v436
        %v449 = vpack.c.b16 %v439, %v438
        %v450 = vpack.c.b16 %v441, %v440
        %v451 = vpack.c.b16 %v443, %v442
        %v476 = vunpack.c.l.b16 %v396
        %v477 = vunpack.c.l.b16 %v397
        %v478 = vunpack.c.l.b16 %v398
        %v479 = vunpack.c.l.b16 %v399
        %v480 = vunpack.c.l.b16 %v400
        %v481 = vunpack.c.l.b16 %v401
        %v482 = vunpack.c.l.b16 %v402
        %v483 = vunpack.c.l.b16 %v403
        %v484 = vunpack.c.l.b16 %v404
        %v485 = vunpack.c.l.b16 %v405
        %v486 = vunpack.c.l.b16 %v406
        %v487 = vunpack.c.l.b16 %v407
        %v488 = vunpack.c.l.b16 %v408
        %v489 = vunpack.c.l.b16 %v409
        %v490 = vunpack.c.l.b16 %v410
        %v491 = vunpack.c.l.b16 %v411
        %v492 = vpack.c.b16 %v477, %v476
        %v493 = vpack.c.b16 %v479, %v478
        %v494 = vpack.c.b16 %v481, %v480
        %v495 = vpack.c.b16 %v483, %v482
        %v496 = vpack.c.b16 %v485, %v484
        %v497 = vpack.c.b16 %v487, %v486
        %v498 = vpack.c.b16 %v489, %v488
        %v499 = vpack.c.b16 %v491, %v490
        %508 = vmatprep.subr.bf16.mxu0 0
        %509 = vmatpush1.bf16.msra.mxu0 %v499
        %510 = vmatprep.subr.bf16.mxu0 0
        %511 = vmatpush1.bf16.msra.mxu0 %v498
        %512 = vmatprep.subr.bf16.mxu0 0
        %513 = vmatpush1.bf16.msra.mxu0 %v497
        %514 = vmatprep.subr.bf16.mxu0 0
        %515 = vmatpush1.bf16.msra.mxu0 %v496
        %516 = vmatprep.subr.bf16.mxu0 0
        %517 = vmatpush1.bf16.msra.mxu0 %v495
        %518 = vmatprep.subr.bf16.mxu0 0
        %519 = vmatpush1.bf16.msra.mxu0 %v494
        %520 = vmatprep.subr.bf16.mxu0 0
        %521 = vmatpush1.bf16.msra.mxu0 %v493
        %522 = vmatprep.subr.bf16.mxu0 0
        %523 = vmatpush1.bf16.msra.mxu0 %v492
        %524 = vmatprep.subr.bf16.mxu0 0
        %525 = vmatpush2.bf16.msra.mxu0 0
        %526 = vmatprep.subr.bf16.mxu0 0
        %527 = vmatpush2.bf16.msra.mxu0 0
        %528 = vmatprep.subr.bf16.mxu0 0
        %529 = vmatpush2.bf16.msra.mxu0 0
        %530 = vmatprep.subr.bf16.mxu0 0
        %531 = vmatpush2.bf16.msra.mxu0 0
        %532 = vmatprep.subr.bf16.mxu0 0
        %533 = vmatpush2.bf16.msra.mxu0 0
        %534 = vmatprep.subr.bf16.mxu0 0
        %535 = vmatpush2.bf16.msra.mxu0 0
        %536 = vmatprep.subr.bf16.mxu0 0
        %537 = vmatpush2.bf16.msra.mxu0 0
        %538 = vmatprep.subr.bf16.mxu0 0
        %539 = vmatpush2.bf16.msra.mxu0 0
        %540 = vmatprep.mubr.bf16.mxu0 0
        %541 = vmatmul.mubr.bf16.gmra.mxu0 %v444
        %v542 = vpop.f32.mrf.mxu0
        %v543 = vadd.f32 0.0, %v542
        %v544 = vpop.f32.mrf.mxu0
        %v545 = vpop.f32.mrf.mxu0
        %v546 = vadd.f32 0.0, %v545
        %v547 = vpop.f32.mrf.mxu0
        %548 = vmatprep.mubr.bf16.mxu0 0
        %549 = vmatmul.mubr.bf16.gmra.mxu0 %v445
        %v550 = vpop.f32.mrf.mxu0
        %v551 = vadd.f32 0.0, %v550
        %v552 = vpop.f32.mrf.mxu0
        %v553 = vpop.f32.mrf.mxu0
        %v554 = vadd.f32 0.0, %v553
        %v555 = vpop.f32.mrf.mxu0
        %556 = vmatprep.mubr.bf16.mxu0 0
        %557 = vmatmul.mubr.bf16.gmra.mxu0 %v446
        %v558 = vpop.f32.mrf.mxu0
        %v559 = vadd.f32 0.0, %v558
        %v560 = vpop.f32.mrf.mxu0
        %v561 = vpop.f32.mrf.mxu0
        %v562 = vadd.f32 0.0, %v561
        %v563 = vpop.f32.mrf.mxu0
        %564 = vmatprep.mubr.bf16.mxu0 0
        %565 = vmatmul.mubr.bf16.gmra.mxu0 %v447
        %v566 = vpop.f32.mrf.mxu0
        %v567 = vadd.f32 0.0, %v566
        %v568 = vpop.f32.mrf.mxu0
        %v569 = vpop.f32.mrf.mxu0
        %v570 = vadd.f32 0.0, %v569
        %v571 = vpop.f32.mrf.mxu0
        %572 = vmatprep.mubr.bf16.mxu0 0
        %573 = vmatmul.mubr.bf16.gmra.mxu0 %v448
        %v574 = vpop.f32.mrf.mxu0
        %v575 = vadd.f32 0.0, %v574
        %v576 = vpop.f32.mrf.mxu0
        %v577 = vpop.f32.mrf.mxu0
        %v578 = vadd.f32 0.0, %v577
        %v579 = vpop.f32.mrf.mxu0
        %580 = vmatprep.mubr.bf16.mxu0 0
        %581 = vmatmul.mubr.bf16.gmra.mxu0 %v449
        %v582 = vpop.f32.mrf.mxu0
        %v583 = vadd.f32 0.0, %v582
        %v584 = vpop.f32.mrf.mxu0
        %v585 = vpop.f32.mrf.mxu0
        %v586 = vadd.f32 0.0, %v585
        %v587 = vpop.f32.mrf.mxu0
        %588 = vmatprep.mubr.bf16.mxu0 0
        %589 = vmatmul.mubr.bf16.gmra.mxu0 %v450
        %v590 = vpop.f32.mrf.mxu0
        %v591 = vadd.f32 0.0, %v590
        %v592 = vpop.f32.mrf.mxu0
        %v593 = vpop.f32.mrf.mxu0
        %v594 = vadd.f32 0.0, %v593
        %v595 = vpop.f32.mrf.mxu0
        %596 = vmatprep.mubr.bf16.mxu0 0
        %597 = vmatmul.mubr.bf16.gmra.mxu0 %v451
        %v598 = vpop.f32.mrf.mxu0
        %v599 = vadd.f32 0.0, %v598
        %v600 = vpop.f32.mrf.mxu0
        %v601 = vpop.f32.mrf.mxu0
        %v602 = vadd.f32 0.0, %v601
        %v603 = vpop.f32.mrf.mxu0
        %604 = vdwg.mxu0
        %v605 = vadd.f32 %v364, %v543
        %v606 = vadd.f32 %v365, %v546
        %v607 = vadd.f32 %v366, %v551
        %v608 = vadd.f32 %v367, %v554
        %v609 = vadd.f32 %v368, %v559
        %v610 = vadd.f32 %v369, %v562
        %v611 = vadd.f32 %v370, %v567
        %v612 = vadd.f32 %v371, %v570
        %v613 = vadd.f32 %v372, %v575
        %v614 = vadd.f32 %v373, %v578
        %v615 = vadd.f32 %v374, %v583
        %v616 = vadd.f32 %v375, %v586
        %v617 = vadd.f32 %v376, %v591
        %v618 = vadd.f32 %v377, %v594
        %v619 = vadd.f32 %v378, %v599
        %v620 = vadd.f32 %v379, %v602
        %vm621 = vcmask 31744
        %622 = vst.msk [vmem:[#allocation2] sm:$0xff] %vm621, %v605
        %623 = vst.msk [vmem:[#allocation2 + $0x8] sm:$0xff] %vm621, %v606
        %624 = vst.msk [vmem:[#allocation2 + $0x10] sm:$0xff] %vm621, %v607
        %625 = vst.msk [vmem:[#allocation2 + $0x18] sm:$0xff] %vm621, %v608
        %626 = vst.msk [vmem:[#allocation2 + $0x20] sm:$0xff] %vm621, %v609
        %627 = vst.msk [vmem:[#allocation2 + $0x28] sm:$0xff] %vm621, %v610
        %628 = vst.msk [vmem:[#allocation2 + $0x30] sm:$0xff] %vm621, %v611
        %629 = vst.msk [vmem:[#allocation2 + $0x38] sm:$0xff] %vm621, %v612
        %630 = vst.msk [vmem:[#allocation2 + $0x40] sm:$0xff] %vm621, %v613
        %631 = vst.msk [vmem:[#allocation2 + $0x48] sm:$0xff] %vm621, %v614
        %632 = vst.msk [vmem:[#allocation2 + $0x50] sm:$0xff] %vm621, %v615
        %633 = vst.msk [vmem:[#allocation2 + $0x58] sm:$0xff] %vm621, %v616
        %634 = vst.msk [vmem:[#allocation2 + $0x60] sm:$0xff] %vm621, %v617
        %635 = vst.msk [vmem:[#allocation2 + $0x68] sm:$0xff] %vm621, %v618
        %636 = vst.msk [vmem:[#allocation2 + $0x70] sm:$0xff] %vm621, %v619
        %637 = vst.msk [vmem:[#allocation2 + $0x78] sm:$0xff] %vm621, %v620
        %p638 = scmp.eq.s32.totalorder %s20, 1
        // Predicated region
        $region82: #{dgcnn_partial_forward.6} parent=72 // pred_check
          %p639 = pneg %p638
        $region83: #{dgcnn_partial_forward.6} parent=72 // pred_check_branch
          %641 = sbr.rel (%p639) target = $region85
        $region84: #{dgcnn_partial_forward.6} parent=72 // pred_region
          %v642 = vld [vmem:[#allocation2] sm:$0xff]
          %v643 = vld [vmem:[#allocation2 + $0x8] sm:$0xff]
          %v644 = vld [vmem:[#allocation2 + $0x10] sm:$0xff]
          %v645 = vld [vmem:[#allocation2 + $0x18] sm:$0xff]
          %v646 = vld [vmem:[#allocation2 + $0x20] sm:$0xff]
          %v647 = vld [vmem:[#allocation2 + $0x28] sm:$0xff]
          %v648 = vld [vmem:[#allocation2 + $0x30] sm:$0xff]
          %v649 = vld [vmem:[#allocation2 + $0x38] sm:$0xff]
          %v650 = vld [vmem:[#allocation2 + $0x40] sm:$0xff]
          %v651 = vld [vmem:[#allocation2 + $0x48] sm:$0xff]
          %v652 = vld [vmem:[#allocation2 + $0x50] sm:$0xff]
          %v653 = vld [vmem:[#allocation2 + $0x58] sm:$0xff]
          %v654 = vld [vmem:[#allocation2 + $0x60] sm:$0xff]
          %v655 = vld [vmem:[#allocation2 + $0x68] sm:$0xff]
          %v656 = vld [vmem:[#allocation2 + $0x70] sm:$0xff]
          %v657 = vld [vmem:[#allocation2 + $0x78] sm:$0xff]
          %v658 = vld [vmem:[%s2] sm:$0xf]
          %v659 = vld [vmem:[%s3] sm:$0x1]
          %v661 = vlaneseq
          %v662 = vshrl.u32 %v661, 7
          %v663 = vsub.s32 0, %v662
          %v664 = vrot.slane %v659, %v663
          %v667 = vsel %vm621, %v642, 0
          %v670 = vsel %vm621, %v643, 0
          %v673 = vsel %vm621, %v644, 0
          %v676 = vsel %vm621, %v645, 0
          %v679 = vsel %vm621, %v646, 0
          %v682 = vsel %vm621, %v647, 0
          %v685 = vsel %vm621, %v648, 0
          %v688 = vsel %vm621, %v649, 0
          %v691 = vsel %vm621, %v650, 0
          %v694 = vsel %vm621, %v651, 0
          %v697 = vsel %vm621, %v652, 0
          %v700 = vsel %vm621, %v653, 0
          %v703 = vsel %vm621, %v654, 0
          %v706 = vsel %vm621, %v655, 0
          %v709 = vsel %vm621, %v656, 0
          %v712 = vsel %vm621, %v657, 0
          %vm714 = vcmask 1043456
          %v716 = vsel %vm714, %v658, 0
          %718 = vmatprep.subr.mxu0 0.0
          %719 = vmatpush1.msra.mxu0 0.0
          %720 = vmatprep.subr.mxu0 0.0
          %721 = vmatpush1.msra.mxu0 0.0
          %722 = vmatprep.subr.mxu0 0.0
          %723 = vmatpush1.msra.mxu0 0.0
          %724 = vmatprep.subr.mxu0 0.0
          %725 = vmatpush1.msra.mxu0 0.0
          %726 = vmatprep.subr.mxu0 0.0
          %727 = vmatpush1.msra.mxu0 0.0
          %728 = vmatprep.subr.mxu0 0.0
          %729 = vmatpush1.msra.mxu0 0.0
          %730 = vmatprep.subr.mxu0 0.0
          %731 = vmatpush1.msra.mxu0 0.0
          %732 = vmatprep.subr.mxu0 0.0
          %733 = vmatpush1.msra.mxu0 0.0
          %734 = vmatprep.subr.mxu0 0.0
          %735 = vmatpush1.msra.mxu0 0.0
          %736 = vmatprep.subr.mxu0 0.0
          %737 = vmatpush1.msra.mxu0 0.0
          %738 = vmatprep.subr.mxu0 0.0
          %739 = vmatpush1.msra.mxu0 0.0
          %740 = vmatprep.subr.mxu0 0.0
          %741 = vmatpush1.msra.mxu0 0.0
          %742 = vmatprep.subr.mxu0 0.0
          %743 = vmatpush1.msra.mxu0 0.0
          %744 = vmatprep.subr.mxu0 0.0
          %745 = vmatpush1.msra.mxu0 0.0
          %746 = vmatprep.subr.mxu0 0.0
          %747 = vmatpush1.msra.mxu0 0.0
          %748 = vmatprep.subr.mxu0 0.0
          %749 = vmatpush1.msra.mxu0 %v716
          %750 = vmatprep.subr.mxu0 0.0
          %751 = vmatpush2.msra.mxu0 0.0
          %752 = vmatprep.subr.mxu0 0.0
          %753 = vmatpush2.msra.mxu0 0.0
          %754 = vmatprep.subr.mxu0 0.0
          %755 = vmatpush2.msra.mxu0 0.0
          %756 = vmatprep.subr.mxu0 0.0
          %757 = vmatpush2.msra.mxu0 0.0
          %758 = vmatprep.subr.mxu0 0.0
          %759 = vmatpush2.msra.mxu0 0.0
          %760 = vmatprep.subr.mxu0 0.0
          %761 = vmatpush2.msra.mxu0 0.0
          %762 = vmatprep.subr.mxu0 0.0
          %763 = vmatpush2.msra.mxu0 0.0
          %764 = vmatprep.subr.mxu0 0.0
          %765 = vmatpush2.msra.mxu0 0.0
          %766 = vmatprep.subr.mxu0 0.0
          %767 = vmatpush2.msra.mxu0 0.0
          %768 = vmatprep.subr.mxu0 0.0
          %769 = vmatpush2.msra.mxu0 0.0
          %770 = vmatprep.subr.mxu0 0.0
          %771 = vmatpush2.msra.mxu0 0.0
          %772 = vmatprep.subr.mxu0 0.0
          %773 = vmatpush2.msra.mxu0 0.0
          %774 = vmatprep.subr.mxu0 0.0
          %775 = vmatpush2.msra.mxu0 0.0
          %776 = vmatprep.subr.mxu0 0.0
          %777 = vmatpush2.msra.mxu0 0.0
          %778 = vmatprep.subr.mxu0 0.0
          %779 = vmatpush2.msra.mxu0 0.0
          %780 = vmatprep.subr.mxu0 0.0
          %781 = vmatpush2.msra.mxu0 0.0
          %782 = vmatprep.mubr.f32.mxu0 0.0
          %783 = vmatmul.mubr.f32.gmra.mxu0 %v667
          %v784 = vpop.f32.mrf.mxu0
          %v785 = vadd.f32 %v664, %v784
          %v786 = vpop.f32.mrf.mxu0
          %787 = vmatprep.mubr.f32.mxu0 0.0
          %788 = vmatmul.mubr.f32.gmra.mxu0 %v670
          %v789 = vpop.f32.mrf.mxu0
          %v790 = vadd.f32 %v664, %v789
          %v791 = vpop.f32.mrf.mxu0
          %792 = vmatprep.mubr.f32.mxu0 0.0
          %793 = vmatmul.mubr.f32.gmra.mxu0 %v673
          %v794 = vpop.f32.mrf.mxu0
          %v795 = vadd.f32 %v664, %v794
          %v796 = vpop.f32.mrf.mxu0
          %797 = vmatprep.mubr.f32.mxu0 0.0
          %798 = vmatmul.mubr.f32.gmra.mxu0 %v676
          %v799 = vpop.f32.mrf.mxu0
          %v800 = vadd.f32 %v664, %v799
          %v801 = vpop.f32.mrf.mxu0
          %802 = vmatprep.mubr.f32.mxu0 0.0
          %803 = vmatmul.mubr.f32.gmra.mxu0 %v679
          %v804 = vpop.f32.mrf.mxu0
          %v805 = vadd.f32 %v664, %v804
          %v806 = vpop.f32.mrf.mxu0
          %807 = vmatprep.mubr.f32.mxu0 0.0
          %808 = vmatmul.mubr.f32.gmra.mxu0 %v682
          %v809 = vpop.f32.mrf.mxu0
          %v810 = vadd.f32 %v664, %v809
          %v811 = vpop.f32.mrf.mxu0
          %812 = vmatprep.mubr.f32.mxu0 0.0
          %813 = vmatmul.mubr.f32.gmra.mxu0 %v685
          %v814 = vpop.f32.mrf.mxu0
          %v815 = vadd.f32 %v664, %v814
          %v816 = vpop.f32.mrf.mxu0
          %817 = vmatprep.mubr.f32.mxu0 0.0
          %818 = vmatmul.mubr.f32.gmra.mxu0 %v688
          %v819 = vpop.f32.mrf.mxu0
          %v820 = vadd.f32 %v664, %v819
          %v821 = vpop.f32.mrf.mxu0
          %822 = vmatprep.mubr.f32.mxu0 0.0
          %823 = vmatmul.mubr.f32.gmra.mxu0 %v691
          %v824 = vpop.f32.mrf.mxu0
          %v825 = vadd.f32 %v664, %v824
          %v826 = vpop.f32.mrf.mxu0
          %827 = vmatprep.mubr.f32.mxu0 0.0
          %828 = vmatmul.mubr.f32.gmra.mxu0 %v694
          %v829 = vpop.f32.mrf.mxu0
          %v830 = vadd.f32 %v664, %v829
          %v831 = vpop.f32.mrf.mxu0
          %832 = vmatprep.mubr.f32.mxu0 0.0
          %833 = vmatmul.mubr.f32.gmra.mxu0 %v697
          %v834 = vpop.f32.mrf.mxu0
          %v835 = vadd.f32 %v664, %v834
          %v836 = vpop.f32.mrf.mxu0
          %837 = vmatprep.mubr.f32.mxu0 0.0
          %838 = vmatmul.mubr.f32.gmra.mxu0 %v700
          %v839 = vpop.f32.mrf.mxu0
          %v840 = vadd.f32 %v664, %v839
          %v841 = vpop.f32.mrf.mxu0
          %842 = vmatprep.mubr.f32.mxu0 0.0
          %843 = vmatmul.mubr.f32.gmra.mxu0 %v703
          %v844 = vpop.f32.mrf.mxu0
          %v845 = vadd.f32 %v664, %v844
          %v846 = vpop.f32.mrf.mxu0
          %847 = vmatprep.mubr.f32.mxu0 0.0
          %848 = vmatmul.mubr.f32.gmra.mxu0 %v706
          %v849 = vpop.f32.mrf.mxu0
          %v850 = vadd.f32 %v664, %v849
          %v851 = vpop.f32.mrf.mxu0
          %852 = vmatprep.mubr.f32.mxu0 0.0
          %853 = vmatmul.mubr.f32.gmra.mxu0 %v709
          %v854 = vpop.f32.mrf.mxu0
          %v855 = vadd.f32 %v664, %v854
          %v856 = vpop.f32.mrf.mxu0
          %857 = vmatprep.mubr.f32.mxu0 0.0
          %858 = vmatmul.mubr.f32.gmra.mxu0 %v712
          %v859 = vpop.f32.mrf.mxu0
          %v860 = vadd.f32 %v664, %v859
          %v861 = vpop.f32.mrf.mxu0
          %862 = vdwg.mxu0
          %v863 = vtanh.pop %v785
          %v864 = vtanh.pop %v790
          %v865 = vtanh.pop %v795
          %v866 = vtanh.pop %v800
          %v867 = vtanh.pop %v805
          %v868 = vtanh.pop %v810
          %v869 = vtanh.pop %v815
          %v870 = vtanh.pop %v820
          %v871 = vtanh.pop %v825
          %v872 = vtanh.pop %v830
          %v873 = vtanh.pop %v835
          %v874 = vtanh.pop %v840
          %v875 = vtanh.pop %v845
          %v876 = vtanh.pop %v850
          %v877 = vtanh.pop %v855
          %v878 = vtanh.pop %v860
          %vm879 = vcmask 64512
          %880 = vst.msk [vmem:[%s340] sm:$0xff] %vm879, %v863
          %881 = vst.msk [vmem:[%s340 + $0x8] sm:$0xff] %vm879, %v864
          %882 = vst.msk [vmem:[%s340 + $0x10] sm:$0xff] %vm879, %v865
          %883 = vst.msk [vmem:[%s340 + $0x18] sm:$0xff] %vm879, %v866
          %884 = vst.msk [vmem:[%s340 + $0x20] sm:$0xff] %vm879, %v867
          %885 = vst.msk [vmem:[%s340 + $0x28] sm:$0xff] %vm879, %v868
          %886 = vst.msk [vmem:[%s340 + $0x30] sm:$0xff] %vm879, %v869
          %887 = vst.msk [vmem:[%s340 + $0x38] sm:$0xff] %vm879, %v870
          %888 = vst.msk [vmem:[%s340 + $0x40] sm:$0xff] %vm879, %v871
          %889 = vst.msk [vmem:[%s340 + $0x48] sm:$0xff] %vm879, %v872
          %890 = vst.msk [vmem:[%s340 + $0x50] sm:$0xff] %vm879, %v873
          %891 = vst.msk [vmem:[%s340 + $0x58] sm:$0xff] %vm879, %v874
          %892 = vst.msk [vmem:[%s340 + $0x60] sm:$0xff] %vm879, %v875
          %893 = vst.msk [vmem:[%s340 + $0x68] sm:$0xff] %vm879, %v876
          %894 = vst.msk [vmem:[%s340 + $0x70] sm:$0xff] %vm879, %v877
          %895 = vst.msk [vmem:[%s340 + $0x78] sm:$0xff] %vm879, %v878
        $region85: #{dgcnn_partial_forward.6} parent=72 // pred_fallthru
          _
        %s896 = smul.u32 16, %s19
        %p897 = scmp.lt.s32.totalorder %s896, 31
        %s898 = scalar_select %p897, %s896, 31
        %s899 = smul.addr %s898, 8
        %s900 = scalar_lea.vmem %s4, %s899
        // Predicated region
        $region86: #{dgcnn_partial_forward.6} parent=72 // pred_check
          %p901 = pneg %p141
        $region87: #{dgcnn_partial_forward.6} parent=72 // pred_check_branch
          %903 = sbr.rel (%p901) target = $region89
        $region88: #{dgcnn_partial_forward.6} parent=72 // pred_region
          %s904 = smul.u32 16, %s19
        $region89: #{dgcnn_partial_forward.6} parent=72 // pred_fallthru
          _
      $region73: #{dgcnn_partial_forward.6} parent=5 // pred_fallthru
        _
      %p905 = scmp.le.s32.totalorder 2, %s10
      // Predicated region
      $region90: #{dgcnn_partial_forward.6} parent=5 // pred_check
        %p906 = pneg %p905
      $region91: #{dgcnn_partial_forward.6} parent=5 // pred_check_branch
        %908 = sbr.rel (%p906) target = $region93
      $region92: #{dgcnn_partial_forward.6} parent=5 // pred_region
        %s909 = ssub.s32 %s10, 2
        // Predicated region
        $region94: #{dgcnn_partial_forward.6} parent=92 // pred_check
          %p910 = pneg %p147
        $region95: #{dgcnn_partial_forward.6} parent=92 // pred_check_branch
          %912 = sbr.rel (%p910) target = $region97
        $region96: #{dgcnn_partial_forward.6} parent=92 // pred_region
          %s913 = smul.u32 16, %s21
          %p914 = scmp.lt.s32.totalorder %s913, 31
          %s915 = scalar_select %p914, %s913, 31
          %s916 = smul.addr %s915, 8
          %s917 = scalar_lea.vmem %s4, %s916
        $region97: #{dgcnn_partial_forward.6} parent=92 // pred_fallthru
          _
      $region93: #{dgcnn_partial_forward.6} parent=5 // pred_fallthru
        _
    $region6: #{dgcnn_partial_forward.6} parent=1 // loop_footer
      %s14 = sadd.s32 1, %s10
    $region7: #{dgcnn_partial_forward.6} parent=1 // loop_footer_branch
      %9 = sbr.rel target = $region3
    $region8: #{dgcnn_partial_forward.6} parent=1 // loop_exit
      _

// kernel: dgcnn_partial_forward.7
$region0: #{dgcnn_partial_forward.7}
  #allocation0 [shape = 'u32[]', space=smem, size = 0x4, offset = 0x4, fixed_abs, tag = 'smem constant byte address 0x4 - core index']
  #allocation1 [shape = 'u32[144,128]{1,0:T(1,128)}', space=vmem, size = 0x12000, scoped, tag = 'internal scratch']
  #allocation2 [shape = 'f32[128,8]{1,0:T(8,128)}', space=vmem, size = 0x10000, scoped, tag = 'scratch operand']
  %s0 = inlined_call_operand.vmem [shape: bf16[256,256], index: 0, kind: input, shape index: {}]
  %s1 = inlined_call_operand.vmem [shape: bf16[256,8], index: 1, kind: input, shape index: {}]
  %s2 = inlined_call_operand.vmem [shape: f32[8,8], index: 2, kind: input, shape index: {}]
  %s3 = inlined_call_operand.vmem [shape: f32[1,8], index: 3, kind: input, shape index: {}]
  %s4 = inlined_call_operand.vmem [shape: f32[256,8], index: 4, kind: output, shape index: {}]
  %s5 = sld [smem:[#allocation0]]
  $region98: #{dgcnn_partial_forward.7} parent=0
    _
  %s7 = ssub.s32 1, %s5
  %s8 = scalar_select 0, %s7, %s5
  $region1: #{dgcnn_partial_forward.7} parent=0
    #allocation3 [shape = 'u8[65536]{0}', space=vmem, size = 0x10000, scoped, tag = 'input window, operand 0']
    loop: start=0, step=1, limit=6
    $region2: #{dgcnn_partial_forward.7} parent=1 // loop_pre_header
      _
    $region3: #{dgcnn_partial_forward.7} parent=1 // loop_header
      %s10 = sphi 0, %s14
      %p11 = scmp.ge.s32.totalorder %s10, 6
      %s17 = sphi 0, %s29
      %s18 = sphi 0, %s25
      %s19 = sphi 0, %s17
      %s20 = sphi 0, %s18
      %s21 = sphi 0, %s19
      %s22 = sphi 0, %s20
      %s34 = sphi 0, %s36
      %s37 = sphi 0, %s34
      %s38 = sphi 0, %s37
      %s54 = sphi 0, %s38
      %s60 = sphi 0, %s62
      %s63 = sphi 0, %s60
      %s64 = sphi 0, %s63
      %s80 = sphi 0, %s64
      %s84 = sphi 0, %s84
      %s86 = sphi 0, %s84
      %s87 = sphi 0, %s86
      %s101 = sphi 0, %s87
      %s105 = sphi 0, %s105
      %s107 = sphi 0, %s105
      %s108 = sphi 0, %s107
      %s122 = sphi 0, %s108
      %s128 = sphi 0, %s130
      %s131 = sphi 0, %s128
      %s132 = sphi 0, %s131
      %s148 = sphi 0, %s132
    $region4: #{dgcnn_partial_forward.7} parent=1 // loop_header_branch
      %13 = sbr.rel (%p11) target = $region8
    $region5: #{dgcnn_partial_forward.7} parent=1 // loop_body
      %s15 = ssub.s32 %s10, 1
      %s16 = ssub.s32 %s10, 2
      %s23 = sadd.s32 1, %s18
      %p24 = scmp.ge.s32.totalorder %s23, 2
      %s25 = scalar_select %p24, 0, %s23
      %s26 = sadd.s32 1, %s17
      %s27 = scalar_select %p24, %s26, %s17
      %p28 = scmp.ge.s32.totalorder %s27, 2
      %s29 = scalar_select %p28, 0, %s27
      %s30 = ssub.s32 %s17, %s29
      %s31 = ssub.s32 %s18, %s25
      %s32 = sor.u32 %s30, %s31
      %p33 = scmp.eq.s32.totalorder %s32, 0
      %s35 = sadd.s32 %s34, 1
      %s36 = scalar_select %p33, %s34, %s35
      %p39 = pneg %p33
      %p40 = scmp.eq.s32.totalorder %s10, 3
      %p41 = por %p39, %p40
      %p42 = scmp.ne.s32.totalorder %s34, %s37
      %p43 = scmp.eq.s32.totalorder %s10, 0
      %p44 = por %p42, %p43
      %p45 = scmp.ne.s32.totalorder %s34, %s37
      %p46 = scmp.eq.s32.totalorder %s15, 3
      %p47 = por %p45, %p46
      %p48 = scmp.ne.s32.totalorder %s37, %s38
      %p49 = scmp.eq.s32.totalorder %s15, 0
      %p50 = por %p48, %p49
      %p51 = scmp.ne.s32.totalorder %s37, %s38
      %p52 = scmp.eq.s32.totalorder %s16, 3
      %p53 = por %p51, %p52
      %p55 = scmp.ne.s32.totalorder %s38, %s54
      %p56 = scmp.eq.s32.totalorder %s16, 0
      %p57 = por %p55, %p56
      %s58 = ssub.s32 %s18, %s25
      %p59 = scmp.eq.s32.totalorder %s58, 0
      %s61 = sadd.s32 %s60, 1
      %s62 = scalar_select %p59, %s60, %s61
      %p65 = pneg %p59
      %p66 = scmp.eq.s32.totalorder %s10, 3
      %p67 = por %p65, %p66
      %p68 = scmp.ne.s32.totalorder %s60, %s63
      %p69 = scmp.eq.s32.totalorder %s10, 0
      %p70 = por %p68, %p69
      %p71 = scmp.ne.s32.totalorder %s60, %s63
      %p72 = scmp.eq.s32.totalorder %s15, 3
      %p73 = por %p71, %p72
      %p74 = scmp.ne.s32.totalorder %s63, %s64
      %p75 = scmp.eq.s32.totalorder %s15, 0
      %p76 = por %p74, %p75
      %p77 = scmp.ne.s32.totalorder %s63, %s64
      %p78 = scmp.eq.s32.totalorder %s16, 3
      %p79 = por %p77, %p78
      %p81 = scmp.ne.s32.totalorder %s64, %s80
      %p82 = scmp.eq.s32.totalorder %s16, 0
      %p83 = por %p81, %p82
      %s85 = sadd.s32 %s84, 1
      %p88 = scmp.eq.s32.totalorder %s10, 3
      %p89 = scmp.ne.s32.totalorder %s84, %s86
      %p90 = scmp.eq.s32.totalorder %s10, 0
      %p91 = por %p89, %p90
      %p92 = scmp.ne.s32.totalorder %s84, %s86
      %p93 = scmp.eq.s32.totalorder %s15, 3
      %p94 = por %p92, %p93
      %p95 = scmp.ne.s32.totalorder %s86, %s87
      %p96 = scmp.eq.s32.totalorder %s15, 0
      %p97 = por %p95, %p96
      %p98 = scmp.ne.s32.totalorder %s86, %s87
      %p99 = scmp.eq.s32.totalorder %s16, 3
      %p100 = por %p98, %p99
      %p102 = scmp.ne.s32.totalorder %s87, %s101
      %p103 = scmp.eq.s32.totalorder %s16, 0
      %p104 = por %p102, %p103
      %s106 = sadd.s32 %s105, 1
      %p109 = scmp.eq.s32.totalorder %s10, 3
      %p110 = scmp.ne.s32.totalorder %s105, %s107
      %p111 = scmp.eq.s32.totalorder %s10, 0
      %p112 = por %p110, %p111
      %p113 = scmp.ne.s32.totalorder %s105, %s107
      %p114 = scmp.eq.s32.totalorder %s15, 3
      %p115 = por %p113, %p114
      %p116 = scmp.ne.s32.totalorder %s107, %s108
      %p117 = scmp.eq.s32.totalorder %s15, 0
      %p118 = por %p116, %p117
      %p119 = scmp.ne.s32.totalorder %s107, %s108
      %p120 = scmp.eq.s32.totalorder %s16, 3
      %p121 = por %p119, %p120
      %p123 = scmp.ne.s32.totalorder %s108, %s122
      %p124 = scmp.eq.s32.totalorder %s16, 0
      %p125 = por %p123, %p124
      %s126 = ssub.s32 %s17, %s29
      %p127 = scmp.eq.s32.totalorder %s126, 0
      %s129 = sadd.s32 %s128, 1
      %s130 = scalar_select %p127, %s128, %s129
      %p133 = pneg %p127
      %p134 = scmp.eq.s32.totalorder %s10, 3
      %p135 = por %p133, %p134
      %p136 = scmp.ne.s32.totalorder %s128, %s131
      %p137 = scmp.eq.s32.totalorder %s10, 0
      %p138 = por %p136, %p137
      %p139 = scmp.ne.s32.totalorder %s128, %s131
      %p140 = scmp.eq.s32.totalorder %s15, 3
      %p141 = por %p139, %p140
      %p142 = scmp.ne.s32.totalorder %s131, %s132
      %p143 = scmp.eq.s32.totalorder %s15, 0
      %p144 = por %p142, %p143
      %p145 = scmp.ne.s32.totalorder %s131, %s132
      %p146 = scmp.eq.s32.totalorder %s16, 3
      %p147 = por %p145, %p146
      %p149 = scmp.ne.s32.totalorder %s132, %s148
      %p150 = scmp.eq.s32.totalorder %s16, 0
      %p151 = por %p149, %p150
      %p152 = scmp.le.s32.totalorder 1, %s10
      %p153 = scmp.lt.s32.totalorder %s10, 5
      %p154 = pnand %p152, %p153
      %p155 = pneg %p154
      // Predicated region
      $region9: #{dgcnn_partial_forward.7} parent=5 // pred_check
        _
      $region10: #{dgcnn_partial_forward.7} parent=5 // pred_check_branch
        %157 = sbr.rel (%p154) target = $region12
      $region11: #{dgcnn_partial_forward.7} parent=5 // pred_region
        %s158 = ssub.s32 %s10, 1
        // Predicated region
        $region13: #{dgcnn_partial_forward.7} parent=11 // pred_check
          %p159 = pneg %p97
        $region14: #{dgcnn_partial_forward.7} parent=11 // pred_check_branch
          %161 = sbr.rel (%p159) target = $region16
        $region15: #{dgcnn_partial_forward.7} parent=11 // pred_region
          _
        $region16: #{dgcnn_partial_forward.7} parent=11 // pred_fallthru
          _
        // Predicated region
        $region17: #{dgcnn_partial_forward.7} parent=11 // pred_check
          %p162 = pneg %p118
        $region18: #{dgcnn_partial_forward.7} parent=11 // pred_check_branch
          %164 = sbr.rel (%p162) target = $region20
        $region19: #{dgcnn_partial_forward.7} parent=11 // pred_region
          _
        $region20: #{dgcnn_partial_forward.7} parent=11 // pred_fallthru
          _
      $region12: #{dgcnn_partial_forward.7} parent=5 // pred_fallthru
        _
      %p165 = scmp.lt.s32.totalorder %s10, 4
      // Predicated region
      $region21: #{dgcnn_partial_forward.7} parent=5 // pred_check
        %p166 = pneg %p165
      $region22: #{dgcnn_partial_forward.7} parent=5 // pred_check_branch
        %168 = sbr.rel (%p166) target = $region24
      $region23: #{dgcnn_partial_forward.7} parent=5 // pred_region
        // Predicated region
        $region25: #{dgcnn_partial_forward.7} parent=23 // pred_check
          %p169 = pneg %p44
        $region26: #{dgcnn_partial_forward.7} parent=23 // pred_check_branch
          %171 = sbr.rel (%p169) target = $region28
        $region27: #{dgcnn_partial_forward.7} parent=23 // pred_region
          %s172 = sand.u32 %s34, 1
          %s173 = sand.u32 %s34, 1
          %s174 = smul.addr %s173, 64
          %s175 = scalar_lea.vmem [#allocation3], %s174
          %s176 = smul.u32 16, %s17
          %s177 = smul.addr %s176, 2
          %s178 = sadd.s32 %s18, %s177
          %s179 = smul.addr %s178, 4
          %s180 = scalar_lea.vmem %s0, %s179
          // Predicated region
          $region29: #{dgcnn_partial_forward.7} parent=27 // pred_check
            _
          $region30: #{dgcnn_partial_forward.7} parent=27 // pred_check_branch
            %182 = sbr.rel (0) target = $region32
          $region31: #{dgcnn_partial_forward.7} parent=27 // pred_region
            // Predicated region
            $region33: #{dgcnn_partial_forward.7} parent=31 // pred_check
              _
            $region34: #{dgcnn_partial_forward.7} parent=31 // pred_check_branch
              %184 = sbr.rel target = $region36
            $region35: #{dgcnn_partial_forward.7} parent=31 // pred_region
              // Predicated region
              $region48: #{dgcnn_partial_forward.7} parent=35 // pred_check
                _
              $region49: #{dgcnn_partial_forward.7} parent=35 // pred_check_branch
                %230 = sbr.rel (0) target = $region51
              $region50: #{dgcnn_partial_forward.7} parent=35 // pred_region
                loop: start=0, step=1, limit=1
                $region52: #{dgcnn_partial_forward.7} parent=50 // loop_pre_header
                  _
                $region53: #{dgcnn_partial_forward.7} parent=50 // loop_header
                  %s232 = sphi 0, %s236
                  %p233 = scmp.ge.s32.totalorder %s232, 1
                  %s237 = sphi %s180, %s180
                  %s238 = sphi %s175, %s175
                $region54: #{dgcnn_partial_forward.7} parent=50 // loop_header_branch
                  %235 = sbr.rel (%p233) target = $region58
                $region55: #{dgcnn_partial_forward.7} parent=50 // loop_body
                  _
                $region56: #{dgcnn_partial_forward.7} parent=50 // loop_footer
                  %s236 = sadd.s32 1, %s232
                $region57: #{dgcnn_partial_forward.7} parent=50 // loop_footer_branch
                  %231 = sbr.rel target = $region53
                $region58: #{dgcnn_partial_forward.7} parent=50 // loop_exit
                  _
                %s240 = ssub.s32 16, 1
                loop: start=0, step=1, limit=1
                $region59: #{dgcnn_partial_forward.7} parent=50 // loop_pre_header
                  _
                $region60: #{dgcnn_partial_forward.7} parent=50 // loop_header
                  %s242 = sphi 0, %s246
                  %p243 = scmp.ge.s32.totalorder %s242, 1
                  %s247 = sphi %s180, %s180
                  %s248 = sphi %s175, %s175
                $region61: #{dgcnn_partial_forward.7} parent=50 // loop_header_branch
                  %245 = sbr.rel (%p243) target = $region65
                $region62: #{dgcnn_partial_forward.7} parent=50 // loop_body
                  %v249 = vld [vmem:[%s247] sm:%s240]
                  %250 = vst [vmem:[%s248] sm:%s240] %v249
                  %v251 = vld [vmem:[%s247 + $0x8] sm:%s240]
                  %252 = vst [vmem:[%s248 + $0x4] sm:%s240] %v251
                  %v253 = vld [vmem:[%s247 + $0x10] sm:%s240]
                  %254 = vst [vmem:[%s248 + $0x8] sm:%s240] %v253
                  %v255 = vld [vmem:[%s247 + $0x18] sm:%s240]
                  %256 = vst [vmem:[%s248 + $0xc] sm:%s240] %v255
                  %v257 = vld [vmem:[%s247 + $0x20] sm:%s240]
                  %258 = vst [vmem:[%s248 + $0x10] sm:%s240] %v257
                  %v259 = vld [vmem:[%s247 + $0x28] sm:%s240]
                  %260 = vst [vmem:[%s248 + $0x14] sm:%s240] %v259
                  %v261 = vld [vmem:[%s247 + $0x30] sm:%s240]
                  %262 = vst [vmem:[%s248 + $0x18] sm:%s240] %v261
                  %v263 = vld [vmem:[%s247 + $0x38] sm:%s240]
                  %264 = vst [vmem:[%s248 + $0x1c] sm:%s240] %v263
                  %v265 = vld [vmem:[%s247 + $0x40] sm:%s240]
                  %266 = vst [vmem:[%s248 + $0x20] sm:%s240] %v265
                  %v267 = vld [vmem:[%s247 + $0x48] sm:%s240]
                  %268 = vst [vmem:[%s248 + $0x24] sm:%s240] %v267
                  %v269 = vld [vmem:[%s247 + $0x50] sm:%s240]
                  %270 = vst [vmem:[%s248 + $0x28] sm:%s240] %v269
                  %v271 = vld [vmem:[%s247 + $0x58] sm:%s240]
                  %272 = vst [vmem:[%s248 + $0x2c] sm:%s240] %v271
                  %v273 = vld [vmem:[%s247 + $0x60] sm:%s240]
                  %274 = vst [vmem:[%s248 + $0x30] sm:%s240] %v273
                  %v275 = vld [vmem:[%s247 + $0x68] sm:%s240]
                  %276 = vst [vmem:[%s248 + $0x34] sm:%s240] %v275
                  %v277 = vld [vmem:[%s247 + $0x70] sm:%s240]
                  %278 = vst [vmem:[%s248 + $0x38] sm:%s240] %v277
                  %v279 = vld [vmem:[%s247 + $0x78] sm:%s240]
                  %280 = vst [vmem:[%s248 + $0x3c] sm:%s240] %v279
                $region63: #{dgcnn_partial_forward.7} parent=50 // loop_footer
                  %s246 = sadd.s32 1, %s242
                $region64: #{dgcnn_partial_forward.7} parent=50 // loop_footer_branch
                  %241 = sbr.rel target = $region60
                $region65: #{dgcnn_partial_forward.7} parent=50 // loop_exit
                  _
              $region51: #{dgcnn_partial_forward.7} parent=35 // pred_fallthru
                _
            $region36: #{dgcnn_partial_forward.7} parent=31 // pred_fallthru
              _
            // Predicated region
            $region37: #{dgcnn_partial_forward.7} parent=31 // pred_check
              _
            $region38: #{dgcnn_partial_forward.7} parent=31 // pred_check_branch
              %186 = sbr.rel (0) target = $region40
            $region39: #{dgcnn_partial_forward.7} parent=31 // pred_region
              %s188 = ssub.s32 16, 1
              loop: start=0, step=1, limit=1
              $region41: #{dgcnn_partial_forward.7} parent=39 // loop_pre_header
                _
              $region42: #{dgcnn_partial_forward.7} parent=39 // loop_header
                %s190 = sphi 0, %s194
                %p191 = scmp.ge.s32.totalorder %s190, 1
                %s195 = sphi %s180, %s180
                %s196 = sphi %s175, %s175
              $region43: #{dgcnn_partial_forward.7} parent=39 // loop_header_branch
                %193 = sbr.rel (%p191) target = $region47
              $region44: #{dgcnn_partial_forward.7} parent=39 // loop_body
                %v197 = vld [vmem:[%s195] sm:%s188]
                %198 = vst [vmem:[%s196] sm:%s188] %v197
                %v199 = vld [vmem:[%s195 + $0x8] sm:%s188]
                %200 = vst [vmem:[%s196 + $0x4] sm:%s188] %v199
                %v201 = vld [vmem:[%s195 + $0x10] sm:%s188]
                %202 = vst [vmem:[%s196 + $0x8] sm:%s188] %v201
                %v203 = vld [vmem:[%s195 + $0x18] sm:%s188]
                %204 = vst [vmem:[%s196 + $0xc] sm:%s188] %v203
                %v205 = vld [vmem:[%s195 + $0x20] sm:%s188]
                %206 = vst [vmem:[%s196 + $0x10] sm:%s188] %v205
                %v207 = vld [vmem:[%s195 + $0x28] sm:%s188]
                %208 = vst [vmem:[%s196 + $0x14] sm:%s188] %v207
                %v209 = vld [vmem:[%s195 + $0x30] sm:%s188]
                %210 = vst [vmem:[%s196 + $0x18] sm:%s188] %v209
                %v211 = vld [vmem:[%s195 + $0x38] sm:%s188]
                %212 = vst [vmem:[%s196 + $0x1c] sm:%s188] %v211
                %v213 = vld [vmem:[%s195 + $0x40] sm:%s188]
                %214 = vst [vmem:[%s196 + $0x20] sm:%s188] %v213
                %v215 = vld [vmem:[%s195 + $0x48] sm:%s188]
                %216 = vst [vmem:[%s196 + $0x24] sm:%s188] %v215
                %v217 = vld [vmem:[%s195 + $0x50] sm:%s188]
                %218 = vst [vmem:[%s196 + $0x28] sm:%s188] %v217
                %v219 = vld [vmem:[%s195 + $0x58] sm:%s188]
                %220 = vst [vmem:[%s196 + $0x2c] sm:%s188] %v219
                %v221 = vld [vmem:[%s195 + $0x60] sm:%s188]
                %222 = vst [vmem:[%s196 + $0x30] sm:%s188] %v221
                %v223 = vld [vmem:[%s195 + $0x68] sm:%s188]
                %224 = vst [vmem:[%s196 + $0x34] sm:%s188] %v223
                %v225 = vld [vmem:[%s195 + $0x70] sm:%s188]
                %226 = vst [vmem:[%s196 + $0x38] sm:%s188] %v225
                %v227 = vld [vmem:[%s195 + $0x78] sm:%s188]
                %228 = vst [vmem:[%s196 + $0x3c] sm:%s188] %v227
              $region45: #{dgcnn_partial_forward.7} parent=39 // loop_footer
                %s194 = sadd.s32 1, %s190
              $region46: #{dgcnn_partial_forward.7} parent=39 // loop_footer_branch
                %189 = sbr.rel target = $region42
              $region47: #{dgcnn_partial_forward.7} parent=39 // loop_exit
                _
            $region40: #{dgcnn_partial_forward.7} parent=31 // pred_fallthru
              _
          $region32: #{dgcnn_partial_forward.7} parent=27 // pred_fallthru
            _
          %281 = vnop
        $region28: #{dgcnn_partial_forward.7} parent=23 // pred_fallthru
          _
        // Predicated region
        $region66: #{dgcnn_partial_forward.7} parent=23 // pred_check
          %p282 = pneg %p70
        $region67: #{dgcnn_partial_forward.7} parent=23 // pred_check_branch
          %284 = sbr.rel (%p282) target = $region69
        $region68: #{dgcnn_partial_forward.7} parent=23 // pred_region
          %s285 = smul.u32 16, %s18
          %p286 = scmp.lt.s32.totalorder %s285, 31
          %s287 = scalar_select %p286, %s285, 31
          %s288 = smul.addr %s287, 4
          %s289 = scalar_lea.vmem %s1, %s288
          %s290 = smul.u32 16, %s18
        $region69: #{dgcnn_partial_forward.7} parent=23 // pred_fallthru
          _
      $region24: #{dgcnn_partial_forward.7} parent=5 // pred_fallthru
        _
      %p291 = scmp.le.s32.totalorder 1, %s10
      %p292 = scmp.lt.s32.totalorder %s10, 5
      %p293 = pnand %p291, %p292
      %p294 = pneg %p293
      // Predicated region
      $region70: #{dgcnn_partial_forward.7} parent=5 // pred_check
        _
      $region71: #{dgcnn_partial_forward.7} parent=5 // pred_check_branch
        %296 = sbr.rel (%p293) target = $region73
      $region72: #{dgcnn_partial_forward.7} parent=5 // pred_region
        %s297 = ssub.s32 %s10, 1
        %s298 = sand.u32 %s37, 1
        %s299 = sand.u32 %s37, 1
        %s300 = smul.addr %s299, 64
        %s301 = scalar_lea.vmem [#allocation3], %s300
        // Predicated region
        $region74: #{dgcnn_partial_forward.7} parent=72 // pred_check
          %p302 = pneg %p50
        $region75: #{dgcnn_partial_forward.7} parent=72 // pred_check_branch
          %304 = sbr.rel (%p302) target = $region77
        $region76: #{dgcnn_partial_forward.7} parent=72 // pred_region
          _
        $region77: #{dgcnn_partial_forward.7} parent=72 // pred_fallthru
          _
        %s305 = sand.u32 %s37, 1
        %s306 = sand.u32 %s37, 1
        %s307 = smul.addr %s306, 64
        %s308 = scalar_lea.vmem [#allocation3], %s307
        %p309 = pneg %p50
        %p310 = pneg %p47
        %s311 = smul.u32 16, %s20
        %p312 = scmp.lt.s32.totalorder %s311, 31
        %s313 = scalar_select %p312, %s311, 31
        %s314 = smul.addr %s313, 4
        %s315 = scalar_lea.vmem %s1, %s314
        %p316 = pneg %p76
        %p317 = pneg %p73
        %p318 = pneg %p97
        %p319 = pneg %p94
        %p320 = pneg %p118
        %p321 = pneg %p115
        %p322 = pneg %p144
        %p323 = pneg %p141
        %s324 = smul.u32 16, %s19
        %p325 = scmp.lt.s32.totalorder %s324, 31
        %s326 = scalar_select %p325, %s324, 31
        %s327 = smul.addr %s326, 8
        %s328 = scalar_lea.vmem %s4, %s327
        %s329 = smul.u32 16, %s19
        %s330 = smul.u32 16, %s20
        %p331 = scmp.lt.s32.totalorder %s330, 31
        %s332 = scalar_select %p331, %s330, 31
        %s333 = smul.addr %s332, 4
        %s334 = scalar_lea.vmem %s1, %s333
        %s335 = smul.u32 16, %s20
        %s336 = smul.u32 16, %s19
        %p337 = scmp.lt.s32.totalorder %s336, 31
        %s338 = scalar_select %p337, %s336, 31
        %s339 = smul.addr %s338, 8
        %s340 = scalar_lea.vmem %s4, %s339
        %s341 = smul.u32 16, %s19
        %p343 = scmp.eq.s32.totalorder %s20, 0
        // Predicated region
        $region78: #{dgcnn_partial_forward.7} parent=72 // pred_check
          %p344 = pneg %p343
        $region79: #{dgcnn_partial_forward.7} parent=72 // pred_check_branch
          %346 = sbr.rel (%p344) target = $region81
        $region80: #{dgcnn_partial_forward.7} parent=72 // pred_region
          %vm347 = vcmask 64512
          %348 = vst.msk [vmem:[#allocation2] sm:$0xff] %vm347, 0.0
          %349 = vst.msk [vmem:[#allocation2 + $0x8] sm:$0xff] %vm347, 0.0
          %350 = vst.msk [vmem:[#allocation2 + $0x10] sm:$0xff] %vm347, 0.0
          %351 = vst.msk [vmem:[#allocation2 + $0x18] sm:$0xff] %vm347, 0.0
          %352 = vst.msk [vmem:[#allocation2 + $0x20] sm:$0xff] %vm347, 0.0
          %353 = vst.msk [vmem:[#allocation2 + $0x28] sm:$0xff] %vm347, 0.0
          %354 = vst.msk [vmem:[#allocation2 + $0x30] sm:$0xff] %vm347, 0.0
          %355 = vst.msk [vmem:[#allocation2 + $0x38] sm:$0xff] %vm347, 0.0
          %356 = vst.msk [vmem:[#allocation2 + $0x40] sm:$0xff] %vm347, 0.0
          %357 = vst.msk [vmem:[#allocation2 + $0x48] sm:$0xff] %vm347, 0.0
          %358 = vst.msk [vmem:[#allocation2 + $0x50] sm:$0xff] %vm347, 0.0
          %359 = vst.msk [vmem:[#allocation2 + $0x58] sm:$0xff] %vm347, 0.0
          %360 = vst.msk [vmem:[#allocation2 + $0x60] sm:$0xff] %vm347, 0.0
          %361 = vst.msk [vmem:[#allocation2 + $0x68] sm:$0xff] %vm347, 0.0
          %362 = vst.msk [vmem:[#allocation2 + $0x70] sm:$0xff] %vm347, 0.0
          %363 = vst.msk [vmem:[#allocation2 + $0x78] sm:$0xff] %vm347, 0.0
        $region81: #{dgcnn_partial_forward.7} parent=72 // pred_fallthru
          _
        %v364 = vld [vmem:[#allocation2] sm:$0xff]
        %v365 = vld [vmem:[#allocation2 + $0x8] sm:$0xff]
        %v366 = vld [vmem:[#allocation2 + $0x10] sm:$0xff]
        %v367 = vld [vmem:[#allocation2 + $0x18] sm:$0xff]
        %v368 = vld [vmem:[#allocation2 + $0x20] sm:$0xff]
        %v369 = vld [vmem:[#allocation2 + $0x28] sm:$0xff]
        %v370 = vld [vmem:[#allocation2 + $0x30] sm:$0xff]
        %v371 = vld [vmem:[#allocation2 + $0x38] sm:$0xff]
        %v372 = vld [vmem:[#allocation2 + $0x40] sm:$0xff]
        %v373 = vld [vmem:[#allocation2 + $0x48] sm:$0xff]
        %v374 = vld [vmem:[#allocation2 + $0x50] sm:$0xff]
        %v375 = vld [vmem:[#allocation2 + $0x58] sm:$0xff]
        %v376 = vld [vmem:[#allocation2 + $0x60] sm:$0xff]
        %v377 = vld [vmem:[#allocation2 + $0x68] sm:$0xff]
        %v378 = vld [vmem:[#allocation2 + $0x70] sm:$0xff]
        %v379 = vld [vmem:[#allocation2 + $0x78] sm:$0xff]
        %v380 = vld [vmem:[%s301] sm:$0xf]
        %v381 = vld [vmem:[%s301 + $0x4] sm:$0xf]
        %v382 = vld [vmem:[%s301 + $0x8] sm:$0xf]
        %v383 = vld [vmem:[%s301 + $0xc] sm:$0xf]
        %v384 = vld [vmem:[%s301 + $0x10] sm:$0xf]
        %v385 = vld [vmem:[%s301 + $0x14] sm:$0xf]
        %v386 = vld [vmem:[%s301 + $0x18] sm:$0xf]
        %v387 = vld [vmem:[%s301 + $0x1c] sm:$0xf]
        %v388 = vld [vmem:[%s301 + $0x20] sm:$0xf]
        %v389 = vld [vmem:[%s301 + $0x24] sm:$0xf]
        %v390 = vld [vmem:[%s301 + $0x28] sm:$0xf]
        %v391 = vld [vmem:[%s301 + $0x2c] sm:$0xf]
        %v392 = vld [vmem:[%s301 + $0x30] sm:$0xf]
        %v393 = vld [vmem:[%s301 + $0x34] sm:$0xf]
        %v394 = vld [vmem:[%s301 + $0x38] sm:$0xf]
        %v395 = vld [vmem:[%s301 + $0x3c] sm:$0xf]
        %v396 = vld [vmem:[%s334] sm:$0xf]
        %v397 = vld [vmem:[%s334 + $0x4] sm:$0xf]
        %v398 = vld [vmem:[%s334 + $0x8] sm:$0xf]
        %v399 = vld [vmem:[%s334 + $0xc] sm:$0xf]
        %v400 = vld [vmem:[%s334 + $0x10] sm:$0xf]
        %v401 = vld [vmem:[%s334 + $0x14] sm:$0xf]
        %v402 = vld [vmem:[%s334 + $0x18] sm:$0xf]
        %v403 = vld [vmem:[%s334 + $0x1c] sm:$0xf]
        %v404 = vld [vmem:[%s334 + $0x20] sm:$0xf]
        %v405 = vld [vmem:[%s334 + $0x24] sm:$0xf]
        %v406 = vld [vmem:[%s334 + $0x28] sm:$0xf]
        %v407 = vld [vmem:[%s334 + $0x2c] sm:$0xf]
        %v408 = vld [vmem:[%s334 + $0x30] sm:$0xf]
        %v409 = vld [vmem:[%s334 + $0x34] sm:$0xf]
        %v410 = vld [vmem:[%s334 + $0x38] sm:$0xf]
        %v411 = vld [vmem:[%s334 + $0x3c] sm:$0xf]
        %v428 = vunpack.c.l.b16 %v380
        %v429 = vunpack.c.l.b16 %v381
        %v430 = vunpack.c.l.b16 %v382
        %v431 = vunpack.c.l.b16 %v383
        %v432 = vunpack.c.l.b16 %v384
        %v433 = vunpack.c.l.b16 %v385
        %v434 = vunpack.c.l.b16 %v386
        %v435 = vunpack.c.l.b16 %v387
        %v436 = vunpack.c.l.b16 %v388
        %v437 = vunpack.c.l.b16 %v389
        %v438 = vunpack.c.l.b16 %v390
        %v439 = vunpack.c.l.b16 %v391
        %v440 = vunpack.c.l.b16 %v392
        %v441 = vunpack.c.l.b16 %v393
        %v442 = vunpack.c.l.b16 %v394
        %v443 = vunpack.c.l.b16 %v395
        %v444 = vpack.c.b16 %v429, %v428
        %v445 = vpack.c.b16 %v431, %v430
        %v446 = vpack.c.b16 %v433, %v432
        %v447 = vpack.c.b16 %v435, %v434
        %v448 = vpack.c.b16 %v437, %v436
        %v449 = vpack.c.b16 %v439, %v438
        %v450 = vpack.c.b16 %v441, %v440
        %v451 = vpack.c.b16 %v443, %v442
        %v476 = vunpack.c.l.b16 %v396
        %v477 = vunpack.c.l.b16 %v397
        %v478 = vunpack.c.l.b16 %v398
        %v479 = vunpack.c.l.b16 %v399
        %v480 = vunpack.c.l.b16 %v400
        %v481 = vunpack.c.l.b16 %v401
        %v482 = vunpack.c.l.b16 %v402
        %v483 = vunpack.c.l.b16 %v403
        %v484 = vunpack.c.l.b16 %v404
        %v485 = vunpack.c.l.b16 %v405
        %v486 = vunpack.c.l.b16 %v406
        %v487 = vunpack.c.l.b16 %v407
        %v488 = vunpack.c.l.b16 %v408
        %v489 = vunpack.c.l.b16 %v409
        %v490 = vunpack.c.l.b16 %v410
        %v491 = vunpack.c.l.b16 %v411
        %v492 = vpack.c.b16 %v477, %v476
        %v493 = vpack.c.b16 %v479, %v478
        %v494 = vpack.c.b16 %v481, %v480
        %v495 = vpack.c.b16 %v483, %v482
        %v496 = vpack.c.b16 %v485, %v484
        %v497 = vpack.c.b16 %v487, %v486
        %v498 = vpack.c.b16 %v489, %v488
        %v499 = vpack.c.b16 %v491, %v490
        %508 = vmatprep.subr.bf16.mxu0 0
        %509 = vmatpush1.bf16.msra.mxu0 %v499
        %510 = vmatprep.subr.bf16.mxu0 0
        %511 = vmatpush1.bf16.msra.mxu0 %v498
        %512 = vmatprep.subr.bf16.mxu0 0
        %513 = vmatpush1.bf16.msra.mxu0 %v497
        %514 = vmatprep.subr.bf16.mxu0 0
        %515 = vmatpush1.bf16.msra.mxu0 %v496
        %516 = vmatprep.subr.bf16.mxu0 0
        %517 = vmatpush1.bf16.msra.mxu0 %v495
        %518 = vmatprep.subr.bf16.mxu0 0
        %519 = vmatpush1.bf16.msra.mxu0 %v494
        %520 = vmatprep.subr.bf16.mxu0 0
        %521 = vmatpush1.bf16.msra.mxu0 %v493
        %522 = vmatprep.subr.bf16.mxu0 0
        %523 = vmatpush1.bf16.msra.mxu0 %v492
        %524 = vmatprep.subr.bf16.mxu0 0
        %525 = vmatpush2.bf16.msra.mxu0 0
        %526 = vmatprep.subr.bf16.mxu0 0
        %527 = vmatpush2.bf16.msra.mxu0 0
        %528 = vmatprep.subr.bf16.mxu0 0
        %529 = vmatpush2.bf16.msra.mxu0 0
        %530 = vmatprep.subr.bf16.mxu0 0
        %531 = vmatpush2.bf16.msra.mxu0 0
        %532 = vmatprep.subr.bf16.mxu0 0
        %533 = vmatpush2.bf16.msra.mxu0 0
        %534 = vmatprep.subr.bf16.mxu0 0
        %535 = vmatpush2.bf16.msra.mxu0 0
        %536 = vmatprep.subr.bf16.mxu0 0
        %537 = vmatpush2.bf16.msra.mxu0 0
        %538 = vmatprep.subr.bf16.mxu0 0
        %539 = vmatpush2.bf16.msra.mxu0 0
        %540 = vmatprep.mubr.bf16.mxu0 0
        %541 = vmatmul.mubr.bf16.gmra.mxu0 %v444
        %v542 = vpop.f32.mrf.mxu0
        %v543 = vadd.f32 0.0, %v542
        %v544 = vpop.f32.mrf.mxu0
        %v545 = vpop.f32.mrf.mxu0
        %v546 = vadd.f32 0.0, %v545
        %v547 = vpop.f32.mrf.mxu0
        %548 = vmatprep.mubr.bf16.mxu0 0
        %549 = vmatmul.mubr.bf16.gmra.mxu0 %v445
        %v550 = vpop.f32.mrf.mxu0
        %v551 = vadd.f32 0.0, %v550
        %v552 = vpop.f32.mrf.mxu0
        %v553 = vpop.f32.mrf.mxu0
        %v554 = vadd.f32 0.0, %v553
        %v555 = vpop.f32.mrf.mxu0
        %556 = vmatprep.mubr.bf16.mxu0 0
        %557 = vmatmul.mubr.bf16.gmra.mxu0 %v446
        %v558 = vpop.f32.mrf.mxu0
        %v559 = vadd.f32 0.0, %v558
        %v560 = vpop.f32.mrf.mxu0
        %v561 = vpop.f32.mrf.mxu0
        %v562 = vadd.f32 0.0, %v561
        %v563 = vpop.f32.mrf.mxu0
        %564 = vmatprep.mubr.bf16.mxu0 0
        %565 = vmatmul.mubr.bf16.gmra.mxu0 %v447
        %v566 = vpop.f32.mrf.mxu0
        %v567 = vadd.f32 0.0, %v566
        %v568 = vpop.f32.mrf.mxu0
        %v569 = vpop.f32.mrf.mxu0
        %v570 = vadd.f32 0.0, %v569
        %v571 = vpop.f32.mrf.mxu0
        %572 = vmatprep.mubr.bf16.mxu0 0
        %573 = vmatmul.mubr.bf16.gmra.mxu0 %v448
        %v574 = vpop.f32.mrf.mxu0
        %v575 = vadd.f32 0.0, %v574
        %v576 = vpop.f32.mrf.mxu0
        %v577 = vpop.f32.mrf.mxu0
        %v578 = vadd.f32 0.0, %v577
        %v579 = vpop.f32.mrf.mxu0
        %580 = vmatprep.mubr.bf16.mxu0 0
        %581 = vmatmul.mubr.bf16.gmra.mxu0 %v449
        %v582 = vpop.f32.mrf.mxu0
        %v583 = vadd.f32 0.0, %v582
        %v584 = vpop.f32.mrf.mxu0
        %v585 = vpop.f32.mrf.mxu0
        %v586 = vadd.f32 0.0, %v585
        %v587 = vpop.f32.mrf.mxu0
        %588 = vmatprep.mubr.bf16.mxu0 0
        %589 = vmatmul.mubr.bf16.gmra.mxu0 %v450
        %v590 = vpop.f32.mrf.mxu0
        %v591 = vadd.f32 0.0, %v590
        %v592 = vpop.f32.mrf.mxu0
        %v593 = vpop.f32.mrf.mxu0
        %v594 = vadd.f32 0.0, %v593
        %v595 = vpop.f32.mrf.mxu0
        %596 = vmatprep.mubr.bf16.mxu0 0
        %597 = vmatmul.mubr.bf16.gmra.mxu0 %v451
        %v598 = vpop.f32.mrf.mxu0
        %v599 = vadd.f32 0.0, %v598
        %v600 = vpop.f32.mrf.mxu0
        %v601 = vpop.f32.mrf.mxu0
        %v602 = vadd.f32 0.0, %v601
        %v603 = vpop.f32.mrf.mxu0
        %604 = vdwg.mxu0
        %v605 = vadd.f32 %v364, %v543
        %v606 = vadd.f32 %v365, %v546
        %v607 = vadd.f32 %v366, %v551
        %v608 = vadd.f32 %v367, %v554
        %v609 = vadd.f32 %v368, %v559
        %v610 = vadd.f32 %v369, %v562
        %v611 = vadd.f32 %v370, %v567
        %v612 = vadd.f32 %v371, %v570
        %v613 = vadd.f32 %v372, %v575
        %v614 = vadd.f32 %v373, %v578
        %v615 = vadd.f32 %v374, %v583
        %v616 = vadd.f32 %v375, %v586
        %v617 = vadd.f32 %v376, %v591
        %v618 = vadd.f32 %v377, %v594
        %v619 = vadd.f32 %v378, %v599
        %v620 = vadd.f32 %v379, %v602
        %vm621 = vcmask 64512
        %622 = vst.msk [vmem:[#allocation2] sm:$0xff] %vm621, %v605
        %623 = vst.msk [vmem:[#allocation2 + $0x8] sm:$0xff] %vm621, %v606
        %624 = vst.msk [vmem:[#allocation2 + $0x10] sm:$0xff] %vm621, %v607
        %625 = vst.msk [vmem:[#allocation2 + $0x18] sm:$0xff] %vm621, %v608
        %626 = vst.msk [vmem:[#allocation2 + $0x20] sm:$0xff] %vm621, %v609
        %627 = vst.msk [vmem:[#allocation2 + $0x28] sm:$0xff] %vm621, %v610
        %628 = vst.msk [vmem:[#allocation2 + $0x30] sm:$0xff] %vm621, %v611
        %629 = vst.msk [vmem:[#allocation2 + $0x38] sm:$0xff] %vm621, %v612
        %630 = vst.msk [vmem:[#allocation2 + $0x40] sm:$0xff] %vm621, %v613
        %631 = vst.msk [vmem:[#allocation2 + $0x48] sm:$0xff] %vm621, %v614
        %632 = vst.msk [vmem:[#allocation2 + $0x50] sm:$0xff] %vm621, %v615
        %633 = vst.msk [vmem:[#allocation2 + $0x58] sm:$0xff] %vm621, %v616
        %634 = vst.msk [vmem:[#allocation2 + $0x60] sm:$0xff] %vm621, %v617
        %635 = vst.msk [vmem:[#allocation2 + $0x68] sm:$0xff] %vm621, %v618
        %636 = vst.msk [vmem:[#allocation2 + $0x70] sm:$0xff] %vm621, %v619
        %637 = vst.msk [vmem:[#allocation2 + $0x78] sm:$0xff] %vm621, %v620
        %p638 = scmp.eq.s32.totalorder %s20, 1
        // Predicated region
        $region82: #{dgcnn_partial_forward.7} parent=72 // pred_check
          %p639 = pneg %p638
        $region83: #{dgcnn_partial_forward.7} parent=72 // pred_check_branch
          %641 = sbr.rel (%p639) target = $region85
        $region84: #{dgcnn_partial_forward.7} parent=72 // pred_region
          %v642 = vld [vmem:[#allocation2] sm:$0xff]
          %v643 = vld [vmem:[#allocation2 + $0x8] sm:$0xff]
          %v644 = vld [vmem:[#allocation2 + $0x10] sm:$0xff]
          %v645 = vld [vmem:[#allocation2 + $0x18] sm:$0xff]
          %v646 = vld [vmem:[#allocation2 + $0x20] sm:$0xff]
          %v647 = vld [vmem:[#allocation2 + $0x28] sm:$0xff]
          %v648 = vld [vmem:[#allocation2 + $0x30] sm:$0xff]
          %v649 = vld [vmem:[#allocation2 + $0x38] sm:$0xff]
          %v650 = vld [vmem:[#allocation2 + $0x40] sm:$0xff]
          %v651 = vld [vmem:[#allocation2 + $0x48] sm:$0xff]
          %v652 = vld [vmem:[#allocation2 + $0x50] sm:$0xff]
          %v653 = vld [vmem:[#allocation2 + $0x58] sm:$0xff]
          %v654 = vld [vmem:[#allocation2 + $0x60] sm:$0xff]
          %v655 = vld [vmem:[#allocation2 + $0x68] sm:$0xff]
          %v656 = vld [vmem:[#allocation2 + $0x70] sm:$0xff]
          %v657 = vld [vmem:[#allocation2 + $0x78] sm:$0xff]
          %v658 = vld [vmem:[%s2] sm:$0xff]
          %v659 = vld [vmem:[%s3] sm:$0x1]
          %v661 = vlaneseq
          %v662 = vshrl.u32 %v661, 7
          %v663 = vsub.s32 0, %v662
          %v664 = vrot.slane %v659, %v663
          %v667 = vsel %vm621, %v642, 0
          %v670 = vsel %vm621, %v643, 0
          %v673 = vsel %vm621, %v644, 0
          %v676 = vsel %vm621, %v645, 0
          %v679 = vsel %vm621, %v646, 0
          %v682 = vsel %vm621, %v647, 0
          %v685 = vsel %vm621, %v648, 0
          %v688 = vsel %vm621, %v649, 0
          %v691 = vsel %vm621, %v650, 0
          %v694 = vsel %vm621, %v651, 0
          %v697 = vsel %vm621, %v652, 0
          %v700 = vsel %vm621, %v653, 0
          %v703 = vsel %vm621, %v654, 0
          %v706 = vsel %vm621, %v655, 0
          %v709 = vsel %vm621, %v656, 0
          %v712 = vsel %vm621, %v657, 0
          %714 = vmatprep.subr.mxu0 0.0
          %715 = vmatpush1.msra.mxu0 0.0
          %716 = vmatprep.subr.mxu0 0.0
          %717 = vmatpush1.msra.mxu0 0.0
          %718 = vmatprep.subr.mxu0 0.0
          %719 = vmatpush1.msra.mxu0 0.0
          %720 = vmatprep.subr.mxu0 0.0
          %721 = vmatpush1.msra.mxu0 0.0
          %722 = vmatprep.subr.mxu0 0.0
          %723 = vmatpush1.msra.mxu0 0.0
          %724 = vmatprep.subr.mxu0 0.0
          %725 = vmatpush1.msra.mxu0 0.0
          %726 = vmatprep.subr.mxu0 0.0
          %727 = vmatpush1.msra.mxu0 0.0
          %728 = vmatprep.subr.mxu0 0.0
          %729 = vmatpush1.msra.mxu0 0.0
          %730 = vmatprep.subr.mxu0 0.0
          %731 = vmatpush1.msra.mxu0 0.0
          %732 = vmatprep.subr.mxu0 0.0
          %733 = vmatpush1.msra.mxu0 0.0
          %734 = vmatprep.subr.mxu0 0.0
          %735 = vmatpush1.msra.mxu0 0.0
          %736 = vmatprep.subr.mxu0 0.0
          %737 = vmatpush1.msra.mxu0 0.0
          %738 = vmatprep.subr.mxu0 0.0
          %739 = vmatpush1.msra.mxu0 0.0
          %740 = vmatprep.subr.mxu0 0.0
          %741 = vmatpush1.msra.mxu0 0.0
          %742 = vmatprep.subr.mxu0 0.0
          %743 = vmatpush1.msra.mxu0 0.0
          %744 = vmatprep.subr.mxu0 0.0
          %745 = vmatpush1.msra.mxu0 %v658
          %746 = vmatprep.subr.mxu0 0.0
          %747 = vmatpush2.msra.mxu0 0.0
          %748 = vmatprep.subr.mxu0 0.0
          %749 = vmatpush2.msra.mxu0 0.0
          %750 = vmatprep.subr.mxu0 0.0
          %751 = vmatpush2.msra.mxu0 0.0
          %752 = vmatprep.subr.mxu0 0.0
          %753 = vmatpush2.msra.mxu0 0.0
          %754 = vmatprep.subr.mxu0 0.0
          %755 = vmatpush2.msra.mxu0 0.0
          %756 = vmatprep.subr.mxu0 0.0
          %757 = vmatpush2.msra.mxu0 0.0
          %758 = vmatprep.subr.mxu0 0.0
          %759 = vmatpush2.msra.mxu0 0.0
          %760 = vmatprep.subr.mxu0 0.0
          %761 = vmatpush2.msra.mxu0 0.0
          %762 = vmatprep.subr.mxu0 0.0
          %763 = vmatpush2.msra.mxu0 0.0
          %764 = vmatprep.subr.mxu0 0.0
          %765 = vmatpush2.msra.mxu0 0.0
          %766 = vmatprep.subr.mxu0 0.0
          %767 = vmatpush2.msra.mxu0 0.0
          %768 = vmatprep.subr.mxu0 0.0
          %769 = vmatpush2.msra.mxu0 0.0
          %770 = vmatprep.subr.mxu0 0.0
          %771 = vmatpush2.msra.mxu0 0.0
          %772 = vmatprep.subr.mxu0 0.0
          %773 = vmatpush2.msra.mxu0 0.0
          %774 = vmatprep.subr.mxu0 0.0
          %775 = vmatpush2.msra.mxu0 0.0
          %776 = vmatprep.subr.mxu0 0.0
          %777 = vmatpush2.msra.mxu0 0.0
          %778 = vmatprep.mubr.f32.mxu0 0.0
          %779 = vmatmul.mubr.f32.gmra.mxu0 %v667
          %v780 = vpop.f32.mrf.mxu0
          %v781 = vadd.f32 %v664, %v780
          %v782 = vpop.f32.mrf.mxu0
          %783 = vmatprep.mubr.f32.mxu0 0.0
          %784 = vmatmul.mubr.f32.gmra.mxu0 %v670
          %v785 = vpop.f32.mrf.mxu0
          %v786 = vadd.f32 %v664, %v785
          %v787 = vpop.f32.mrf.mxu0
          %788 = vmatprep.mubr.f32.mxu0 0.0
          %789 = vmatmul.mubr.f32.gmra.mxu0 %v673
          %v790 = vpop.f32.mrf.mxu0
          %v791 = vadd.f32 %v664, %v790
          %v792 = vpop.f32.mrf.mxu0
          %793 = vmatprep.mubr.f32.mxu0 0.0
          %794 = vmatmul.mubr.f32.gmra.mxu0 %v676
          %v795 = vpop.f32.mrf.mxu0
          %v796 = vadd.f32 %v664, %v795
          %v797 = vpop.f32.mrf.mxu0
          %798 = vmatprep.mubr.f32.mxu0 0.0
          %799 = vmatmul.mubr.f32.gmra.mxu0 %v679
          %v800 = vpop.f32.mrf.mxu0
          %v801 = vadd.f32 %v664, %v800
          %v802 = vpop.f32.mrf.mxu0
          %803 = vmatprep.mubr.f32.mxu0 0.0
          %804 = vmatmul.mubr.f32.gmra.mxu0 %v682
          %v805 = vpop.f32.mrf.mxu0
          %v806 = vadd.f32 %v664, %v805
          %v807 = vpop.f32.mrf.mxu0
          %808 = vmatprep.mubr.f32.mxu0 0.0
          %809 = vmatmul.mubr.f32.gmra.mxu0 %v685
          %v810 = vpop.f32.mrf.mxu0
          %v811 = vadd.f32 %v664, %v810
          %v812 = vpop.f32.mrf.mxu0
          %813 = vmatprep.mubr.f32.mxu0 0.0
          %814 = vmatmul.mubr.f32.gmra.mxu0 %v688
          %v815 = vpop.f32.mrf.mxu0
          %v816 = vadd.f32 %v664, %v815
          %v817 = vpop.f32.mrf.mxu0
          %818 = vmatprep.mubr.f32.mxu0 0.0
          %819 = vmatmul.mubr.f32.gmra.mxu0 %v691
          %v820 = vpop.f32.mrf.mxu0
          %v821 = vadd.f32 %v664, %v820
          %v822 = vpop.f32.mrf.mxu0
          %823 = vmatprep.mubr.f32.mxu0 0.0
          %824 = vmatmul.mubr.f32.gmra.mxu0 %v694
          %v825 = vpop.f32.mrf.mxu0
          %v826 = vadd.f32 %v664, %v825
          %v827 = vpop.f32.mrf.mxu0
          %828 = vmatprep.mubr.f32.mxu0 0.0
          %829 = vmatmul.mubr.f32.gmra.mxu0 %v697
          %v830 = vpop.f32.mrf.mxu0
          %v831 = vadd.f32 %v664, %v830
          %v832 = vpop.f32.mrf.mxu0
          %833 = vmatprep.mubr.f32.mxu0 0.0
          %834 = vmatmul.mubr.f32.gmra.mxu0 %v700
          %v835 = vpop.f32.mrf.mxu0
          %v836 = vadd.f32 %v664, %v835
          %v837 = vpop.f32.mrf.mxu0
          %838 = vmatprep.mubr.f32.mxu0 0.0
          %839 = vmatmul.mubr.f32.gmra.mxu0 %v703
          %v840 = vpop.f32.mrf.mxu0
          %v841 = vadd.f32 %v664, %v840
          %v842 = vpop.f32.mrf.mxu0
          %843 = vmatprep.mubr.f32.mxu0 0.0
          %844 = vmatmul.mubr.f32.gmra.mxu0 %v706
          %v845 = vpop.f32.mrf.mxu0
          %v846 = vadd.f32 %v664, %v845
          %v847 = vpop.f32.mrf.mxu0
          %848 = vmatprep.mubr.f32.mxu0 0.0
          %849 = vmatmul.mubr.f32.gmra.mxu0 %v709
          %v850 = vpop.f32.mrf.mxu0
          %v851 = vadd.f32 %v664, %v850
          %v852 = vpop.f32.mrf.mxu0
          %853 = vmatprep.mubr.f32.mxu0 0.0
          %854 = vmatmul.mubr.f32.gmra.mxu0 %v712
          %v855 = vpop.f32.mrf.mxu0
          %v856 = vadd.f32 %v664, %v855
          %v857 = vpop.f32.mrf.mxu0
          %858 = vdwg.mxu0
          %v859 = vtanh.pop %v781
          %v860 = vtanh.pop %v786
          %v861 = vtanh.pop %v791
          %v862 = vtanh.pop %v796
          %v863 = vtanh.pop %v801
          %v864 = vtanh.pop %v806
          %v865 = vtanh.pop %v811
          %v866 = vtanh.pop %v816
          %v867 = vtanh.pop %v821
          %v868 = vtanh.pop %v826
          %v869 = vtanh.pop %v831
          %v870 = vtanh.pop %v836
          %v871 = vtanh.pop %v841
          %v872 = vtanh.pop %v846
          %v873 = vtanh.pop %v851
          %v874 = vtanh.pop %v856
          %875 = vst.msk [vmem:[%s340] sm:$0xff] %vm621, %v859
          %876 = vst.msk [vmem:[%s340 + $0x8] sm:$0xff] %vm621, %v860
          %877 = vst.msk [vmem:[%s340 + $0x10] sm:$0xff] %vm621, %v861
          %878 = vst.msk [vmem:[%s340 + $0x18] sm:$0xff] %vm621, %v862
          %879 = vst.msk [vmem:[%s340 + $0x20] sm:$0xff] %vm621, %v863
          %880 = vst.msk [vmem:[%s340 + $0x28] sm:$0xff] %vm621, %v864
          %881 = vst.msk [vmem:[%s340 + $0x30] sm:$0xff] %vm621, %v865
          %882 = vst.msk [vmem:[%s340 + $0x38] sm:$0xff] %vm621, %v866
          %883 = vst.msk [vmem:[%s340 + $0x40] sm:$0xff] %vm621, %v867
          %884 = vst.msk [vmem:[%s340 + $0x48] sm:$0xff] %vm621, %v868
          %885 = vst.msk [vmem:[%s340 + $0x50] sm:$0xff] %vm621, %v869
          %886 = vst.msk [vmem:[%s340 + $0x58] sm:$0xff] %vm621, %v870
          %887 = vst.msk [vmem:[%s340 + $0x60] sm:$0xff] %vm621, %v871
          %888 = vst.msk [vmem:[%s340 + $0x68] sm:$0xff] %vm621, %v872
          %889 = vst.msk [vmem:[%s340 + $0x70] sm:$0xff] %vm621, %v873
          %890 = vst.msk [vmem:[%s340 + $0x78] sm:$0xff] %vm621, %v874
        $region85: #{dgcnn_partial_forward.7} parent=72 // pred_fallthru
          _
        %s891 = smul.u32 16, %s19
        %p892 = scmp.lt.s32.totalorder %s891, 31
        %s893 = scalar_select %p892, %s891, 31
        %s894 = smul.addr %s893, 8
        %s895 = scalar_lea.vmem %s4, %s894
        // Predicated region
        $region86: #{dgcnn_partial_forward.7} parent=72 // pred_check
          %p896 = pneg %p141
        $region87: #{dgcnn_partial_forward.7} parent=72 // pred_check_branch
          %898 = sbr.rel (%p896) target = $region89
        $region88: #{dgcnn_partial_forward.7} parent=72 // pred_region
          %s899 = smul.u32 16, %s19
        $region89: #{dgcnn_partial_forward.7} parent=72 // pred_fallthru
          _
      $region73: #{dgcnn_partial_forward.7} parent=5 // pred_fallthru
        _
      %p900 = scmp.le.s32.totalorder 2, %s10
      // Predicated region
      $region90: #{dgcnn_partial_forward.7} parent=5 // pred_check
        %p901 = pneg %p900
      $region91: #{dgcnn_partial_forward.7} parent=5 // pred_check_branch
        %903 = sbr.rel (%p901) target = $region93
      $region92: #{dgcnn_partial_forward.7} parent=5 // pred_region
        %s904 = ssub.s32 %s10, 2
        // Predicated region
        $region94: #{dgcnn_partial_forward.7} parent=92 // pred_check
          %p905 = pneg %p147
        $region95: #{dgcnn_partial_forward.7} parent=92 // pred_check_branch
          %907 = sbr.rel (%p905) target = $region97
        $region96: #{dgcnn_partial_forward.7} parent=92 // pred_region
          %s908 = smul.u32 16, %s21
          %p909 = scmp.lt.s32.totalorder %s908, 31
          %s910 = scalar_select %p909, %s908, 31
          %s911 = smul.addr %s910, 8
          %s912 = scalar_lea.vmem %s4, %s911
        $region97: #{dgcnn_partial_forward.7} parent=92 // pred_fallthru
          _
      $region93: #{dgcnn_partial_forward.7} parent=5 // pred_fallthru
        _
    $region6: #{dgcnn_partial_forward.7} parent=1 // loop_footer
      %s14 = sadd.s32 1, %s10
    $region7: #{dgcnn_partial_forward.7} parent=1 // loop_footer_branch
      %9 = sbr.rel target = $region3
    $region8: #{dgcnn_partial_forward.7} parent=1 // loop_exit
      _

// kernel: dgcnn_partial_forward.9
$region0: #{dgcnn_partial_forward.9}
  #allocation0 [shape = 'u32[]', space=smem, size = 0x4, offset = 0x4, fixed_abs, tag = 'smem constant byte address 0x4 - core index']
  #allocation1 [shape = 'u32[144,128]{1,0:T(1,128)}', space=vmem, size = 0x12000, scoped, tag = 'internal scratch']
  #allocation2 [shape = 'f32[128,8]{1,0:T(8,128)}', space=vmem, size = 0x10000, scoped, tag = 'scratch operand']
  #allocation3 [shape = 'f32[1,1]{1,0:T(1,128)S(1)}', space=vmem, size = 0x200, scoped, tag = 'scoped memory for dgcnn_partial_forward.9']
  %s0 = inlined_call_operand.vmem [shape: bf16[256,256], index: 0, kind: input, shape index: {}]
  %s1 = inlined_call_operand.vmem [shape: bf16[256,8], index: 1, kind: input, shape index: {}]
  %s2 = inlined_call_operand.vmem [shape: f32[8,1], index: 2, kind: input, shape index: {}]
  %s3 = inlined_call_operand.<no memory space> [shape: f32[1,1], index: 3, kind: input, shape index: {}]
  %s4 = inlined_call_operand.vmem [shape: f32[256,1], index: 4, kind: output, shape index: {}]
  %s5 = sld [smem:[#allocation0]]
  $region98: #{dgcnn_partial_forward.9} parent=0
    _
  %s7 = ssub.s32 1, %s5
  %s8 = scalar_select 0, %s7, %s5
  %v9 = vstv %s3
  %10 = vst [vmem:[#allocation3] sm:$0x1] %v9
  $region1: #{dgcnn_partial_forward.9} parent=0
    #allocation4 [shape = 'u8[65536]{0}', space=vmem, size = 0x10000, scoped, tag = 'input window, operand 0']
    loop: start=0, step=1, limit=6
    $region2: #{dgcnn_partial_forward.9} parent=1 // loop_pre_header
      _
    $region3: #{dgcnn_partial_forward.9} parent=1 // loop_header
      %s12 = sphi 0, %s16
      %p13 = scmp.ge.s32.totalorder %s12, 6
      %s19 = sphi 0, %s31
      %s20 = sphi 0, %s27
      %s21 = sphi 0, %s19
      %s22 = sphi 0, %s20
      %s23 = sphi 0, %s21
      %s24 = sphi 0, %s22
      %s36 = sphi 0, %s38
      %s39 = sphi 0, %s36
      %s40 = sphi 0, %s39
      %s56 = sphi 0, %s40
      %s62 = sphi 0, %s64
      %s65 = sphi 0, %s62
      %s66 = sphi 0, %s65
      %s82 = sphi 0, %s66
      %s86 = sphi 0, %s86
      %s88 = sphi 0, %s86
      %s89 = sphi 0, %s88
      %s103 = sphi 0, %s89
      %s107 = sphi 0, %s107
      %s109 = sphi 0, %s107
      %s110 = sphi 0, %s109
      %s124 = sphi 0, %s110
      %s130 = sphi 0, %s132
      %s133 = sphi 0, %s130
      %s134 = sphi 0, %s133
      %s150 = sphi 0, %s134
    $region4: #{dgcnn_partial_forward.9} parent=1 // loop_header_branch
      %15 = sbr.rel (%p13) target = $region8
    $region5: #{dgcnn_partial_forward.9} parent=1 // loop_body
      %s17 = ssub.s32 %s12, 1
      %s18 = ssub.s32 %s12, 2
      %s25 = sadd.s32 1, %s20
      %p26 = scmp.ge.s32.totalorder %s25, 2
      %s27 = scalar_select %p26, 0, %s25
      %s28 = sadd.s32 1, %s19
      %s29 = scalar_select %p26, %s28, %s19
      %p30 = scmp.ge.s32.totalorder %s29, 2
      %s31 = scalar_select %p30, 0, %s29
      %s32 = ssub.s32 %s19, %s31
      %s33 = ssub.s32 %s20, %s27
      %s34 = sor.u32 %s32, %s33
      %p35 = scmp.eq.s32.totalorder %s34, 0
      %s37 = sadd.s32 %s36, 1
      %s38 = scalar_select %p35, %s36, %s37
      %p41 = pneg %p35
      %p42 = scmp.eq.s32.totalorder %s12, 3
      %p43 = por %p41, %p42
      %p44 = scmp.ne.s32.totalorder %s36, %s39
      %p45 = scmp.eq.s32.totalorder %s12, 0
      %p46 = por %p44, %p45
      %p47 = scmp.ne.s32.totalorder %s36, %s39
      %p48 = scmp.eq.s32.totalorder %s17, 3
      %p49 = por %p47, %p48
      %p50 = scmp.ne.s32.totalorder %s39, %s40
      %p51 = scmp.eq.s32.totalorder %s17, 0
      %p52 = por %p50, %p51
      %p53 = scmp.ne.s32.totalorder %s39, %s40
      %p54 = scmp.eq.s32.totalorder %s18, 3
      %p55 = por %p53, %p54
      %p57 = scmp.ne.s32.totalorder %s40, %s56
      %p58 = scmp.eq.s32.totalorder %s18, 0
      %p59 = por %p57, %p58
      %s60 = ssub.s32 %s20, %s27
      %p61 = scmp.eq.s32.totalorder %s60, 0
      %s63 = sadd.s32 %s62, 1
      %s64 = scalar_select %p61, %s62, %s63
      %p67 = pneg %p61
      %p68 = scmp.eq.s32.totalorder %s12, 3
      %p69 = por %p67, %p68
      %p70 = scmp.ne.s32.totalorder %s62, %s65
      %p71 = scmp.eq.s32.totalorder %s12, 0
      %p72 = por %p70, %p71
      %p73 = scmp.ne.s32.totalorder %s62, %s65
      %p74 = scmp.eq.s32.totalorder %s17, 3
      %p75 = por %p73, %p74
      %p76 = scmp.ne.s32.totalorder %s65, %s66
      %p77 = scmp.eq.s32.totalorder %s17, 0
      %p78 = por %p76, %p77
      %p79 = scmp.ne.s32.totalorder %s65, %s66
      %p80 = scmp.eq.s32.totalorder %s18, 3
      %p81 = por %p79, %p80
      %p83 = scmp.ne.s32.totalorder %s66, %s82
      %p84 = scmp.eq.s32.totalorder %s18, 0
      %p85 = por %p83, %p84
      %s87 = sadd.s32 %s86, 1
      %p90 = scmp.eq.s32.totalorder %s12, 3
      %p91 = scmp.ne.s32.totalorder %s86, %s88
      %p92 = scmp.eq.s32.totalorder %s12, 0
      %p93 = por %p91, %p92
      %p94 = scmp.ne.s32.totalorder %s86, %s88
      %p95 = scmp.eq.s32.totalorder %s17, 3
      %p96 = por %p94, %p95
      %p97 = scmp.ne.s32.totalorder %s88, %s89
      %p98 = scmp.eq.s32.totalorder %s17, 0
      %p99 = por %p97, %p98
      %p100 = scmp.ne.s32.totalorder %s88, %s89
      %p101 = scmp.eq.s32.totalorder %s18, 3
      %p102 = por %p100, %p101
      %p104 = scmp.ne.s32.totalorder %s89, %s103
      %p105 = scmp.eq.s32.totalorder %s18, 0
      %p106 = por %p104, %p105
      %s108 = sadd.s32 %s107, 1
      %p111 = scmp.eq.s32.totalorder %s12, 3
      %p112 = scmp.ne.s32.totalorder %s107, %s109
      %p113 = scmp.eq.s32.totalorder %s12, 0
      %p114 = por %p112, %p113
      %p115 = scmp.ne.s32.totalorder %s107, %s109
      %p116 = scmp.eq.s32.totalorder %s17, 3
      %p117 = por %p115, %p116
      %p118 = scmp.ne.s32.totalorder %s109, %s110
      %p119 = scmp.eq.s32.totalorder %s17, 0
      %p120 = por %p118, %p119
      %p121 = scmp.ne.s32.totalorder %s109, %s110
      %p122 = scmp.eq.s32.totalorder %s18, 3
      %p123 = por %p121, %p122
      %p125 = scmp.ne.s32.totalorder %s110, %s124
      %p126 = scmp.eq.s32.totalorder %s18, 0
      %p127 = por %p125, %p126
      %s128 = ssub.s32 %s19, %s31
      %p129 = scmp.eq.s32.totalorder %s128, 0
      %s131 = sadd.s32 %s130, 1
      %s132 = scalar_select %p129, %s130, %s131
      %p135 = pneg %p129
      %p136 = scmp.eq.s32.totalorder %s12, 3
      %p137 = por %p135, %p136
      %p138 = scmp.ne.s32.totalorder %s130, %s133
      %p139 = scmp.eq.s32.totalorder %s12, 0
      %p140 = por %p138, %p139
      %p141 = scmp.ne.s32.totalorder %s130, %s133
      %p142 = scmp.eq.s32.totalorder %s17, 3
      %p143 = por %p141, %p142
      %p144 = scmp.ne.s32.totalorder %s133, %s134
      %p145 = scmp.eq.s32.totalorder %s17, 0
      %p146 = por %p144, %p145
      %p147 = scmp.ne.s32.totalorder %s133, %s134
      %p148 = scmp.eq.s32.totalorder %s18, 3
      %p149 = por %p147, %p148
      %p151 = scmp.ne.s32.totalorder %s134, %s150
      %p152 = scmp.eq.s32.totalorder %s18, 0
      %p153 = por %p151, %p152
      %p154 = scmp.le.s32.totalorder 1, %s12
      %p155 = scmp.lt.s32.totalorder %s12, 5
      %p156 = pnand %p154, %p155
      %p157 = pneg %p156
      // Predicated region
      $region9: #{dgcnn_partial_forward.9} parent=5 // pred_check
        _
      $region10: #{dgcnn_partial_forward.9} parent=5 // pred_check_branch
        %159 = sbr.rel (%p156) target = $region12
      $region11: #{dgcnn_partial_forward.9} parent=5 // pred_region
        %s160 = ssub.s32 %s12, 1
        // Predicated region
        $region13: #{dgcnn_partial_forward.9} parent=11 // pred_check
          %p161 = pneg %p99
        $region14: #{dgcnn_partial_forward.9} parent=11 // pred_check_branch
          %163 = sbr.rel (%p161) target = $region16
        $region15: #{dgcnn_partial_forward.9} parent=11 // pred_region
          _
        $region16: #{dgcnn_partial_forward.9} parent=11 // pred_fallthru
          _
        // Predicated region
        $region17: #{dgcnn_partial_forward.9} parent=11 // pred_check
          %p164 = pneg %p120
        $region18: #{dgcnn_partial_forward.9} parent=11 // pred_check_branch
          %166 = sbr.rel (%p164) target = $region20
        $region19: #{dgcnn_partial_forward.9} parent=11 // pred_region
          _
        $region20: #{dgcnn_partial_forward.9} parent=11 // pred_fallthru
          _
      $region12: #{dgcnn_partial_forward.9} parent=5 // pred_fallthru
        _
      %p167 = scmp.lt.s32.totalorder %s12, 4
      // Predicated region
      $region21: #{dgcnn_partial_forward.9} parent=5 // pred_check
        %p168 = pneg %p167
      $region22: #{dgcnn_partial_forward.9} parent=5 // pred_check_branch
        %170 = sbr.rel (%p168) target = $region24
      $region23: #{dgcnn_partial_forward.9} parent=5 // pred_region
        // Predicated region
        $region25: #{dgcnn_partial_forward.9} parent=23 // pred_check
          %p171 = pneg %p46
        $region26: #{dgcnn_partial_forward.9} parent=23 // pred_check_branch
          %173 = sbr.rel (%p171) target = $region28
        $region27: #{dgcnn_partial_forward.9} parent=23 // pred_region
          %s174 = sand.u32 %s36, 1
          %s175 = sand.u32 %s36, 1
          %s176 = smul.addr %s175, 64
          %s177 = scalar_lea.vmem [#allocation4], %s176
          %s178 = smul.u32 16, %s19
          %s179 = smul.addr %s178, 2
          %s180 = sadd.s32 %s20, %s179
          %s181 = smul.addr %s180, 4
          %s182 = scalar_lea.vmem %s0, %s181
          // Predicated region
          $region29: #{dgcnn_partial_forward.9} parent=27 // pred_check
            _
          $region30: #{dgcnn_partial_forward.9} parent=27 // pred_check_branch
            %184 = sbr.rel (0) target = $region32
          $region31: #{dgcnn_partial_forward.9} parent=27 // pred_region
            // Predicated region
            $region33: #{dgcnn_partial_forward.9} parent=31 // pred_check
              _
            $region34: #{dgcnn_partial_forward.9} parent=31 // pred_check_branch
              %186 = sbr.rel target = $region36
            $region35: #{dgcnn_partial_forward.9} parent=31 // pred_region
              // Predicated region
              $region48: #{dgcnn_partial_forward.9} parent=35 // pred_check
                _
              $region49: #{dgcnn_partial_forward.9} parent=35 // pred_check_branch
                %232 = sbr.rel (0) target = $region51
              $region50: #{dgcnn_partial_forward.9} parent=35 // pred_region
                loop: start=0, step=1, limit=1
                $region52: #{dgcnn_partial_forward.9} parent=50 // loop_pre_header
                  _
                $region53: #{dgcnn_partial_forward.9} parent=50 // loop_header
                  %s234 = sphi 0, %s238
                  %p235 = scmp.ge.s32.totalorder %s234, 1
                  %s239 = sphi %s182, %s182
                  %s240 = sphi %s177, %s177
                $region54: #{dgcnn_partial_forward.9} parent=50 // loop_header_branch
                  %237 = sbr.rel (%p235) target = $region58
                $region55: #{dgcnn_partial_forward.9} parent=50 // loop_body
                  _
                $region56: #{dgcnn_partial_forward.9} parent=50 // loop_footer
                  %s238 = sadd.s32 1, %s234
                $region57: #{dgcnn_partial_forward.9} parent=50 // loop_footer_branch
                  %233 = sbr.rel target = $region53
                $region58: #{dgcnn_partial_forward.9} parent=50 // loop_exit
                  _
                %s242 = ssub.s32 16, 1
                loop: start=0, step=1, limit=1
                $region59: #{dgcnn_partial_forward.9} parent=50 // loop_pre_header
                  _
                $region60: #{dgcnn_partial_forward.9} parent=50 // loop_header
                  %s244 = sphi 0, %s248
                  %p245 = scmp.ge.s32.totalorder %s244, 1
                  %s249 = sphi %s182, %s182
                  %s250 = sphi %s177, %s177
                $region61: #{dgcnn_partial_forward.9} parent=50 // loop_header_branch
                  %247 = sbr.rel (%p245) target = $region65
                $region62: #{dgcnn_partial_forward.9} parent=50 // loop_body
                  %v251 = vld [vmem:[%s249] sm:%s242]
                  %252 = vst [vmem:[%s250] sm:%s242] %v251
                  %v253 = vld [vmem:[%s249 + $0x8] sm:%s242]
                  %254 = vst [vmem:[%s250 + $0x4] sm:%s242] %v253
                  %v255 = vld [vmem:[%s249 + $0x10] sm:%s242]
                  %256 = vst [vmem:[%s250 + $0x8] sm:%s242] %v255
                  %v257 = vld [vmem:[%s249 + $0x18] sm:%s242]
                  %258 = vst [vmem:[%s250 + $0xc] sm:%s242] %v257
                  %v259 = vld [vmem:[%s249 + $0x20] sm:%s242]
                  %260 = vst [vmem:[%s250 + $0x10] sm:%s242] %v259
                  %v261 = vld [vmem:[%s249 + $0x28] sm:%s242]
                  %262 = vst [vmem:[%s250 + $0x14] sm:%s242] %v261
                  %v263 = vld [vmem:[%s249 + $0x30] sm:%s242]
                  %264 = vst [vmem:[%s250 + $0x18] sm:%s242] %v263
                  %v265 = vld [vmem:[%s249 + $0x38] sm:%s242]
                  %266 = vst [vmem:[%s250 + $0x1c] sm:%s242] %v265
                  %v267 = vld [vmem:[%s249 + $0x40] sm:%s242]
                  %268 = vst [vmem:[%s250 + $0x20] sm:%s242] %v267
                  %v269 = vld [vmem:[%s249 + $0x48] sm:%s242]
                  %270 = vst [vmem:[%s250 + $0x24] sm:%s242] %v269
                  %v271 = vld [vmem:[%s249 + $0x50] sm:%s242]
                  %272 = vst [vmem:[%s250 + $0x28] sm:%s242] %v271
                  %v273 = vld [vmem:[%s249 + $0x58] sm:%s242]
                  %274 = vst [vmem:[%s250 + $0x2c] sm:%s242] %v273
                  %v275 = vld [vmem:[%s249 + $0x60] sm:%s242]
                  %276 = vst [vmem:[%s250 + $0x30] sm:%s242] %v275
                  %v277 = vld [vmem:[%s249 + $0x68] sm:%s242]
                  %278 = vst [vmem:[%s250 + $0x34] sm:%s242] %v277
                  %v279 = vld [vmem:[%s249 + $0x70] sm:%s242]
                  %280 = vst [vmem:[%s250 + $0x38] sm:%s242] %v279
                  %v281 = vld [vmem:[%s249 + $0x78] sm:%s242]
                  %282 = vst [vmem:[%s250 + $0x3c] sm:%s242] %v281
                $region63: #{dgcnn_partial_forward.9} parent=50 // loop_footer
                  %s248 = sadd.s32 1, %s244
                $region64: #{dgcnn_partial_forward.9} parent=50 // loop_footer_branch
                  %243 = sbr.rel target = $region60
                $region65: #{dgcnn_partial_forward.9} parent=50 // loop_exit
                  _
              $region51: #{dgcnn_partial_forward.9} parent=35 // pred_fallthru
                _
            $region36: #{dgcnn_partial_forward.9} parent=31 // pred_fallthru
              _
            // Predicated region
            $region37: #{dgcnn_partial_forward.9} parent=31 // pred_check
              _
            $region38: #{dgcnn_partial_forward.9} parent=31 // pred_check_branch
              %188 = sbr.rel (0) target = $region40
            $region39: #{dgcnn_partial_forward.9} parent=31 // pred_region
              %s190 = ssub.s32 16, 1
              loop: start=0, step=1, limit=1
              $region41: #{dgcnn_partial_forward.9} parent=39 // loop_pre_header
                _
              $region42: #{dgcnn_partial_forward.9} parent=39 // loop_header
                %s192 = sphi 0, %s196
                %p193 = scmp.ge.s32.totalorder %s192, 1
                %s197 = sphi %s182, %s182
                %s198 = sphi %s177, %s177
              $region43: #{dgcnn_partial_forward.9} parent=39 // loop_header_branch
                %195 = sbr.rel (%p193) target = $region47
              $region44: #{dgcnn_partial_forward.9} parent=39 // loop_body
                %v199 = vld [vmem:[%s197] sm:%s190]
                %200 = vst [vmem:[%s198] sm:%s190] %v199
                %v201 = vld [vmem:[%s197 + $0x8] sm:%s190]
                %202 = vst [vmem:[%s198 + $0x4] sm:%s190] %v201
                %v203 = vld [vmem:[%s197 + $0x10] sm:%s190]
                %204 = vst [vmem:[%s198 + $0x8] sm:%s190] %v203
                %v205 = vld [vmem:[%s197 + $0x18] sm:%s190]
                %206 = vst [vmem:[%s198 + $0xc] sm:%s190] %v205
                %v207 = vld [vmem:[%s197 + $0x20] sm:%s190]
                %208 = vst [vmem:[%s198 + $0x10] sm:%s190] %v207
                %v209 = vld [vmem:[%s197 + $0x28] sm:%s190]
                %210 = vst [vmem:[%s198 + $0x14] sm:%s190] %v209
                %v211 = vld [vmem:[%s197 + $0x30] sm:%s190]
                %212 = vst [vmem:[%s198 + $0x18] sm:%s190] %v211
                %v213 = vld [vmem:[%s197 + $0x38] sm:%s190]
                %214 = vst [vmem:[%s198 + $0x1c] sm:%s190] %v213
                %v215 = vld [vmem:[%s197 + $0x40] sm:%s190]
                %216 = vst [vmem:[%s198 + $0x20] sm:%s190] %v215
                %v217 = vld [vmem:[%s197 + $0x48] sm:%s190]
                %218 = vst [vmem:[%s198 + $0x24] sm:%s190] %v217
                %v219 = vld [vmem:[%s197 + $0x50] sm:%s190]
                %220 = vst [vmem:[%s198 + $0x28] sm:%s190] %v219
                %v221 = vld [vmem:[%s197 + $0x58] sm:%s190]
                %222 = vst [vmem:[%s198 + $0x2c] sm:%s190] %v221
                %v223 = vld [vmem:[%s197 + $0x60] sm:%s190]
                %224 = vst [vmem:[%s198 + $0x30] sm:%s190] %v223
                %v225 = vld [vmem:[%s197 + $0x68] sm:%s190]
                %226 = vst [vmem:[%s198 + $0x34] sm:%s190] %v225
                %v227 = vld [vmem:[%s197 + $0x70] sm:%s190]
                %228 = vst [vmem:[%s198 + $0x38] sm:%s190] %v227
                %v229 = vld [vmem:[%s197 + $0x78] sm:%s190]
                %230 = vst [vmem:[%s198 + $0x3c] sm:%s190] %v229
              $region45: #{dgcnn_partial_forward.9} parent=39 // loop_footer
                %s196 = sadd.s32 1, %s192
              $region46: #{dgcnn_partial_forward.9} parent=39 // loop_footer_branch
                %191 = sbr.rel target = $region42
              $region47: #{dgcnn_partial_forward.9} parent=39 // loop_exit
                _
            $region40: #{dgcnn_partial_forward.9} parent=31 // pred_fallthru
              _
          $region32: #{dgcnn_partial_forward.9} parent=27 // pred_fallthru
            _
          %283 = vnop
        $region28: #{dgcnn_partial_forward.9} parent=23 // pred_fallthru
          _
        // Predicated region
        $region66: #{dgcnn_partial_forward.9} parent=23 // pred_check
          %p284 = pneg %p72
        $region67: #{dgcnn_partial_forward.9} parent=23 // pred_check_branch
          %286 = sbr.rel (%p284) target = $region69
        $region68: #{dgcnn_partial_forward.9} parent=23 // pred_region
          %s287 = smul.u32 16, %s20
          %p288 = scmp.lt.s32.totalorder %s287, 31
          %s289 = scalar_select %p288, %s287, 31
          %s290 = smul.addr %s289, 4
          %s291 = scalar_lea.vmem %s1, %s290
          %s292 = smul.u32 16, %s20
        $region69: #{dgcnn_partial_forward.9} parent=23 // pred_fallthru
          _
      $region24: #{dgcnn_partial_forward.9} parent=5 // pred_fallthru
        _
      %p293 = scmp.le.s32.totalorder 1, %s12
      %p294 = scmp.lt.s32.totalorder %s12, 5
      %p295 = pnand %p293, %p294
      %p296 = pneg %p295
      // Predicated region
      $region70: #{dgcnn_partial_forward.9} parent=5 // pred_check
        _
      $region71: #{dgcnn_partial_forward.9} parent=5 // pred_check_branch
        %298 = sbr.rel (%p295) target = $region73
      $region72: #{dgcnn_partial_forward.9} parent=5 // pred_region
        %s299 = ssub.s32 %s12, 1
        %s300 = sand.u32 %s39, 1
        %s301 = sand.u32 %s39, 1
        %s302 = smul.addr %s301, 64
        %s303 = scalar_lea.vmem [#allocation4], %s302
        // Predicated region
        $region74: #{dgcnn_partial_forward.9} parent=72 // pred_check
          %p304 = pneg %p52
        $region75: #{dgcnn_partial_forward.9} parent=72 // pred_check_branch
          %306 = sbr.rel (%p304) target = $region77
        $region76: #{dgcnn_partial_forward.9} parent=72 // pred_region
          _
        $region77: #{dgcnn_partial_forward.9} parent=72 // pred_fallthru
          _
        %s307 = sand.u32 %s39, 1
        %s308 = sand.u32 %s39, 1
        %s309 = smul.addr %s308, 64
        %s310 = scalar_lea.vmem [#allocation4], %s309
        %p311 = pneg %p52
        %p312 = pneg %p49
        %s313 = smul.u32 16, %s22
        %p314 = scmp.lt.s32.totalorder %s313, 31
        %s315 = scalar_select %p314, %s313, 31
        %s316 = smul.addr %s315, 4
        %s317 = scalar_lea.vmem %s1, %s316
        %p318 = pneg %p78
        %p319 = pneg %p75
        %p320 = pneg %p99
        %p321 = pneg %p96
        %p322 = pneg %p120
        %p323 = pneg %p117
        %p324 = pneg %p146
        %p325 = pneg %p143
        %s326 = smul.u32 16, %s21
        %p327 = scmp.lt.s32.totalorder %s326, 31
        %s328 = scalar_select %p327, %s326, 31
        %s329 = smul.addr %s328, 8
        %s330 = scalar_lea.vmem %s4, %s329
        %s331 = smul.u32 16, %s21
        %s332 = smul.u32 16, %s22
        %p333 = scmp.lt.s32.totalorder %s332, 31
        %s334 = scalar_select %p333, %s332, 31
        %s335 = smul.addr %s334, 4
        %s336 = scalar_lea.vmem %s1, %s335
        %s337 = smul.u32 16, %s22
        %s338 = smul.u32 16, %s21
        %p339 = scmp.lt.s32.totalorder %s338, 31
        %s340 = scalar_select %p339, %s338, 31
        %s341 = smul.addr %s340, 8
        %s342 = scalar_lea.vmem %s4, %s341
        %s343 = smul.u32 16, %s21
        %p345 = scmp.eq.s32.totalorder %s22, 0
        // Predicated region
        $region78: #{dgcnn_partial_forward.9} parent=72 // pred_check
          %p346 = pneg %p345
        $region79: #{dgcnn_partial_forward.9} parent=72 // pred_check_branch
          %348 = sbr.rel (%p346) target = $region81
        $region80: #{dgcnn_partial_forward.9} parent=72 // pred_region
          %vm349 = vcmask 64512
          %350 = vst.msk [vmem:[#allocation2] sm:$0xff] %vm349, 0.0
          %351 = vst.msk [vmem:[#allocation2 + $0x8] sm:$0xff] %vm349, 0.0
          %352 = vst.msk [vmem:[#allocation2 + $0x10] sm:$0xff] %vm349, 0.0
          %353 = vst.msk [vmem:[#allocation2 + $0x18] sm:$0xff] %vm349, 0.0
          %354 = vst.msk [vmem:[#allocation2 + $0x20] sm:$0xff] %vm349, 0.0
          %355 = vst.msk [vmem:[#allocation2 + $0x28] sm:$0xff] %vm349, 0.0
          %356 = vst.msk [vmem:[#allocation2 + $0x30] sm:$0xff] %vm349, 0.0
          %357 = vst.msk [vmem:[#allocation2 + $0x38] sm:$0xff] %vm349, 0.0
          %358 = vst.msk [vmem:[#allocation2 + $0x40] sm:$0xff] %vm349, 0.0
          %359 = vst.msk [vmem:[#allocation2 + $0x48] sm:$0xff] %vm349, 0.0
          %360 = vst.msk [vmem:[#allocation2 + $0x50] sm:$0xff] %vm349, 0.0
          %361 = vst.msk [vmem:[#allocation2 + $0x58] sm:$0xff] %vm349, 0.0
          %362 = vst.msk [vmem:[#allocation2 + $0x60] sm:$0xff] %vm349, 0.0
          %363 = vst.msk [vmem:[#allocation2 + $0x68] sm:$0xff] %vm349, 0.0
          %364 = vst.msk [vmem:[#allocation2 + $0x70] sm:$0xff] %vm349, 0.0
          %365 = vst.msk [vmem:[#allocation2 + $0x78] sm:$0xff] %vm349, 0.0
        $region81: #{dgcnn_partial_forward.9} parent=72 // pred_fallthru
          _
        %v366 = vld [vmem:[#allocation2] sm:$0xff]
        %v367 = vld [vmem:[#allocation2 + $0x8] sm:$0xff]
        %v368 = vld [vmem:[#allocation2 + $0x10] sm:$0xff]
        %v369 = vld [vmem:[#allocation2 + $0x18] sm:$0xff]
        %v370 = vld [vmem:[#allocation2 + $0x20] sm:$0xff]
        %v371 = vld [vmem:[#allocation2 + $0x28] sm:$0xff]
        %v372 = vld [vmem:[#allocation2 + $0x30] sm:$0xff]
        %v373 = vld [vmem:[#allocation2 + $0x38] sm:$0xff]
        %v374 = vld [vmem:[#allocation2 + $0x40] sm:$0xff]
        %v375 = vld [vmem:[#allocation2 + $0x48] sm:$0xff]
        %v376 = vld [vmem:[#allocation2 + $0x50] sm:$0xff]
        %v377 = vld [vmem:[#allocation2 + $0x58] sm:$0xff]
        %v378 = vld [vmem:[#allocation2 + $0x60] sm:$0xff]
        %v379 = vld [vmem:[#allocation2 + $0x68] sm:$0xff]
        %v380 = vld [vmem:[#allocation2 + $0x70] sm:$0xff]
        %v381 = vld [vmem:[#allocation2 + $0x78] sm:$0xff]
        %v382 = vld [vmem:[%s303] sm:$0xf]
        %v383 = vld [vmem:[%s303 + $0x4] sm:$0xf]
        %v384 = vld [vmem:[%s303 + $0x8] sm:$0xf]
        %v385 = vld [vmem:[%s303 + $0xc] sm:$0xf]
        %v386 = vld [vmem:[%s303 + $0x10] sm:$0xf]
        %v387 = vld [vmem:[%s303 + $0x14] sm:$0xf]
        %v388 = vld [vmem:[%s303 + $0x18] sm:$0xf]
        %v389 = vld [vmem:[%s303 + $0x1c] sm:$0xf]
        %v390 = vld [vmem:[%s303 + $0x20] sm:$0xf]
        %v391 = vld [vmem:[%s303 + $0x24] sm:$0xf]
        %v392 = vld [vmem:[%s303 + $0x28] sm:$0xf]
        %v393 = vld [vmem:[%s303 + $0x2c] sm:$0xf]
        %v394 = vld [vmem:[%s303 + $0x30] sm:$0xf]
        %v395 = vld [vmem:[%s303 + $0x34] sm:$0xf]
        %v396 = vld [vmem:[%s303 + $0x38] sm:$0xf]
        %v397 = vld [vmem:[%s303 + $0x3c] sm:$0xf]
        %v398 = vld [vmem:[%s336] sm:$0xf]
        %v399 = vld [vmem:[%s336 + $0x4] sm:$0xf]
        %v400 = vld [vmem:[%s336 + $0x8] sm:$0xf]
        %v401 = vld [vmem:[%s336 + $0xc] sm:$0xf]
        %v402 = vld [vmem:[%s336 + $0x10] sm:$0xf]
        %v403 = vld [vmem:[%s336 + $0x14] sm:$0xf]
        %v404 = vld [vmem:[%s336 + $0x18] sm:$0xf]
        %v405 = vld [vmem:[%s336 + $0x1c] sm:$0xf]
        %v406 = vld [vmem:[%s336 + $0x20] sm:$0xf]
        %v407 = vld [vmem:[%s336 + $0x24] sm:$0xf]
        %v408 = vld [vmem:[%s336 + $0x28] sm:$0xf]
        %v409 = vld [vmem:[%s336 + $0x2c] sm:$0xf]
        %v410 = vld [vmem:[%s336 + $0x30] sm:$0xf]
        %v411 = vld [vmem:[%s336 + $0x34] sm:$0xf]
        %v412 = vld [vmem:[%s336 + $0x38] sm:$0xf]
        %v413 = vld [vmem:[%s336 + $0x3c] sm:$0xf]
        %v430 = vunpack.c.l.b16 %v382
        %v431 = vunpack.c.l.b16 %v383
        %v432 = vunpack.c.l.b16 %v384
        %v433 = vunpack.c.l.b16 %v385
        %v434 = vunpack.c.l.b16 %v386
        %v435 = vunpack.c.l.b16 %v387
        %v436 = vunpack.c.l.b16 %v388
        %v437 = vunpack.c.l.b16 %v389
        %v438 = vunpack.c.l.b16 %v390
        %v439 = vunpack.c.l.b16 %v391
        %v440 = vunpack.c.l.b16 %v392
        %v441 = vunpack.c.l.b16 %v393
        %v442 = vunpack.c.l.b16 %v394
        %v443 = vunpack.c.l.b16 %v395
        %v444 = vunpack.c.l.b16 %v396
        %v445 = vunpack.c.l.b16 %v397
        %v446 = vpack.c.b16 %v431, %v430
        %v447 = vpack.c.b16 %v433, %v432
        %v448 = vpack.c.b16 %v435, %v434
        %v449 = vpack.c.b16 %v437, %v436
        %v450 = vpack.c.b16 %v439, %v438
        %v451 = vpack.c.b16 %v441, %v440
        %v452 = vpack.c.b16 %v443, %v442
        %v453 = vpack.c.b16 %v445, %v444
        %v478 = vunpack.c.l.b16 %v398
        %v479 = vunpack.c.l.b16 %v399
        %v480 = vunpack.c.l.b16 %v400
        %v481 = vunpack.c.l.b16 %v401
        %v482 = vunpack.c.l.b16 %v402
        %v483 = vunpack.c.l.b16 %v403
        %v484 = vunpack.c.l.b16 %v404
        %v485 = vunpack.c.l.b16 %v405
        %v486 = vunpack.c.l.b16 %v406
        %v487 = vunpack.c.l.b16 %v407
        %v488 = vunpack.c.l.b16 %v408
        %v489 = vunpack.c.l.b16 %v409
        %v490 = vunpack.c.l.b16 %v410
        %v491 = vunpack.c.l.b16 %v411
        %v492 = vunpack.c.l.b16 %v412
        %v493 = vunpack.c.l.b16 %v413
        %v494 = vpack.c.b16 %v479, %v478
        %v495 = vpack.c.b16 %v481, %v480
        %v496 = vpack.c.b16 %v483, %v482
        %v497 = vpack.c.b16 %v485, %v484
        %v498 = vpack.c.b16 %v487, %v486
        %v499 = vpack.c.b16 %v489, %v488
        %v500 = vpack.c.b16 %v491, %v490
        %v501 = vpack.c.b16 %v493, %v492
        %510 = vmatprep.subr.bf16.mxu0 0
        %511 = vmatpush1.bf16.msra.mxu0 %v501
        %512 = vmatprep.subr.bf16.mxu0 0
        %513 = vmatpush1.bf16.msra.mxu0 %v500
        %514 = vmatprep.subr.bf16.mxu0 0
        %515 = vmatpush1.bf16.msra.mxu0 %v499
        %516 = vmatprep.subr.bf16.mxu0 0
        %517 = vmatpush1.bf16.msra.mxu0 %v498
        %518 = vmatprep.subr.bf16.mxu0 0
        %519 = vmatpush1.bf16.msra.mxu0 %v497
        %520 = vmatprep.subr.bf16.mxu0 0
        %521 = vmatpush1.bf16.msra.mxu0 %v496
        %522 = vmatprep.subr.bf16.mxu0 0
        %523 = vmatpush1.bf16.msra.mxu0 %v495
        %524 = vmatprep.subr.bf16.mxu0 0
        %525 = vmatpush1.bf16.msra.mxu0 %v494
        %526 = vmatprep.subr.bf16.mxu0 0
        %527 = vmatpush2.bf16.msra.mxu0 0
        %528 = vmatprep.subr.bf16.mxu0 0
        %529 = vmatpush2.bf16.msra.mxu0 0
        %530 = vmatprep.subr.bf16.mxu0 0
        %531 = vmatpush2.bf16.msra.mxu0 0
        %532 = vmatprep.subr.bf16.mxu0 0
        %533 = vmatpush2.bf16.msra.mxu0 0
        %534 = vmatprep.subr.bf16.mxu0 0
        %535 = vmatpush2.bf16.msra.mxu0 0
        %536 = vmatprep.subr.bf16.mxu0 0
        %537 = vmatpush2.bf16.msra.mxu0 0
        %538 = vmatprep.subr.bf16.mxu0 0
        %539 = vmatpush2.bf16.msra.mxu0 0
        %540 = vmatprep.subr.bf16.mxu0 0
        %541 = vmatpush2.bf16.msra.mxu0 0
        %542 = vmatprep.mubr.bf16.mxu0 0
        %543 = vmatmul.mubr.bf16.gmra.mxu0 %v446
        %v544 = vpop.f32.mrf.mxu0
        %v545 = vadd.f32 0.0, %v544
        %v546 = vpop.f32.mrf.mxu0
        %v547 = vpop.f32.mrf.mxu0
        %v548 = vadd.f32 0.0, %v547
        %v549 = vpop.f32.mrf.mxu0
        %550 = vmatprep.mubr.bf16.mxu0 0
        %551 = vmatmul.mubr.bf16.gmra.mxu0 %v447
        %v552 = vpop.f32.mrf.mxu0
        %v553 = vadd.f32 0.0, %v552
        %v554 = vpop.f32.mrf.mxu0
        %v555 = vpop.f32.mrf.mxu0
        %v556 = vadd.f32 0.0, %v555
        %v557 = vpop.f32.mrf.mxu0
        %558 = vmatprep.mubr.bf16.mxu0 0
        %559 = vmatmul.mubr.bf16.gmra.mxu0 %v448
        %v560 = vpop.f32.mrf.mxu0
        %v561 = vadd.f32 0.0, %v560
        %v562 = vpop.f32.mrf.mxu0
        %v563 = vpop.f32.mrf.mxu0
        %v564 = vadd.f32 0.0, %v563
        %v565 = vpop.f32.mrf.mxu0
        %566 = vmatprep.mubr.bf16.mxu0 0
        %567 = vmatmul.mubr.bf16.gmra.mxu0 %v449
        %v568 = vpop.f32.mrf.mxu0
        %v569 = vadd.f32 0.0, %v568
        %v570 = vpop.f32.mrf.mxu0
        %v571 = vpop.f32.mrf.mxu0
        %v572 = vadd.f32 0.0, %v571
        %v573 = vpop.f32.mrf.mxu0
        %574 = vmatprep.mubr.bf16.mxu0 0
        %575 = vmatmul.mubr.bf16.gmra.mxu0 %v450
        %v576 = vpop.f32.mrf.mxu0
        %v577 = vadd.f32 0.0, %v576
        %v578 = vpop.f32.mrf.mxu0
        %v579 = vpop.f32.mrf.mxu0
        %v580 = vadd.f32 0.0, %v579
        %v581 = vpop.f32.mrf.mxu0
        %582 = vmatprep.mubr.bf16.mxu0 0
        %583 = vmatmul.mubr.bf16.gmra.mxu0 %v451
        %v584 = vpop.f32.mrf.mxu0
        %v585 = vadd.f32 0.0, %v584
        %v586 = vpop.f32.mrf.mxu0
        %v587 = vpop.f32.mrf.mxu0
        %v588 = vadd.f32 0.0, %v587
        %v589 = vpop.f32.mrf.mxu0
        %590 = vmatprep.mubr.bf16.mxu0 0
        %591 = vmatmul.mubr.bf16.gmra.mxu0 %v452
        %v592 = vpop.f32.mrf.mxu0
        %v593 = vadd.f32 0.0, %v592
        %v594 = vpop.f32.mrf.mxu0
        %v595 = vpop.f32.mrf.mxu0
        %v596 = vadd.f32 0.0, %v595
        %v597 = vpop.f32.mrf.mxu0
        %598 = vmatprep.mubr.bf16.mxu0 0
        %599 = vmatmul.mubr.bf16.gmra.mxu0 %v453
        %v600 = vpop.f32.mrf.mxu0
        %v601 = vadd.f32 0.0, %v600
        %v602 = vpop.f32.mrf.mxu0
        %v603 = vpop.f32.mrf.mxu0
        %v604 = vadd.f32 0.0, %v603
        %v605 = vpop.f32.mrf.mxu0
        %606 = vdwg.mxu0
        %v607 = vadd.f32 %v366, %v545
        %v608 = vadd.f32 %v367, %v548
        %v609 = vadd.f32 %v368, %v553
        %v610 = vadd.f32 %v369, %v556
        %v611 = vadd.f32 %v370, %v561
        %v612 = vadd.f32 %v371, %v564
        %v613 = vadd.f32 %v372, %v569
        %v614 = vadd.f32 %v373, %v572
        %v615 = vadd.f32 %v374, %v577
        %v616 = vadd.f32 %v375, %v580
        %v617 = vadd.f32 %v376, %v585
        %v618 = vadd.f32 %v377, %v588
        %v619 = vadd.f32 %v378, %v593
        %v620 = vadd.f32 %v379, %v596
        %v621 = vadd.f32 %v380, %v601
        %v622 = vadd.f32 %v381, %v604
        %vm623 = vcmask 64512
        %624 = vst.msk [vmem:[#allocation2] sm:$0xff] %vm623, %v607
        %625 = vst.msk [vmem:[#allocation2 + $0x8] sm:$0xff] %vm623, %v608
        %626 = vst.msk [vmem:[#allocation2 + $0x10] sm:$0xff] %vm623, %v609
        %627 = vst.msk [vmem:[#allocation2 + $0x18] sm:$0xff] %vm623, %v610
        %628 = vst.msk [vmem:[#allocation2 + $0x20] sm:$0xff] %vm623, %v611
        %629 = vst.msk [vmem:[#allocation2 + $0x28] sm:$0xff] %vm623, %v612
        %630 = vst.msk [vmem:[#allocation2 + $0x30] sm:$0xff] %vm623, %v613
        %631 = vst.msk [vmem:[#allocation2 + $0x38] sm:$0xff] %vm623, %v614
        %632 = vst.msk [vmem:[#allocation2 + $0x40] sm:$0xff] %vm623, %v615
        %633 = vst.msk [vmem:[#allocation2 + $0x48] sm:$0xff] %vm623, %v616
        %634 = vst.msk [vmem:[#allocation2 + $0x50] sm:$0xff] %vm623, %v617
        %635 = vst.msk [vmem:[#allocation2 + $0x58] sm:$0xff] %vm623, %v618
        %636 = vst.msk [vmem:[#allocation2 + $0x60] sm:$0xff] %vm623, %v619
        %637 = vst.msk [vmem:[#allocation2 + $0x68] sm:$0xff] %vm623, %v620
        %638 = vst.msk [vmem:[#allocation2 + $0x70] sm:$0xff] %vm623, %v621
        %639 = vst.msk [vmem:[#allocation2 + $0x78] sm:$0xff] %vm623, %v622
        %p640 = scmp.eq.s32.totalorder %s22, 1
        // Predicated region
        $region82: #{dgcnn_partial_forward.9} parent=72 // pred_check
          %p641 = pneg %p640
        $region83: #{dgcnn_partial_forward.9} parent=72 // pred_check_branch
          %643 = sbr.rel (%p641) target = $region85
        $region84: #{dgcnn_partial_forward.9} parent=72 // pred_region
          %v644 = vld [vmem:[#allocation2] sm:$0xff]
          %v645 = vld [vmem:[#allocation2 + $0x8] sm:$0xff]
          %v646 = vld [vmem:[#allocation2 + $0x10] sm:$0xff]
          %v647 = vld [vmem:[#allocation2 + $0x18] sm:$0xff]
          %v648 = vld [vmem:[#allocation2 + $0x20] sm:$0xff]
          %v649 = vld [vmem:[#allocation2 + $0x28] sm:$0xff]
          %v650 = vld [vmem:[#allocation2 + $0x30] sm:$0xff]
          %v651 = vld [vmem:[#allocation2 + $0x38] sm:$0xff]
          %v652 = vld [vmem:[#allocation2 + $0x40] sm:$0xff]
          %v653 = vld [vmem:[#allocation2 + $0x48] sm:$0xff]
          %v654 = vld [vmem:[#allocation2 + $0x50] sm:$0xff]
          %v655 = vld [vmem:[#allocation2 + $0x58] sm:$0xff]
          %v656 = vld [vmem:[#allocation2 + $0x60] sm:$0xff]
          %v657 = vld [vmem:[#allocation2 + $0x68] sm:$0xff]
          %v658 = vld [vmem:[#allocation2 + $0x70] sm:$0xff]
          %v659 = vld [vmem:[#allocation2 + $0x78] sm:$0xff]
          %v660 = vld [vmem:[%s2] sm:$0xff]
          %v661 = vld [vmem:[#allocation3] sm:$0x1]
          %v663 = vlaneseq
          %v664 = vshrl.u32 %v663, 7
          %v665 = vsub.s32 0, %v664
          %v666 = vrot.slane %v661, %v665
          %v669 = vsel %vm623, %v644, 0
          %v672 = vsel %vm623, %v645, 0
          %v675 = vsel %vm623, %v646, 0
          %v678 = vsel %vm623, %v647, 0
          %v681 = vsel %vm623, %v648, 0
          %v684 = vsel %vm623, %v649, 0
          %v687 = vsel %vm623, %v650, 0
          %v690 = vsel %vm623, %v651, 0
          %v693 = vsel %vm623, %v652, 0
          %v696 = vsel %vm623, %v653, 0
          %v699 = vsel %vm623, %v654, 0
          %v702 = vsel %vm623, %v655, 0
          %v705 = vsel %vm623, %v656, 0
          %v708 = vsel %vm623, %v657, 0
          %v711 = vsel %vm623, %v658, 0
          %v714 = vsel %vm623, %v659, 0
          %716 = vmatprep.subr.mxu0 0.0
          %717 = vmatpush1.msra.mxu0 0.0
          %718 = vmatprep.subr.mxu0 0.0
          %719 = vmatpush1.msra.mxu0 0.0
          %720 = vmatprep.subr.mxu0 0.0
          %721 = vmatpush1.msra.mxu0 0.0
          %722 = vmatprep.subr.mxu0 0.0
          %723 = vmatpush1.msra.mxu0 0.0
          %724 = vmatprep.subr.mxu0 0.0
          %725 = vmatpush1.msra.mxu0 0.0
          %726 = vmatprep.subr.mxu0 0.0
          %727 = vmatpush1.msra.mxu0 0.0
          %728 = vmatprep.subr.mxu0 0.0
          %729 = vmatpush1.msra.mxu0 0.0
          %730 = vmatprep.subr.mxu0 0.0
          %731 = vmatpush1.msra.mxu0 0.0
          %732 = vmatprep.subr.mxu0 0.0
          %733 = vmatpush1.msra.mxu0 0.0
          %734 = vmatprep.subr.mxu0 0.0
          %735 = vmatpush1.msra.mxu0 0.0
          %736 = vmatprep.subr.mxu0 0.0
          %737 = vmatpush1.msra.mxu0 0.0
          %738 = vmatprep.subr.mxu0 0.0
          %739 = vmatpush1.msra.mxu0 0.0
          %740 = vmatprep.subr.mxu0 0.0
          %741 = vmatpush1.msra.mxu0 0.0
          %742 = vmatprep.subr.mxu0 0.0
          %743 = vmatpush1.msra.mxu0 0.0
          %744 = vmatprep.subr.mxu0 0.0
          %745 = vmatpush1.msra.mxu0 0.0
          %746 = vmatprep.subr.mxu0 0.0
          %747 = vmatpush1.msra.mxu0 %v660
          %748 = vmatprep.subr.mxu0 0.0
          %749 = vmatpush2.msra.mxu0 0.0
          %750 = vmatprep.subr.mxu0 0.0
          %751 = vmatpush2.msra.mxu0 0.0
          %752 = vmatprep.subr.mxu0 0.0
          %753 = vmatpush2.msra.mxu0 0.0
          %754 = vmatprep.subr.mxu0 0.0
          %755 = vmatpush2.msra.mxu0 0.0
          %756 = vmatprep.subr.mxu0 0.0
          %757 = vmatpush2.msra.mxu0 0.0
          %758 = vmatprep.subr.mxu0 0.0
          %759 = vmatpush2.msra.mxu0 0.0
          %760 = vmatprep.subr.mxu0 0.0
          %761 = vmatpush2.msra.mxu0 0.0
          %762 = vmatprep.subr.mxu0 0.0
          %763 = vmatpush2.msra.mxu0 0.0
          %764 = vmatprep.subr.mxu0 0.0
          %765 = vmatpush2.msra.mxu0 0.0
          %766 = vmatprep.subr.mxu0 0.0
          %767 = vmatpush2.msra.mxu0 0.0
          %768 = vmatprep.subr.mxu0 0.0
          %769 = vmatpush2.msra.mxu0 0.0
          %770 = vmatprep.subr.mxu0 0.0
          %771 = vmatpush2.msra.mxu0 0.0
          %772 = vmatprep.subr.mxu0 0.0
          %773 = vmatpush2.msra.mxu0 0.0
          %774 = vmatprep.subr.mxu0 0.0
          %775 = vmatpush2.msra.mxu0 0.0
          %776 = vmatprep.subr.mxu0 0.0
          %777 = vmatpush2.msra.mxu0 0.0
          %778 = vmatprep.subr.mxu0 0.0
          %779 = vmatpush2.msra.mxu0 0.0
          %780 = vmatprep.mubr.f32.mxu0 0.0
          %781 = vmatmul.mubr.f32.gmra.mxu0 %v669
          %v782 = vpop.f32.mrf.mxu0
          %v783 = vadd.f32 %v666, %v782
          %v784 = vpop.f32.mrf.mxu0
          %785 = vmatprep.mubr.f32.mxu0 0.0
          %786 = vmatmul.mubr.f32.gmra.mxu0 %v672
          %v787 = vpop.f32.mrf.mxu0
          %v788 = vadd.f32 %v666, %v787
          %v789 = vpop.f32.mrf.mxu0
          %790 = vmatprep.mubr.f32.mxu0 0.0
          %791 = vmatmul.mubr.f32.gmra.mxu0 %v675
          %v792 = vpop.f32.mrf.mxu0
          %v793 = vadd.f32 %v666, %v792
          %v794 = vpop.f32.mrf.mxu0
          %795 = vmatprep.mubr.f32.mxu0 0.0
          %796 = vmatmul.mubr.f32.gmra.mxu0 %v678
          %v797 = vpop.f32.mrf.mxu0
          %v798 = vadd.f32 %v666, %v797
          %v799 = vpop.f32.mrf.mxu0
          %800 = vmatprep.mubr.f32.mxu0 0.0
          %801 = vmatmul.mubr.f32.gmra.mxu0 %v681
          %v802 = vpop.f32.mrf.mxu0
          %v803 = vadd.f32 %v666, %v802
          %v804 = vpop.f32.mrf.mxu0
          %805 = vmatprep.mubr.f32.mxu0 0.0
          %806 = vmatmul.mubr.f32.gmra.mxu0 %v684
          %v807 = vpop.f32.mrf.mxu0
          %v808 = vadd.f32 %v666, %v807
          %v809 = vpop.f32.mrf.mxu0
          %810 = vmatprep.mubr.f32.mxu0 0.0
          %811 = vmatmul.mubr.f32.gmra.mxu0 %v687
          %v812 = vpop.f32.mrf.mxu0
          %v813 = vadd.f32 %v666, %v812
          %v814 = vpop.f32.mrf.mxu0
          %815 = vmatprep.mubr.f32.mxu0 0.0
          %816 = vmatmul.mubr.f32.gmra.mxu0 %v690
          %v817 = vpop.f32.mrf.mxu0
          %v818 = vadd.f32 %v666, %v817
          %v819 = vpop.f32.mrf.mxu0
          %820 = vmatprep.mubr.f32.mxu0 0.0
          %821 = vmatmul.mubr.f32.gmra.mxu0 %v693
          %v822 = vpop.f32.mrf.mxu0
          %v823 = vadd.f32 %v666, %v822
          %v824 = vpop.f32.mrf.mxu0
          %825 = vmatprep.mubr.f32.mxu0 0.0
          %826 = vmatmul.mubr.f32.gmra.mxu0 %v696
          %v827 = vpop.f32.mrf.mxu0
          %v828 = vadd.f32 %v666, %v827
          %v829 = vpop.f32.mrf.mxu0
          %830 = vmatprep.mubr.f32.mxu0 0.0
          %831 = vmatmul.mubr.f32.gmra.mxu0 %v699
          %v832 = vpop.f32.mrf.mxu0
          %v833 = vadd.f32 %v666, %v832
          %v834 = vpop.f32.mrf.mxu0
          %835 = vmatprep.mubr.f32.mxu0 0.0
          %836 = vmatmul.mubr.f32.gmra.mxu0 %v702
          %v837 = vpop.f32.mrf.mxu0
          %v838 = vadd.f32 %v666, %v837
          %v839 = vpop.f32.mrf.mxu0
          %840 = vmatprep.mubr.f32.mxu0 0.0
          %841 = vmatmul.mubr.f32.gmra.mxu0 %v705
          %v842 = vpop.f32.mrf.mxu0
          %v843 = vadd.f32 %v666, %v842
          %v844 = vpop.f32.mrf.mxu0
          %845 = vmatprep.mubr.f32.mxu0 0.0
          %846 = vmatmul.mubr.f32.gmra.mxu0 %v708
          %v847 = vpop.f32.mrf.mxu0
          %v848 = vadd.f32 %v666, %v847
          %v849 = vpop.f32.mrf.mxu0
          %850 = vmatprep.mubr.f32.mxu0 0.0
          %851 = vmatmul.mubr.f32.gmra.mxu0 %v711
          %v852 = vpop.f32.mrf.mxu0
          %v853 = vadd.f32 %v666, %v852
          %v854 = vpop.f32.mrf.mxu0
          %855 = vmatprep.mubr.f32.mxu0 0.0
          %856 = vmatmul.mubr.f32.gmra.mxu0 %v714
          %v857 = vpop.f32.mrf.mxu0
          %v858 = vadd.f32 %v666, %v857
          %v859 = vpop.f32.mrf.mxu0
          %860 = vdwg.mxu0
          %v861 = vtanh.pop %v783
          %v862 = vtanh.pop %v788
          %v863 = vtanh.pop %v793
          %v864 = vtanh.pop %v798
          %v865 = vtanh.pop %v803
          %v866 = vtanh.pop %v808
          %v867 = vtanh.pop %v813
          %v868 = vtanh.pop %v818
          %v869 = vtanh.pop %v823
          %v870 = vtanh.pop %v828
          %v871 = vtanh.pop %v833
          %v872 = vtanh.pop %v838
          %v873 = vtanh.pop %v843
          %v874 = vtanh.pop %v848
          %v875 = vtanh.pop %v853
          %v876 = vtanh.pop %v858
          %vm877 = vcmask 7168
          %878 = vst.msk [vmem:[%s342] sm:$0xff] %vm877, %v861
          %879 = vst.msk [vmem:[%s342 + $0x8] sm:$0xff] %vm877, %v862
          %880 = vst.msk [vmem:[%s342 + $0x10] sm:$0xff] %vm877, %v863
          %881 = vst.msk [vmem:[%s342 + $0x18] sm:$0xff] %vm877, %v864
          %882 = vst.msk [vmem:[%s342 + $0x20] sm:$0xff] %vm877, %v865
          %883 = vst.msk [vmem:[%s342 + $0x28] sm:$0xff] %vm877, %v866
          %884 = vst.msk [vmem:[%s342 + $0x30] sm:$0xff] %vm877, %v867
          %885 = vst.msk [vmem:[%s342 + $0x38] sm:$0xff] %vm877, %v868
          %886 = vst.msk [vmem:[%s342 + $0x40] sm:$0xff] %vm877, %v869
          %887 = vst.msk [vmem:[%s342 + $0x48] sm:$0xff] %vm877, %v870
          %888 = vst.msk [vmem:[%s342 + $0x50] sm:$0xff] %vm877, %v871
          %889 = vst.msk [vmem:[%s342 + $0x58] sm:$0xff] %vm877, %v872
          %890 = vst.msk [vmem:[%s342 + $0x60] sm:$0xff] %vm877, %v873
          %891 = vst.msk [vmem:[%s342 + $0x68] sm:$0xff] %vm877, %v874
          %892 = vst.msk [vmem:[%s342 + $0x70] sm:$0xff] %vm877, %v875
          %893 = vst.msk [vmem:[%s342 + $0x78] sm:$0xff] %vm877, %v876
        $region85: #{dgcnn_partial_forward.9} parent=72 // pred_fallthru
          _
        %s894 = smul.u32 16, %s21
        %p895 = scmp.lt.s32.totalorder %s894, 31
        %s896 = scalar_select %p895, %s894, 31
        %s897 = smul.addr %s896, 8
        %s898 = scalar_lea.vmem %s4, %s897
        // Predicated region
        $region86: #{dgcnn_partial_forward.9} parent=72 // pred_check
          %p899 = pneg %p143
        $region87: #{dgcnn_partial_forward.9} parent=72 // pred_check_branch
          %901 = sbr.rel (%p899) target = $region89
        $region88: #{dgcnn_partial_forward.9} parent=72 // pred_region
          %s902 = smul.u32 16, %s21
        $region89: #{dgcnn_partial_forward.9} parent=72 // pred_fallthru
          _
      $region73: #{dgcnn_partial_forward.9} parent=5 // pred_fallthru
        _
      %p903 = scmp.le.s32.totalorder 2, %s12
      // Predicated region
      $region90: #{dgcnn_partial_forward.9} parent=5 // pred_check
        %p904 = pneg %p903
      $region91: #{dgcnn_partial_forward.9} parent=5 // pred_check_branch
        %906 = sbr.rel (%p904) target = $region93
      $region92: #{dgcnn_partial_forward.9} parent=5 // pred_region
        %s907 = ssub.s32 %s12, 2
        // Predicated region
        $region94: #{dgcnn_partial_forward.9} parent=92 // pred_check
          %p908 = pneg %p149
        $region95: #{dgcnn_partial_forward.9} parent=92 // pred_check_branch
          %910 = sbr.rel (%p908) target = $region97
        $region96: #{dgcnn_partial_forward.9} parent=92 // pred_region
          %s911 = smul.u32 16, %s23
          %p912 = scmp.lt.s32.totalorder %s911, 31
          %s913 = scalar_select %p912, %s911, 31
          %s914 = smul.addr %s913, 8
          %s915 = scalar_lea.vmem %s4, %s914
        $region97: #{dgcnn_partial_forward.9} parent=92 // pred_fallthru
          _
      $region93: #{dgcnn_partial_forward.9} parent=5 // pred_fallthru
        _
    $region6: #{dgcnn_partial_forward.9} parent=1 // loop_footer
      %s16 = sadd.s32 1, %s12
    $region7: #{dgcnn_partial_forward.9} parent=1 // loop_footer_branch
      %11 = sbr.rel target = $region3
    $region8: #{dgcnn_partial_forward.9} parent=1 // loop_exit
      _

// kernel: dgcnn_partial_forward.10
$region0: #{dgcnn_partial_forward.10}
  #allocation0 [shape = 'u32[]', space=smem, size = 0x4, offset = 0x4, fixed_abs, tag = 'smem constant byte address 0x4 - core index']
  #allocation1 [shape = 'u32[144,128]{1,0:T(1,128)}', space=vmem, size = 0x12000, scoped, tag = 'internal scratch']
  %s0 = inlined_call_operand.vmem [shape: f32[256,25], index: 0, kind: input, shape index: {}]
  %s1 = inlined_call_operand.vmem [shape: f32[25,16], index: 1, kind: input, shape index: {}]
  %s2 = inlined_call_operand.vmem [shape: f32[1,16], index: 2, kind: input, shape index: {}]
  %s3 = inlined_call_operand.vmem [shape: f32[256,16], index: 3, kind: output, shape index: {}]
  %s4 = sld [smem:[#allocation0]]
  $region22: #{dgcnn_partial_forward.10} parent=0
    _
  %s6 = ssub.s32 1, %s4
  %s7 = scalar_select 0, %s6, %s4
  // Predicated region
  $region2: #{dgcnn_partial_forward.10} parent=0 // pred_check
    _
  $region3: #{dgcnn_partial_forward.10} parent=0 // pred_check_branch
    %9 = sbr.rel (0) target = $region5
  $region4: #{dgcnn_partial_forward.10} parent=0 // pred_region
    _
  $region5: #{dgcnn_partial_forward.10} parent=0 // pred_fallthru
    _
  // Predicated region
  $region6: #{dgcnn_partial_forward.10} parent=0 // pred_check
    _
  $region7: #{dgcnn_partial_forward.10} parent=0 // pred_check_branch
    %11 = sbr.rel (0) target = $region9
  $region8: #{dgcnn_partial_forward.10} parent=0 // pred_region
    _
  $region9: #{dgcnn_partial_forward.10} parent=0 // pred_fallthru
    _
  // Predicated region
  $region10: #{dgcnn_partial_forward.10} parent=0 // pred_check
    _
  $region11: #{dgcnn_partial_forward.10} parent=0 // pred_check_branch
    %13 = sbr.rel (0) target = $region13
  $region12: #{dgcnn_partial_forward.10} parent=0 // pred_region
    _
  $region13: #{dgcnn_partial_forward.10} parent=0 // pred_fallthru
    _
  %v14 = vld [vmem:[%s0] sm:$0xff]
  %v15 = vld [vmem:[%s0 + $0x8] sm:$0xff]
  %v16 = vld [vmem:[%s0 + $0x10] sm:$0xff]
  %v17 = vld [vmem:[%s0 + $0x18] sm:$0xff]
  %v18 = vld [vmem:[%s0 + $0x20] sm:$0xff]
  %v19 = vld [vmem:[%s0 + $0x28] sm:$0xff]
  %v20 = vld [vmem:[%s0 + $0x30] sm:$0xff]
  %v21 = vld [vmem:[%s0 + $0x38] sm:$0xff]
  %v22 = vld [vmem:[%s0 + $0x40] sm:$0xff]
  %v23 = vld [vmem:[%s0 + $0x48] sm:$0xff]
  %v24 = vld [vmem:[%s0 + $0x50] sm:$0xff]
  %v25 = vld [vmem:[%s0 + $0x58] sm:$0xff]
  %v26 = vld [vmem:[%s0 + $0x60] sm:$0xff]
  %v27 = vld [vmem:[%s0 + $0x68] sm:$0xff]
  %v28 = vld [vmem:[%s0 + $0x70] sm:$0xff]
  %v29 = vld [vmem:[%s0 + $0x78] sm:$0xff]
  %v30 = vld [vmem:[%s0 + $0x80] sm:$0xff]
  %v31 = vld [vmem:[%s0 + $0x88] sm:$0xff]
  %v32 = vld [vmem:[%s0 + $0x90] sm:$0xff]
  %v33 = vld [vmem:[%s0 + $0x98] sm:$0xff]
  %v34 = vld [vmem:[%s0 + $0xa0] sm:$0xff]
  %v35 = vld [vmem:[%s0 + $0xa8] sm:$0xff]
  %v36 = vld [vmem:[%s0 + $0xb0] sm:$0xff]
  %v37 = vld [vmem:[%s0 + $0xb8] sm:$0xff]
  %v38 = vld [vmem:[%s0 + $0xc0] sm:$0xff]
  %v39 = vld [vmem:[%s0 + $0xc8] sm:$0xff]
  %v40 = vld [vmem:[%s0 + $0xd0] sm:$0xff]
  %v41 = vld [vmem:[%s0 + $0xd8] sm:$0xff]
  %v42 = vld [vmem:[%s0 + $0xe0] sm:$0xff]
  %v43 = vld [vmem:[%s0 + $0xe8] sm:$0xff]
  %v44 = vld [vmem:[%s0 + $0xf0] sm:$0xff]
  %v45 = vld [vmem:[%s0 + $0xf8] sm:$0xff]
  %v46 = vld [vmem:[%s1] sm:$0xff]
  %v47 = vld [vmem:[%s1 + $0x8] sm:$0xff]
  %v48 = vld [vmem:[%s1 + $0x10] sm:$0xff]
  %v49 = vld [vmem:[%s1 + $0x18] sm:$0x1]
  %v50 = vld [vmem:[%s2] sm:$0x1]
  %v52 = vlaneseq
  %v53 = vshrl.u32 %v52, 7
  %v54 = vsub.s32 0, %v53
  %v55 = vrot.slane %v50, %v54
  %vm57 = vcmask 203776
  %v59 = vsel %vm57, %v14, 0
  %v62 = vsel %vm57, %v15, 0
  %v65 = vsel %vm57, %v16, 0
  %v68 = vsel %vm57, %v17, 0
  %v71 = vsel %vm57, %v18, 0
  %v74 = vsel %vm57, %v19, 0
  %v77 = vsel %vm57, %v20, 0
  %v80 = vsel %vm57, %v21, 0
  %v83 = vsel %vm57, %v22, 0
  %v86 = vsel %vm57, %v23, 0
  %v89 = vsel %vm57, %v24, 0
  %v92 = vsel %vm57, %v25, 0
  %v95 = vsel %vm57, %v26, 0
  %v98 = vsel %vm57, %v27, 0
  %v101 = vsel %vm57, %v28, 0
  %v104 = vsel %vm57, %v29, 0
  %v107 = vsel %vm57, %v30, 0
  %v110 = vsel %vm57, %v31, 0
  %v113 = vsel %vm57, %v32, 0
  %v116 = vsel %vm57, %v33, 0
  %v119 = vsel %vm57, %v34, 0
  %v122 = vsel %vm57, %v35, 0
  %v125 = vsel %vm57, %v36, 0
  %v128 = vsel %vm57, %v37, 0
  %v131 = vsel %vm57, %v38, 0
  %v134 = vsel %vm57, %v39, 0
  %v137 = vsel %vm57, %v40, 0
  %v140 = vsel %vm57, %v41, 0
  %v143 = vsel %vm57, %v42, 0
  %v146 = vsel %vm57, %v43, 0
  %v149 = vsel %vm57, %v44, 0
  %v152 = vsel %vm57, %v45, 0
  %vm154 = vcmask 1040384
  %v156 = vsel %vm154, %v49, 0
  %158 = vmatprep.subr.mxu0 0.0
  %159 = vmatpush1.msra.mxu0 0.0
  %160 = vmatprep.subr.mxu0 0.0
  %161 = vmatpush1.msra.mxu0 0.0
  %162 = vmatprep.subr.mxu0 0.0
  %163 = vmatpush1.msra.mxu0 0.0
  %164 = vmatprep.subr.mxu0 0.0
  %165 = vmatpush1.msra.mxu0 0.0
  %166 = vmatprep.subr.mxu0 0.0
  %167 = vmatpush1.msra.mxu0 0.0
  %168 = vmatprep.subr.mxu0 0.0
  %169 = vmatpush1.msra.mxu0 0.0
  %170 = vmatprep.subr.mxu0 0.0
  %171 = vmatpush1.msra.mxu0 0.0
  %172 = vmatprep.subr.mxu0 0.0
  %173 = vmatpush1.msra.mxu0 0.0
  %174 = vmatprep.subr.mxu0 0.0
  %175 = vmatpush1.msra.mxu0 0.0
  %176 = vmatprep.subr.mxu0 0.0
  %177 = vmatpush1.msra.mxu0 0.0
  %178 = vmatprep.subr.mxu0 0.0
  %179 = vmatpush1.msra.mxu0 0.0
  %180 = vmatprep.subr.mxu0 0.0
  %181 = vmatpush1.msra.mxu0 0.0
  %182 = vmatprep.subr.mxu0 0.0
  %183 = vmatpush1.msra.mxu0 %v156
  %184 = vmatprep.subr.mxu0 0.0
  %185 = vmatpush1.msra.mxu0 %v48
  %186 = vmatprep.subr.mxu0 0.0
  %187 = vmatpush1.msra.mxu0 %v47
  %188 = vmatprep.subr.mxu0 0.0
  %189 = vmatpush1.msra.mxu0 %v46
  %190 = vmatprep.subr.mxu0 0.0
  %191 = vmatpush2.msra.mxu0 0.0
  %192 = vmatprep.subr.mxu0 0.0
  %193 = vmatpush2.msra.mxu0 0.0
  %194 = vmatprep.subr.mxu0 0.0
  %195 = vmatpush2.msra.mxu0 0.0
  %196 = vmatprep.subr.mxu0 0.0
  %197 = vmatpush2.msra.mxu0 0.0
  %198 = vmatprep.subr.mxu0 0.0
  %199 = vmatpush2.msra.mxu0 0.0
  %200 = vmatprep.subr.mxu0 0.0
  %201 = vmatpush2.msra.mxu0 0.0
  %202 = vmatprep.subr.mxu0 0.0
  %203 = vmatpush2.msra.mxu0 0.0
  %204 = vmatprep.subr.mxu0 0.0
  %205 = vmatpush2.msra.mxu0 0.0
  %206 = vmatprep.subr.mxu0 0.0
  %207 = vmatpush2.msra.mxu0 0.0
  %208 = vmatprep.subr.mxu0 0.0
  %209 = vmatpush2.msra.mxu0 0.0
  %210 = vmatprep.subr.mxu0 0.0
  %211 = vmatpush2.msra.mxu0 0.0
  %212 = vmatprep.subr.mxu0 0.0
  %213 = vmatpush2.msra.mxu0 0.0
  %214 = vmatprep.subr.mxu0 0.0
  %215 = vmatpush2.msra.mxu0 0.0
  %216 = vmatprep.subr.mxu0 0.0
  %217 = vmatpush2.msra.mxu0 0.0
  %218 = vmatprep.subr.mxu0 0.0
  %219 = vmatpush2.msra.mxu0 0.0
  %220 = vmatprep.subr.mxu0 0.0
  %221 = vmatpush2.msra.mxu0 0.0
  %222 = vmatprep.mubr.f32.mxu0 0.0
  %223 = vmatmul.mubr.f32.gmra.mxu0 %v59
  %v224 = vpop.f32.mrf.mxu0
  %v225 = vadd.f32 %v55, %v224
  %v226 = vpop.f32.mrf.mxu0
  %227 = vmatprep.mubr.f32.mxu0 0.0
  %228 = vmatmul.mubr.f32.gmra.mxu0 %v62
  %v229 = vpop.f32.mrf.mxu0
  %v230 = vadd.f32 %v55, %v229
  %v231 = vpop.f32.mrf.mxu0
  %232 = vmatprep.mubr.f32.mxu0 0.0
  %233 = vmatmul.mubr.f32.gmra.mxu0 %v65
  %v234 = vpop.f32.mrf.mxu0
  %v235 = vadd.f32 %v55, %v234
  %v236 = vpop.f32.mrf.mxu0
  %237 = vmatprep.mubr.f32.mxu0 0.0
  %238 = vmatmul.mubr.f32.gmra.mxu0 %v68
  %v239 = vpop.f32.mrf.mxu0
  %v240 = vadd.f32 %v55, %v239
  %v241 = vpop.f32.mrf.mxu0
  %242 = vmatprep.mubr.f32.mxu0 0.0
  %243 = vmatmul.mubr.f32.gmra.mxu0 %v71
  %v244 = vpop.f32.mrf.mxu0
  %v245 = vadd.f32 %v55, %v244
  %v246 = vpop.f32.mrf.mxu0
  %247 = vmatprep.mubr.f32.mxu0 0.0
  %248 = vmatmul.mubr.f32.gmra.mxu0 %v74
  %v249 = vpop.f32.mrf.mxu0
  %v250 = vadd.f32 %v55, %v249
  %v251 = vpop.f32.mrf.mxu0
  %252 = vmatprep.mubr.f32.mxu0 0.0
  %253 = vmatmul.mubr.f32.gmra.mxu0 %v77
  %v254 = vpop.f32.mrf.mxu0
  %v255 = vadd.f32 %v55, %v254
  %v256 = vpop.f32.mrf.mxu0
  %257 = vmatprep.mubr.f32.mxu0 0.0
  %258 = vmatmul.mubr.f32.gmra.mxu0 %v80
  %v259 = vpop.f32.mrf.mxu0
  %v260 = vadd.f32 %v55, %v259
  %v261 = vpop.f32.mrf.mxu0
  %262 = vmatprep.mubr.f32.mxu0 0.0
  %263 = vmatmul.mubr.f32.gmra.mxu0 %v83
  %v264 = vpop.f32.mrf.mxu0
  %v265 = vadd.f32 %v55, %v264
  %v266 = vpop.f32.mrf.mxu0
  %267 = vmatprep.mubr.f32.mxu0 0.0
  %268 = vmatmul.mubr.f32.gmra.mxu0 %v86
  %v269 = vpop.f32.mrf.mxu0
  %v270 = vadd.f32 %v55, %v269
  %v271 = vpop.f32.mrf.mxu0
  %272 = vmatprep.mubr.f32.mxu0 0.0
  %273 = vmatmul.mubr.f32.gmra.mxu0 %v89
  %v274 = vpop.f32.mrf.mxu0
  %v275 = vadd.f32 %v55, %v274
  %v276 = vpop.f32.mrf.mxu0
  %277 = vmatprep.mubr.f32.mxu0 0.0
  %278 = vmatmul.mubr.f32.gmra.mxu0 %v92
  %v279 = vpop.f32.mrf.mxu0
  %v280 = vadd.f32 %v55, %v279
  %v281 = vpop.f32.mrf.mxu0
  %282 = vmatprep.mubr.f32.mxu0 0.0
  %283 = vmatmul.mubr.f32.gmra.mxu0 %v95
  %v284 = vpop.f32.mrf.mxu0
  %v285 = vadd.f32 %v55, %v284
  %v286 = vpop.f32.mrf.mxu0
  %287 = vmatprep.mubr.f32.mxu0 0.0
  %288 = vmatmul.mubr.f32.gmra.mxu0 %v98
  %v289 = vpop.f32.mrf.mxu0
  %v290 = vadd.f32 %v55, %v289
  %v291 = vpop.f32.mrf.mxu0
  %292 = vmatprep.mubr.f32.mxu0 0.0
  %293 = vmatmul.mubr.f32.gmra.mxu0 %v101
  %v294 = vpop.f32.mrf.mxu0
  %v295 = vadd.f32 %v55, %v294
  %v296 = vpop.f32.mrf.mxu0
  %297 = vmatprep.mubr.f32.mxu0 0.0
  %298 = vmatmul.mubr.f32.gmra.mxu0 %v104
  %v299 = vpop.f32.mrf.mxu0
  %v300 = vadd.f32 %v55, %v299
  %v301 = vpop.f32.mrf.mxu0
  %302 = vmatprep.mubr.f32.mxu0 0.0
  %303 = vmatmul.mubr.f32.gmra.mxu0 %v107
  %v304 = vpop.f32.mrf.mxu0
  %v305 = vadd.f32 %v55, %v304
  %v306 = vpop.f32.mrf.mxu0
  %307 = vmatprep.mubr.f32.mxu0 0.0
  %308 = vmatmul.mubr.f32.gmra.mxu0 %v110
  %v309 = vpop.f32.mrf.mxu0
  %v310 = vadd.f32 %v55, %v309
  %v311 = vpop.f32.mrf.mxu0
  %312 = vmatprep.mubr.f32.mxu0 0.0
  %313 = vmatmul.mubr.f32.gmra.mxu0 %v113
  %v314 = vpop.f32.mrf.mxu0
  %v315 = vadd.f32 %v55, %v314
  %v316 = vpop.f32.mrf.mxu0
  %317 = vmatprep.mubr.f32.mxu0 0.0
  %318 = vmatmul.mubr.f32.gmra.mxu0 %v116
  %v319 = vpop.f32.mrf.mxu0
  %v320 = vadd.f32 %v55, %v319
  %v321 = vpop.f32.mrf.mxu0
  %322 = vmatprep.mubr.f32.mxu0 0.0
  %323 = vmatmul.mubr.f32.gmra.mxu0 %v119
  %v324 = vpop.f32.mrf.mxu0
  %v325 = vadd.f32 %v55, %v324
  %v326 = vpop.f32.mrf.mxu0
  %327 = vmatprep.mubr.f32.mxu0 0.0
  %328 = vmatmul.mubr.f32.gmra.mxu0 %v122
  %v329 = vpop.f32.mrf.mxu0
  %v330 = vadd.f32 %v55, %v329
  %v331 = vpop.f32.mrf.mxu0
  %332 = vmatprep.mubr.f32.mxu0 0.0
  %333 = vmatmul.mubr.f32.gmra.mxu0 %v125
  %v334 = vpop.f32.mrf.mxu0
  %v335 = vadd.f32 %v55, %v334
  %v336 = vpop.f32.mrf.mxu0
  %337 = vmatprep.mubr.f32.mxu0 0.0
  %338 = vmatmul.mubr.f32.gmra.mxu0 %v128
  %v339 = vpop.f32.mrf.mxu0
  %v340 = vadd.f32 %v55, %v339
  %v341 = vpop.f32.mrf.mxu0
  %342 = vmatprep.mubr.f32.mxu0 0.0
  %343 = vmatmul.mubr.f32.gmra.mxu0 %v131
  %v344 = vpop.f32.mrf.mxu0
  %v345 = vadd.f32 %v55, %v344
  %v346 = vpop.f32.mrf.mxu0
  %347 = vmatprep.mubr.f32.mxu0 0.0
  %348 = vmatmul.mubr.f32.gmra.mxu0 %v134
  %v349 = vpop.f32.mrf.mxu0
  %v350 = vadd.f32 %v55, %v349
  %v351 = vpop.f32.mrf.mxu0
  %352 = vmatprep.mubr.f32.mxu0 0.0
  %353 = vmatmul.mubr.f32.gmra.mxu0 %v137
  %v354 = vpop.f32.mrf.mxu0
  %v355 = vadd.f32 %v55, %v354
  %v356 = vpop.f32.mrf.mxu0
  %357 = vmatprep.mubr.f32.mxu0 0.0
  %358 = vmatmul.mubr.f32.gmra.mxu0 %v140
  %v359 = vpop.f32.mrf.mxu0
  %v360 = vadd.f32 %v55, %v359
  %v361 = vpop.f32.mrf.mxu0
  %362 = vmatprep.mubr.f32.mxu0 0.0
  %363 = vmatmul.mubr.f32.gmra.mxu0 %v143
  %v364 = vpop.f32.mrf.mxu0
  %v365 = vadd.f32 %v55, %v364
  %v366 = vpop.f32.mrf.mxu0
  %367 = vmatprep.mubr.f32.mxu0 0.0
  %368 = vmatmul.mubr.f32.gmra.mxu0 %v146
  %v369 = vpop.f32.mrf.mxu0
  %v370 = vadd.f32 %v55, %v369
  %v371 = vpop.f32.mrf.mxu0
  %372 = vmatprep.mubr.f32.mxu0 0.0
  %373 = vmatmul.mubr.f32.gmra.mxu0 %v149
  %v374 = vpop.f32.mrf.mxu0
  %v375 = vadd.f32 %v55, %v374
  %v376 = vpop.f32.mrf.mxu0
  %377 = vmatprep.mubr.f32.mxu0 0.0
  %378 = vmatmul.mubr.f32.gmra.mxu0 %v152
  %v379 = vpop.f32.mrf.mxu0
  %v380 = vadd.f32 %v55, %v379
  %v381 = vpop.f32.mrf.mxu0
  %382 = vdwg.mxu0
  %v383 = vmax.f32 %v225, 0.0
  %v384 = vmax.f32 %v230, 0.0
  %v385 = vmax.f32 %v235, 0.0
  %v386 = vmax.f32 %v240, 0.0
  %v387 = vmax.f32 %v245, 0.0
  %v388 = vmax.f32 %v250, 0.0
  %v389 = vmax.f32 %v255, 0.0
  %v390 = vmax.f32 %v260, 0.0
  %v391 = vmax.f32 %v265, 0.0
  %v392 = vmax.f32 %v270, 0.0
  %v393 = vmax.f32 %v275, 0.0
  %v394 = vmax.f32 %v280, 0.0
  %v395 = vmax.f32 %v285, 0.0
  %v396 = vmax.f32 %v290, 0.0
  %v397 = vmax.f32 %v295, 0.0
  %v398 = vmax.f32 %v300, 0.0
  %v399 = vmax.f32 %v305, 0.0
  %v400 = vmax.f32 %v310, 0.0
  %v401 = vmax.f32 %v315, 0.0
  %v402 = vmax.f32 %v320, 0.0
  %v403 = vmax.f32 %v325, 0.0
  %v404 = vmax.f32 %v330, 0.0
  %v405 = vmax.f32 %v335, 0.0
  %v406 = vmax.f32 %v340, 0.0
  %v407 = vmax.f32 %v345, 0.0
  %v408 = vmax.f32 %v350, 0.0
  %v409 = vmax.f32 %v355, 0.0
  %v410 = vmax.f32 %v360, 0.0
  %v411 = vmax.f32 %v365, 0.0
  %v412 = vmax.f32 %v370, 0.0
  %v413 = vmax.f32 %v375, 0.0
  %v414 = vmax.f32 %v380, 0.0
  %vm415 = vcmask 130048
  %416 = vst.msk [vmem:[%s3] sm:$0xff] %vm415, %v383
  %417 = vst.msk [vmem:[%s3 + $0x8] sm:$0xff] %vm415, %v384
  %418 = vst.msk [vmem:[%s3 + $0x10] sm:$0xff] %vm415, %v385
  %419 = vst.msk [vmem:[%s3 + $0x18] sm:$0xff] %vm415, %v386
  %420 = vst.msk [vmem:[%s3 + $0x20] sm:$0xff] %vm415, %v387
  %421 = vst.msk [vmem:[%s3 + $0x28] sm:$0xff] %vm415, %v388
  %422 = vst.msk [vmem:[%s3 + $0x30] sm:$0xff] %vm415, %v389
  %423 = vst.msk [vmem:[%s3 + $0x38] sm:$0xff] %vm415, %v390
  %424 = vst.msk [vmem:[%s3 + $0x40] sm:$0xff] %vm415, %v391
  %425 = vst.msk [vmem:[%s3 + $0x48] sm:$0xff] %vm415, %v392
  %426 = vst.msk [vmem:[%s3 + $0x50] sm:$0xff] %vm415, %v393
  %427 = vst.msk [vmem:[%s3 + $0x58] sm:$0xff] %vm415, %v394
  %428 = vst.msk [vmem:[%s3 + $0x60] sm:$0xff] %vm415, %v395
  %429 = vst.msk [vmem:[%s3 + $0x68] sm:$0xff] %vm415, %v396
  %430 = vst.msk [vmem:[%s3 + $0x70] sm:$0xff] %vm415, %v397
  %431 = vst.msk [vmem:[%s3 + $0x78] sm:$0xff] %vm415, %v398
  %432 = vst.msk [vmem:[%s3 + $0x80] sm:$0xff] %vm415, %v399
  %433 = vst.msk [vmem:[%s3 + $0x88] sm:$0xff] %vm415, %v400
  %434 = vst.msk [vmem:[%s3 + $0x90] sm:$0xff] %vm415, %v401
  %435 = vst.msk [vmem:[%s3 + $0x98] sm:$0xff] %vm415, %v402
  %436 = vst.msk [vmem:[%s3 + $0xa0] sm:$0xff] %vm415, %v403
  %437 = vst.msk [vmem:[%s3 + $0xa8] sm:$0xff] %vm415, %v404
  %438 = vst.msk [vmem:[%s3 + $0xb0] sm:$0xff] %vm415, %v405
  %439 = vst.msk [vmem:[%s3 + $0xb8] sm:$0xff] %vm415, %v406
  %440 = vst.msk [vmem:[%s3 + $0xc0] sm:$0xff] %vm415, %v407
  %441 = vst.msk [vmem:[%s3 + $0xc8] sm:$0xff] %vm415, %v408
  %442 = vst.msk [vmem:[%s3 + $0xd0] sm:$0xff] %vm415, %v409
  %443 = vst.msk [vmem:[%s3 + $0xd8] sm:$0xff] %vm415, %v410
  %444 = vst.msk [vmem:[%s3 + $0xe0] sm:$0xff] %vm415, %v411
  %445 = vst.msk [vmem:[%s3 + $0xe8] sm:$0xff] %vm415, %v412
  %446 = vst.msk [vmem:[%s3 + $0xf0] sm:$0xff] %vm415, %v413
  %447 = vst.msk [vmem:[%s3 + $0xf8] sm:$0xff] %vm415, %v414
  // Predicated region
  $region14: #{dgcnn_partial_forward.10} parent=0 // pred_check
    _
  $region15: #{dgcnn_partial_forward.10} parent=0 // pred_check_branch
    %449 = sbr.rel (0) target = $region17
  $region16: #{dgcnn_partial_forward.10} parent=0 // pred_region
    _
  $region17: #{dgcnn_partial_forward.10} parent=0 // pred_fallthru
    _
  // Predicated region
  $region18: #{dgcnn_partial_forward.10} parent=0 // pred_check
    _
  $region19: #{dgcnn_partial_forward.10} parent=0 // pred_check_branch
    %451 = sbr.rel (0) target = $region21
  $region20: #{dgcnn_partial_forward.10} parent=0 // pred_region
    _
  $region21: #{dgcnn_partial_forward.10} parent=0 // pred_fallthru
    _

// kernel: dgcnn_partial_forward.11
$region0: #{dgcnn_partial_forward.11}
  #allocation0 [shape = 'u32[]', space=smem, size = 0x4, offset = 0x4, fixed_abs, tag = 'smem constant byte address 0x4 - core index']
  #allocation1 [shape = 'u32[144,128]{1,0:T(1,128)}', space=vmem, size = 0x12000, scoped, tag = 'internal scratch']
  %s0 = inlined_call_operand.vmem [shape: f32[4,1024], index: 0, kind: input, shape index: {}]
  %s1 = inlined_call_operand.vmem [shape: f32[1024,32], index: 1, kind: input, shape index: {}]
  %s2 = inlined_call_operand.vmem [shape: f32[1,32], index: 2, kind: input, shape index: {}]
  %s3 = inlined_call_operand.hbm [shape: f32[4,32], index: 3, kind: output, shape index: {}]
  %s4 = sld [smem:[#allocation0]]
  $region22: #{dgcnn_partial_forward.11} parent=0
    _
  %s6 = ssub.s32 1, %s4
  %s7 = scalar_select 0, %s6, %s4
  $region1: #{dgcnn_partial_forward.11} parent=0
    #allocation2 [shape = 'u8[2048]{0}', space=vmem, size = 0x800, scoped, tag = 'output window, operand 0, single buffered']
    #allocation3 [shape = 's32[1]{0}', space=sflag, size = 0x4, scoped, tag = 'scoped memory for dgcnn_partial_forward.11']
    %8 = vsyncpa [#allocation3], 0
    // Predicated region
    $region2: #{dgcnn_partial_forward.11} parent=1 // pred_check
      _
    $region3: #{dgcnn_partial_forward.11} parent=1 // pred_check_branch
      %10 = sbr.rel (0) target = $region5
    $region4: #{dgcnn_partial_forward.11} parent=1 // pred_region
      _
    $region5: #{dgcnn_partial_forward.11} parent=1 // pred_fallthru
      _
    // Predicated region
    $region6: #{dgcnn_partial_forward.11} parent=1 // pred_check
      _
    $region7: #{dgcnn_partial_forward.11} parent=1 // pred_check_branch
      %12 = sbr.rel (0) target = $region9
    $region8: #{dgcnn_partial_forward.11} parent=1 // pred_region
      _
    $region9: #{dgcnn_partial_forward.11} parent=1 // pred_fallthru
      _
    // Predicated region
    $region10: #{dgcnn_partial_forward.11} parent=1 // pred_check
      _
    $region11: #{dgcnn_partial_forward.11} parent=1 // pred_check_branch
      %14 = sbr.rel (0) target = $region13
    $region12: #{dgcnn_partial_forward.11} parent=1 // pred_region
      _
    $region13: #{dgcnn_partial_forward.11} parent=1 // pred_fallthru
      _
    %v15 = vld [vmem:[%s0] sm:$0xff]
    %v16 = vld [vmem:[%s0 + $0x8] sm:$0xff]
    %v17 = vld [vmem:[%s0 + $0x10] sm:$0xff]
    %v18 = vld [vmem:[%s0 + $0x18] sm:$0xff]
    %v19 = vld [vmem:[%s1] sm:$0xff]
    %v20 = vld [vmem:[%s1 + $0x8] sm:$0xff]
    %v21 = vld [vmem:[%s1 + $0x10] sm:$0xff]
    %v22 = vld [vmem:[%s1 + $0x18] sm:$0xff]
    %v23 = vld [vmem:[%s1 + $0x20] sm:$0xff]
    %v24 = vld [vmem:[%s1 + $0x28] sm:$0xff]
    %v25 = vld [vmem:[%s1 + $0x30] sm:$0xff]
    %v26 = vld [vmem:[%s1 + $0x38] sm:$0xff]
    %v27 = vld [vmem:[%s1 + $0x40] sm:$0xff]
    %v28 = vld [vmem:[%s1 + $0x48] sm:$0xff]
    %v29 = vld [vmem:[%s1 + $0x50] sm:$0xff]
    %v30 = vld [vmem:[%s1 + $0x58] sm:$0xff]
    %v31 = vld [vmem:[%s1 + $0x60] sm:$0xff]
    %v32 = vld [vmem:[%s1 + $0x68] sm:$0xff]
    %v33 = vld [vmem:[%s1 + $0x70] sm:$0xff]
    %v34 = vld [vmem:[%s1 + $0x78] sm:$0xff]
    %v35 = vld [vmem:[%s1 + $0x80] sm:$0xff]
    %v36 = vld [vmem:[%s1 + $0x88] sm:$0xff]
    %v37 = vld [vmem:[%s1 + $0x90] sm:$0xff]
    %v38 = vld [vmem:[%s1 + $0x98] sm:$0xff]
    %v39 = vld [vmem:[%s1 + $0xa0] sm:$0xff]
    %v40 = vld [vmem:[%s1 + $0xa8] sm:$0xff]
    %v41 = vld [vmem:[%s1 + $0xb0] sm:$0xff]
    %v42 = vld [vmem:[%s1 + $0xb8] sm:$0xff]
    %v43 = vld [vmem:[%s1 + $0xc0] sm:$0xff]
    %v44 = vld [vmem:[%s1 + $0xc8] sm:$0xff]
    %v45 = vld [vmem:[%s1 + $0xd0] sm:$0xff]
    %v46 = vld [vmem:[%s1 + $0xd8] sm:$0xff]
    %v47 = vld [vmem:[%s1 + $0xe0] sm:$0xff]
    %v48 = vld [vmem:[%s1 + $0xe8] sm:$0xff]
    %v49 = vld [vmem:[%s1 + $0xf0] sm:$0xff]
    %v50 = vld [vmem:[%s1 + $0xf8] sm:$0xff]
    %v51 = vld [vmem:[%s1 + $0x100] sm:$0xff]
    %v52 = vld [vmem:[%s1 + $0x108] sm:$0xff]
    %v53 = vld [vmem:[%s1 + $0x110] sm:$0xff]
    %v54 = vld [vmem:[%s1 + $0x118] sm:$0xff]
    %v55 = vld [vmem:[%s1 + $0x120] sm:$0xff]
    %v56 = vld [vmem:[%s1 + $0x128] sm:$0xff]
    %v57 = vld [vmem:[%s1 + $0x130] sm:$0xff]
    %v58 = vld [vmem:[%s1 + $0x138] sm:$0xff]
    %v59 = vld [vmem:[%s1 + $0x140] sm:$0xff]
    %v60 = vld [vmem:[%s1 + $0x148] sm:$0xff]
    %v61 = vld [vmem:[%s1 + $0x150] sm:$0xff]
    %v62 = vld [vmem:[%s1 + $0x158] sm:$0xff]
    %v63 = vld [vmem:[%s1 + $0x160] sm:$0xff]
    %v64 = vld [vmem:[%s1 + $0x168] sm:$0xff]
    %v65 = vld [vmem:[%s1 + $0x170] sm:$0xff]
    %v66 = vld [vmem:[%s1 + $0x178] sm:$0xff]
    %v67 = vld [vmem:[%s1 + $0x180] sm:$0xff]
    %v68 = vld [vmem:[%s1 + $0x188] sm:$0xff]
    %v69 = vld [vmem:[%s1 + $0x190] sm:$0xff]
    %v70 = vld [vmem:[%s1 + $0x198] sm:$0xff]
    %v71 = vld [vmem:[%s1 + $0x1a0] sm:$0xff]
    %v72 = vld [vmem:[%s1 + $0x1a8] sm:$0xff]
    %v73 = vld [vmem:[%s1 + $0x1b0] sm:$0xff]
    %v74 = vld [vmem:[%s1 + $0x1b8] sm:$0xff]
    %v75 = vld [vmem:[%s1 + $0x1c0] sm:$0xff]
    %v76 = vld [vmem:[%s1 + $0x1c8] sm:$0xff]
    %v77 = vld [vmem:[%s1 + $0x1d0] sm:$0xff]
    %v78 = vld [vmem:[%s1 + $0x1d8] sm:$0xff]
    %v79 = vld [vmem:[%s1 + $0x1e0] sm:$0xff]
    %v80 = vld [vmem:[%s1 + $0x1e8] sm:$0xff]
    %v81 = vld [vmem:[%s1 + $0x1f0] sm:$0xff]
    %v82 = vld [vmem:[%s1 + $0x1f8] sm:$0xff]
    %v83 = vld [vmem:[%s1 + $0x200] sm:$0xff]
    %v84 = vld [vmem:[%s1 + $0x208] sm:$0xff]
    %v85 = vld [vmem:[%s1 + $0x210] sm:$0xff]
    %v86 = vld [vmem:[%s1 + $0x218] sm:$0xff]
    %v87 = vld [vmem:[%s1 + $0x220] sm:$0xff]
    %v88 = vld [vmem:[%s1 + $0x228] sm:$0xff]
    %v89 = vld [vmem:[%s1 + $0x230] sm:$0xff]
    %v90 = vld [vmem:[%s1 + $0x238] sm:$0xff]
    %v91 = vld [vmem:[%s1 + $0x240] sm:$0xff]
    %v92 = vld [vmem:[%s1 + $0x248] sm:$0xff]
    %v93 = vld [vmem:[%s1 + $0x250] sm:$0xff]
    %v94 = vld [vmem:[%s1 + $0x258] sm:$0xff]
    %v95 = vld [vmem:[%s1 + $0x260] sm:$0xff]
    %v96 = vld [vmem:[%s1 + $0x268] sm:$0xff]
    %v97 = vld [vmem:[%s1 + $0x270] sm:$0xff]
    %v98 = vld [vmem:[%s1 + $0x278] sm:$0xff]
    %v99 = vld [vmem:[%s1 + $0x280] sm:$0xff]
    %v100 = vld [vmem:[%s1 + $0x288] sm:$0xff]
    %v101 = vld [vmem:[%s1 + $0x290] sm:$0xff]
    %v102 = vld [vmem:[%s1 + $0x298] sm:$0xff]
    %v103 = vld [vmem:[%s1 + $0x2a0] sm:$0xff]
    %v104 = vld [vmem:[%s1 + $0x2a8] sm:$0xff]
    %v105 = vld [vmem:[%s1 + $0x2b0] sm:$0xff]
    %v106 = vld [vmem:[%s1 + $0x2b8] sm:$0xff]
    %v107 = vld [vmem:[%s1 + $0x2c0] sm:$0xff]
    %v108 = vld [vmem:[%s1 + $0x2c8] sm:$0xff]
    %v109 = vld [vmem:[%s1 + $0x2d0] sm:$0xff]
    %v110 = vld [vmem:[%s1 + $0x2d8] sm:$0xff]
    %v111 = vld [vmem:[%s1 + $0x2e0] sm:$0xff]
    %v112 = vld [vmem:[%s1 + $0x2e8] sm:$0xff]
    %v113 = vld [vmem:[%s1 + $0x2f0] sm:$0xff]
    %v114 = vld [vmem:[%s1 + $0x2f8] sm:$0xff]
    %v115 = vld [vmem:[%s1 + $0x300] sm:$0xff]
    %v116 = vld [vmem:[%s1 + $0x308] sm:$0xff]
    %v117 = vld [vmem:[%s1 + $0x310] sm:$0xff]
    %v118 = vld [vmem:[%s1 + $0x318] sm:$0xff]
    %v119 = vld [vmem:[%s1 + $0x320] sm:$0xff]
    %v120 = vld [vmem:[%s1 + $0x328] sm:$0xff]
    %v121 = vld [vmem:[%s1 + $0x330] sm:$0xff]
    %v122 = vld [vmem:[%s1 + $0x338] sm:$0xff]
    %v123 = vld [vmem:[%s1 + $0x340] sm:$0xff]
    %v124 = vld [vmem:[%s1 + $0x348] sm:$0xff]
    %v125 = vld [vmem:[%s1 + $0x350] sm:$0xff]
    %v126 = vld [vmem:[%s1 + $0x358] sm:$0xff]
    %v127 = vld [vmem:[%s1 + $0x360] sm:$0xff]
    %v128 = vld [vmem:[%s1 + $0x368] sm:$0xff]
    %v129 = vld [vmem:[%s1 + $0x370] sm:$0xff]
    %v130 = vld [vmem:[%s1 + $0x378] sm:$0xff]
    %v131 = vld [vmem:[%s1 + $0x380] sm:$0xff]
    %v132 = vld [vmem:[%s1 + $0x388] sm:$0xff]
    %v133 = vld [vmem:[%s1 + $0x390] sm:$0xff]
    %v134 = vld [vmem:[%s1 + $0x398] sm:$0xff]
    %v135 = vld [vmem:[%s1 + $0x3a0] sm:$0xff]
    %v136 = vld [vmem:[%s1 + $0x3a8] sm:$0xff]
    %v137 = vld [vmem:[%s1 + $0x3b0] sm:$0xff]
    %v138 = vld [vmem:[%s1 + $0x3b8] sm:$0xff]
    %v139 = vld [vmem:[%s1 + $0x3c0] sm:$0xff]
    %v140 = vld [vmem:[%s1 + $0x3c8] sm:$0xff]
    %v141 = vld [vmem:[%s1 + $0x3d0] sm:$0xff]
    %v142 = vld [vmem:[%s1 + $0x3d8] sm:$0xff]
    %v143 = vld [vmem:[%s1 + $0x3e0] sm:$0xff]
    %v144 = vld [vmem:[%s1 + $0x3e8] sm:$0xff]
    %v145 = vld [vmem:[%s1 + $0x3f0] sm:$0xff]
    %v146 = vld [vmem:[%s1 + $0x3f8] sm:$0xff]
    %v147 = vld [vmem:[%s2] sm:$0x1]
    %v149 = vlaneseq
    %v150 = vshrl.u32 %v149, 7
    %v151 = vsub.s32 0, %v150
    %v152 = vrot.slane %v147, %v151
    %v158 = vcombine.high %v15, %v15
    %v159 = vcombine.high %v16, %v16
    %v160 = vcombine.high %v17, %v17
    %v161 = vcombine.high %v18, %v18
    %166 = vmatprep.subr.mxu0 0.0
    %167 = vmatpush1.msra.mxu0 %v34
    %168 = vmatprep.subr.mxu0 0.0
    %169 = vmatpush1.msra.mxu0 %v33
    %170 = vmatprep.subr.mxu0 0.0
    %171 = vmatpush1.msra.mxu0 %v32
    %172 = vmatprep.subr.mxu0 0.0
    %173 = vmatpush1.msra.mxu0 %v31
    %174 = vmatprep.subr.mxu0 0.0
    %175 = vmatpush1.msra.mxu0 %v30
    %176 = vmatprep.subr.mxu0 0.0
    %177 = vmatpush1.msra.mxu0 %v29
    %178 = vmatprep.subr.mxu0 0.0
    %179 = vmatpush1.msra.mxu0 %v28
    %180 = vmatprep.subr.mxu0 0.0
    %181 = vmatpush1.msra.mxu0 %v27
    %182 = vmatprep.subr.mxu0 0.0
    %183 = vmatpush1.msra.mxu0 %v26
    %184 = vmatprep.subr.mxu0 0.0
    %185 = vmatpush1.msra.mxu0 %v25
    %186 = vmatprep.subr.mxu0 0.0
    %187 = vmatpush1.msra.mxu0 %v24
    %188 = vmatprep.subr.mxu0 0.0
    %189 = vmatpush1.msra.mxu0 %v23
    %190 = vmatprep.subr.mxu0 0.0
    %191 = vmatpush1.msra.mxu0 %v22
    %192 = vmatprep.subr.mxu0 0.0
    %193 = vmatpush1.msra.mxu0 %v21
    %194 = vmatprep.subr.mxu0 0.0
    %195 = vmatpush1.msra.mxu0 %v20
    %196 = vmatprep.subr.mxu0 0.0
    %197 = vmatpush1.msra.mxu0 %v19
    %198 = vmatprep.subr.mxu0 0.0
    %199 = vmatpush2.msra.mxu0 %v50
    %200 = vmatprep.subr.mxu0 0.0
    %201 = vmatpush2.msra.mxu0 %v49
    %202 = vmatprep.subr.mxu0 0.0
    %203 = vmatpush2.msra.mxu0 %v48
    %204 = vmatprep.subr.mxu0 0.0
    %205 = vmatpush2.msra.mxu0 %v47
    %206 = vmatprep.subr.mxu0 0.0
    %207 = vmatpush2.msra.mxu0 %v46
    %208 = vmatprep.subr.mxu0 0.0
    %209 = vmatpush2.msra.mxu0 %v45
    %210 = vmatprep.subr.mxu0 0.0
    %211 = vmatpush2.msra.mxu0 %v44
    %212 = vmatprep.subr.mxu0 0.0
    %213 = vmatpush2.msra.mxu0 %v43
    %214 = vmatprep.subr.mxu0 0.0
    %215 = vmatpush2.msra.mxu0 %v42
    %216 = vmatprep.subr.mxu0 0.0
    %217 = vmatpush2.msra.mxu0 %v41
    %218 = vmatprep.subr.mxu0 0.0
    %219 = vmatpush2.msra.mxu0 %v40
    %220 = vmatprep.subr.mxu0 0.0
    %221 = vmatpush2.msra.mxu0 %v39
    %222 = vmatprep.subr.mxu0 0.0
    %223 = vmatpush2.msra.mxu0 %v38
    %224 = vmatprep.subr.mxu0 0.0
    %225 = vmatpush2.msra.mxu0 %v37
    %226 = vmatprep.subr.mxu0 0.0
    %227 = vmatpush2.msra.mxu0 %v36
    %228 = vmatprep.subr.mxu0 0.0
    %229 = vmatpush2.msra.mxu0 %v35
    %230 = vmatprep.mubr.f32.mxu0 %v158
    %231 = vmatmul.mubr.f32.gmra.mxu0 %v15
    %v232 = vpop.f32.mrf.mxu0
    %v233 = vadd.f32 %v152, %v232
    %v234 = vpop.f32.mrf.mxu0
    %235 = vdwg.mxu0
    %236 = vmatprep.subr.mxu0 0.0
    %237 = vmatpush1.msra.mxu0 %v66
    %238 = vmatprep.subr.mxu0 0.0
    %239 = vmatpush1.msra.mxu0 %v65
    %240 = vmatprep.subr.mxu0 0.0
    %241 = vmatpush1.msra.mxu0 %v64
    %242 = vmatprep.subr.mxu0 0.0
    %243 = vmatpush1.msra.mxu0 %v63
    %244 = vmatprep.subr.mxu0 0.0
    %245 = vmatpush1.msra.mxu0 %v62
    %246 = vmatprep.subr.mxu0 0.0
    %247 = vmatpush1.msra.mxu0 %v61
    %248 = vmatprep.subr.mxu0 0.0
    %249 = vmatpush1.msra.mxu0 %v60
    %250 = vmatprep.subr.mxu0 0.0
    %251 = vmatpush1.msra.mxu0 %v59
    %252 = vmatprep.subr.mxu0 0.0
    %253 = vmatpush1.msra.mxu0 %v58
    %254 = vmatprep.subr.mxu0 0.0
    %255 = vmatpush1.msra.mxu0 %v57
    %256 = vmatprep.subr.mxu0 0.0
    %257 = vmatpush1.msra.mxu0 %v56
    %258 = vmatprep.subr.mxu0 0.0
    %259 = vmatpush1.msra.mxu0 %v55
    %260 = vmatprep.subr.mxu0 0.0
    %261 = vmatpush1.msra.mxu0 %v54
    %262 = vmatprep.subr.mxu0 0.0
    %263 = vmatpush1.msra.mxu0 %v53
    %264 = vmatprep.subr.mxu0 0.0
    %265 = vmatpush1.msra.mxu0 %v52
    %266 = vmatprep.subr.mxu0 0.0
    %267 = vmatpush1.msra.mxu0 %v51
    %268 = vmatprep.subr.mxu0 0.0
    %269 = vmatpush2.msra.mxu0 %v82
    %270 = vmatprep.subr.mxu0 0.0
    %271 = vmatpush2.msra.mxu0 %v81
    %272 = vmatprep.subr.mxu0 0.0
    %273 = vmatpush2.msra.mxu0 %v80
    %274 = vmatprep.subr.mxu0 0.0
    %275 = vmatpush2.msra.mxu0 %v79
    %276 = vmatprep.subr.mxu0 0.0
    %277 = vmatpush2.msra.mxu0 %v78
    %278 = vmatprep.subr.mxu0 0.0
    %279 = vmatpush2.msra.mxu0 %v77
    %280 = vmatprep.subr.mxu0 0.0
    %281 = vmatpush2.msra.mxu0 %v76
    %282 = vmatprep.subr.mxu0 0.0
    %283 = vmatpush2.msra.mxu0 %v75
    %284 = vmatprep.subr.mxu0 0.0
    %285 = vmatpush2.msra.mxu0 %v74
    %286 = vmatprep.subr.mxu0 0.0
    %287 = vmatpush2.msra.mxu0 %v73
    %288 = vmatprep.subr.mxu0 0.0
    %289 = vmatpush2.msra.mxu0 %v72
    %290 = vmatprep.subr.mxu0 0.0
    %291 = vmatpush2.msra.mxu0 %v71
    %292 = vmatprep.subr.mxu0 0.0
    %293 = vmatpush2.msra.mxu0 %v70
    %294 = vmatprep.subr.mxu0 0.0
    %295 = vmatpush2.msra.mxu0 %v69
    %296 = vmatprep.subr.mxu0 0.0
    %297 = vmatpush2.msra.mxu0 %v68
    %298 = vmatprep.subr.mxu0 0.0
    %299 = vmatpush2.msra.mxu0 %v67
    %300 = vmatprep.mubr.f32.mxu0 %v159
    %301 = vmatmul.mubr.f32.gmra.mxu0 %v16
    %v302 = vpop.f32.mrf.mxu0
    %v303 = vadd.f32 %v233, %v302
    %v304 = vpop.f32.mrf.mxu0
    %305 = vdwg.mxu0
    %306 = vmatprep.subr.mxu0 0.0
    %307 = vmatpush1.msra.mxu0 %v98
    %308 = vmatprep.subr.mxu0 0.0
    %309 = vmatpush1.msra.mxu0 %v97
    %310 = vmatprep.subr.mxu0 0.0
    %311 = vmatpush1.msra.mxu0 %v96
    %312 = vmatprep.subr.mxu0 0.0
    %313 = vmatpush1.msra.mxu0 %v95
    %314 = vmatprep.subr.mxu0 0.0
    %315 = vmatpush1.msra.mxu0 %v94
    %316 = vmatprep.subr.mxu0 0.0
    %317 = vmatpush1.msra.mxu0 %v93
    %318 = vmatprep.subr.mxu0 0.0
    %319 = vmatpush1.msra.mxu0 %v92
    %320 = vmatprep.subr.mxu0 0.0
    %321 = vmatpush1.msra.mxu0 %v91
    %322 = vmatprep.subr.mxu0 0.0
    %323 = vmatpush1.msra.mxu0 %v90
    %324 = vmatprep.subr.mxu0 0.0
    %325 = vmatpush1.msra.mxu0 %v89
    %326 = vmatprep.subr.mxu0 0.0
    %327 = vmatpush1.msra.mxu0 %v88
    %328 = vmatprep.subr.mxu0 0.0
    %329 = vmatpush1.msra.mxu0 %v87
    %330 = vmatprep.subr.mxu0 0.0
    %331 = vmatpush1.msra.mxu0 %v86
    %332 = vmatprep.subr.mxu0 0.0
    %333 = vmatpush1.msra.mxu0 %v85
    %334 = vmatprep.subr.mxu0 0.0
    %335 = vmatpush1.msra.mxu0 %v84
    %336 = vmatprep.subr.mxu0 0.0
    %337 = vmatpush1.msra.mxu0 %v83
    %338 = vmatprep.subr.mxu0 0.0
    %339 = vmatpush2.msra.mxu0 %v114
    %340 = vmatprep.subr.mxu0 0.0
    %341 = vmatpush2.msra.mxu0 %v113
    %342 = vmatprep.subr.mxu0 0.0
    %343 = vmatpush2.msra.mxu0 %v112
    %344 = vmatprep.subr.mxu0 0.0
    %345 = vmatpush2.msra.mxu0 %v111
    %346 = vmatprep.subr.mxu0 0.0
    %347 = vmatpush2.msra.mxu0 %v110
    %348 = vmatprep.subr.mxu0 0.0
    %349 = vmatpush2.msra.mxu0 %v109
    %350 = vmatprep.subr.mxu0 0.0
    %351 = vmatpush2.msra.mxu0 %v108
    %352 = vmatprep.subr.mxu0 0.0
    %353 = vmatpush2.msra.mxu0 %v107
    %354 = vmatprep.subr.mxu0 0.0
    %355 = vmatpush2.msra.mxu0 %v106
    %356 = vmatprep.subr.mxu0 0.0
    %357 = vmatpush2.msra.mxu0 %v105
    %358 = vmatprep.subr.mxu0 0.0
    %359 = vmatpush2.msra.mxu0 %v104
    %360 = vmatprep.subr.mxu0 0.0
    %361 = vmatpush2.msra.mxu0 %v103
    %362 = vmatprep.subr.mxu0 0.0
    %363 = vmatpush2.msra.mxu0 %v102
    %364 = vmatprep.subr.mxu0 0.0
    %365 = vmatpush2.msra.mxu0 %v101
    %366 = vmatprep.subr.mxu0 0.0
    %367 = vmatpush2.msra.mxu0 %v100
    %368 = vmatprep.subr.mxu0 0.0
    %369 = vmatpush2.msra.mxu0 %v99
    %370 = vmatprep.mubr.f32.mxu0 %v160
    %371 = vmatmul.mubr.f32.gmra.mxu0 %v17
    %v372 = vpop.f32.mrf.mxu0
    %v373 = vadd.f32 %v303, %v372
    %v374 = vpop.f32.mrf.mxu0
    %375 = vdwg.mxu0
    %376 = vmatprep.subr.mxu0 0.0
    %377 = vmatpush1.msra.mxu0 %v130
    %378 = vmatprep.subr.mxu0 0.0
    %379 = vmatpush1.msra.mxu0 %v129
    %380 = vmatprep.subr.mxu0 0.0
    %381 = vmatpush1.msra.mxu0 %v128
    %382 = vmatprep.subr.mxu0 0.0
    %383 = vmatpush1.msra.mxu0 %v127
    %384 = vmatprep.subr.mxu0 0.0
    %385 = vmatpush1.msra.mxu0 %v126
    %386 = vmatprep.subr.mxu0 0.0
    %387 = vmatpush1.msra.mxu0 %v125
    %388 = vmatprep.subr.mxu0 0.0
    %389 = vmatpush1.msra.mxu0 %v124
    %390 = vmatprep.subr.mxu0 0.0
    %391 = vmatpush1.msra.mxu0 %v123
    %392 = vmatprep.subr.mxu0 0.0
    %393 = vmatpush1.msra.mxu0 %v122
    %394 = vmatprep.subr.mxu0 0.0
    %395 = vmatpush1.msra.mxu0 %v121
    %396 = vmatprep.subr.mxu0 0.0
    %397 = vmatpush1.msra.mxu0 %v120
    %398 = vmatprep.subr.mxu0 0.0
    %399 = vmatpush1.msra.mxu0 %v119
    %400 = vmatprep.subr.mxu0 0.0
    %401 = vmatpush1.msra.mxu0 %v118
    %402 = vmatprep.subr.mxu0 0.0
    %403 = vmatpush1.msra.mxu0 %v117
    %404 = vmatprep.subr.mxu0 0.0
    %405 = vmatpush1.msra.mxu0 %v116
    %406 = vmatprep.subr.mxu0 0.0
    %407 = vmatpush1.msra.mxu0 %v115
    %408 = vmatprep.subr.mxu0 0.0
    %409 = vmatpush2.msra.mxu0 %v146
    %410 = vmatprep.subr.mxu0 0.0
    %411 = vmatpush2.msra.mxu0 %v145
    %412 = vmatprep.subr.mxu0 0.0
    %413 = vmatpush2.msra.mxu0 %v144
    %414 = vmatprep.subr.mxu0 0.0
    %415 = vmatpush2.msra.mxu0 %v143
    %416 = vmatprep.subr.mxu0 0.0
    %417 = vmatpush2.msra.mxu0 %v142
    %418 = vmatprep.subr.mxu0 0.0
    %419 = vmatpush2.msra.mxu0 %v141
    %420 = vmatprep.subr.mxu0 0.0
    %421 = vmatpush2.msra.mxu0 %v140
    %422 = vmatprep.subr.mxu0 0.0
    %423 = vmatpush2.msra.mxu0 %v139
    %424 = vmatprep.subr.mxu0 0.0
    %425 = vmatpush2.msra.mxu0 %v138
    %426 = vmatprep.subr.mxu0 0.0
    %427 = vmatpush2.msra.mxu0 %v137
    %428 = vmatprep.subr.mxu0 0.0
    %429 = vmatpush2.msra.mxu0 %v136
    %430 = vmatprep.subr.mxu0 0.0
    %431 = vmatpush2.msra.mxu0 %v135
    %432 = vmatprep.subr.mxu0 0.0
    %433 = vmatpush2.msra.mxu0 %v134
    %434 = vmatprep.subr.mxu0 0.0
    %435 = vmatpush2.msra.mxu0 %v133
    %436 = vmatprep.subr.mxu0 0.0
    %437 = vmatpush2.msra.mxu0 %v132
    %438 = vmatprep.subr.mxu0 0.0
    %439 = vmatpush2.msra.mxu0 %v131
    %440 = vmatprep.mubr.f32.mxu0 %v161
    %441 = vmatmul.mubr.f32.gmra.mxu0 %v18
    %v442 = vpop.f32.mrf.mxu0
    %v443 = vadd.f32 %v373, %v442
    %v444 = vpop.f32.mrf.mxu0
    %445 = vdwg.mxu0
    %v446 = vmax.f32 %v443, 0.0
    %vm447 = vcmask 257024
    %448 = vst.msk [vmem:[#allocation2] sm:$0xf] %vm447, %v446
    // Predicated region
    $region14: #{dgcnn_partial_forward.11} parent=1 // pred_check
      _
    $region15: #{dgcnn_partial_forward.11} parent=1 // pred_check_branch
      %450 = sbr.rel (0) target = $region17
    $region16: #{dgcnn_partial_forward.11} parent=1 // pred_region
      %s452 = ssub.s32 64, 64
      %453 = vsyncadd [#allocation3], %s452
      %s455 = sshll.u32 [#allocation2], 4
      %s456 = int_to_ptr.vmem [resolvable:$true] %s455
      %458 = dma.vmem_to_hbm [thread:$0]  %s456, 64, %s3, [#allocation3]
    $region17: #{dgcnn_partial_forward.11} parent=1 // pred_fallthru
      _
    // Predicated region
    $region18: #{dgcnn_partial_forward.11} parent=1 // pred_check
      _
    $region19: #{dgcnn_partial_forward.11} parent=1 // pred_check_branch
      %460 = sbr.rel (0) target = $region21
    $region20: #{dgcnn_partial_forward.11} parent=1 // pred_region
      %461 = dma.done [#allocation3], 64
    $region21: #{dgcnn_partial_forward.11} parent=1 // pred_fallthru
      _
    %462 = vsyncpa [#allocation3], 1

</llo_original>
